<compile_context>
chip_gen: v5e
topology: v5e:2x2
jax: 0.10.0
libtpu: 0.0.40
codegen_flags: <defaults>
</compile_context>

<pallas_src>
import functools

import jax
import jax.numpy as jnp
from jax import lax
from jax.experimental import pallas as pl
from jax.experimental.pallas import tpu as pltpu


def _encdec_kernel(xe_ref, xd_ref,
                   we0_ih, we0_hh, be0,
                   we1_ih, we1_hh, be1,
                   wd0_ih, wd0_hh, bd0,
                   wd1_ih, wd1_hh, bd1,
                   wm1, bm1, wm2, bm2,
                   wh, bh,
                   out_ref, *, batch):
    B = batch
    Te = xe_ref.shape[0] // B
    Td = xd_ref.shape[0] // B
    H = we0_hh.shape[0]
    H3, H4 = 3 * H, 4 * H
    f32 = jnp.float32

    # ---- hoisted loop-invariant weight / bias reads (done once) ----
    we0_hh_v, we1_ih_v, we1_hh_v = we0_hh[...], we1_ih[...], we1_hh[...]
    wd0_hh_v, wd1_ih_v, wd1_hh_v = wd0_hh[...], wd1_ih[...], wd1_hh[...]
    be1_b = jnp.broadcast_to(be1[...], (B, H4))
    bd1_b = jnp.broadcast_to(bd1[...], (B, H4))

    # ---- precompute layer-0 input projections for all timesteps (bias folded in) ----
    ge0 = jnp.dot(xe_ref[...], we0_ih[...], preferred_element_type=f32) + be0[...]  # (Te*B, 4H)
    gd0 = jnp.dot(xd_ref[...], wd0_ih[...], preferred_element_type=f32) + bd0[...]  # (Td*B, 4H)

    def cell(pre, h, c, w_hh):
        # Gate columns are pre-permuted to [i, f, o, g]: one sigmoid + one tanh.
        gates = pre + jnp.dot(h, w_hh, preferred_element_type=f32)
        ifo = jax.nn.sigmoid(gates[:, :H3])
        g = jnp.tanh(gates[:, H3:])
        c_new = ifo[:, H:2 * H] * c + ifo[:, :H] * g
        h_new = ifo[:, 2 * H:H3] * jnp.tanh(c_new)
        return h_new, c_new

    zeros = jnp.zeros((B, H), f32)
    h0 = c0 = h1 = c1 = zeros  # PyTorch default zero initial state

    # ---- encoder recurrence (fully unrolled; only final states are needed) ----
    for t in range(Te):
        h0, c0 = cell(ge0[t * B:(t + 1) * B], h0, c0, we0_hh_v)
        pre1 = jnp.dot(h0, we1_ih_v, preferred_element_type=f32) + be1_b
        h1, c1 = cell(pre1, h1, c1, we1_hh_v)

    # ---- decoder recurrence (initialized with encoder state), fully unrolled ----
    h1_steps = []
    for t in range(Td):
        h0, c0 = cell(gd0[t * B:(t + 1) * B], h0, c0, wd0_hh_v)
        pre1 = jnp.dot(h0, wd1_ih_v, preferred_element_type=f32) + bd1_b
        h1, c1 = cell(pre1, h1, c1, wd1_hh_v)
        h1_steps.append(h1)

    # ---- fc_mid (Linear->ReLU->Linear->ReLU; dropout = identity in eval) + fused heads ----
    h_all = jnp.concatenate(h1_steps, axis=0)                                   # (Td*B, H)
    m1 = jnp.maximum(jnp.dot(h_all, wm1[...], preferred_element_type=f32) + bm1[...], 0.0)
    m2 = jnp.maximum(jnp.dot(m1, wm2[...], preferred_element_type=f32) + bm2[...], 0.0)
    out_ref[...] = jnp.dot(m2, wh[...], preferred_element_type=f32) + bh[...]   # (Td*B, 2)


def encdec_power_forward(xe, xd, params):
    """xe: (B, Te, d_enc), xd: (B, Td, d_dec) -> (power (B, Td), not_use_power (B, Td))."""
    B, Te, d_enc = xe.shape
    Bd, Td, d_dec = xd.shape
    assert B == Bd
    H = params["we1_hh"].shape[0]

    # Pad batch to a full sublane tile (>= 8, multiple of 8); padded rows are dropped at the end.
    B_pad = max(8, ((B + 7) // 8) * 8)

    def prep_seq(x, T):
        x_t = jnp.transpose(x, (1, 0, 2)).astype(jnp.float32)          # (T, B, d)
        if B_pad != B:
            x_t = jnp.pad(x_t, ((0, 0), (0, B_pad - B), (0, 0)))
        return x_t.reshape(T * B_pad, x.shape[-1])                     # (T*B_pad, d)

    xe_2d = prep_seq(xe, Te)
    xd_2d = prep_seq(xd, Td)

    def reorder(w):  # permute gate columns [i, f, g, o] -> [i, f, o, g]
        return jnp.concatenate(
            [w[..., :2 * H], w[..., 3 * H:4 * H], w[..., 2 * H:3 * H]], axis=-1)

    lstm_args = []
    for wk_ih, wk_hh, bk in (("we0_ih", "we0_hh", "be0"),
                             ("we1_ih", "we1_hh", "be1"),
                             ("wd0_ih", "wd0_hh", "bd0"),
                             ("wd1_ih", "wd1_hh", "bd1")):
        lstm_args += [reorder(params[wk_ih]), reorder(params[wk_hh]), reorder(params[bk])]

    # Fuse the two 1-wide heads into one (H/4, 2) matmul.
    wh = jnp.concatenate([params["wpw"], params["wnw"]], axis=1)       # (H//4, 2)
    bh = jnp.concatenate([params["bpw"], params["bnw"]], axis=1)       # (1, 2)
    mlp_args = [params["wm1"], params["bm1"], params["wm2"], params["bm2"], wh, bh]

    vmem = pl.BlockSpec(memory_space=pltpu.MemorySpace.VMEM)
    n_in = 2 + len(lstm_args) + len(mlp_args)

    out = pl.pallas_call(
        functools.partial(_encdec_kernel, batch=B_pad),
        out_shape=jax.ShapeDtypeStruct((Td * B_pad, 2), jnp.float32),
        in_specs=[vmem] * n_in,
        out_specs=vmem,
    )(xe_2d, xd_2d, *lstm_args, *mlp_args)

    out = out.reshape(Td, B_pad, 2)
    power = jnp.transpose(out[:, :B, 0], (1, 0))    # (B, Td)
    notuse = jnp.transpose(out[:, :B, 1], (1, 0))   # (B, Td)
    return power, notuse


# ----------------------- deterministic parameter init -----------------------

def _lstm_layer_params(key, in_dim, hid):
    bound = 1.0 / (hid ** 0.5)
    k1, k2, k3, k4 = jax.random.split(key, 4)
    w_ih = jax.random.uniform(k1, (4 * hid, in_dim), jnp.float32, -bound, bound)
    w_hh = jax.random.uniform(k2, (4 * hid, hid), jnp.float32, -bound, bound)
    b_ih = jax.random.uniform(k3, (4 * hid,), jnp.float32, -bound, bound)
    b_hh = jax.random.uniform(k4, (4 * hid,), jnp.float32, -bound, bound)
    # transpose to (in, 4*hid); fuse the two biases (PyTorch gate order [i, f, g, o])
    return w_ih.T, w_hh.T, (b_ih + b_hh).reshape(1, 4 * hid)


def _linear_params(key, in_dim, out_dim):
    bound = 1.0 / (in_dim ** 0.5)
    k1, k2 = jax.random.split(key)
    w = jax.random.uniform(k1, (out_dim, in_dim), jnp.float32, -bound, bound)
    b = jax.random.uniform(k2, (out_dim,), jnp.float32, -bound, bound)
    return w.T, b.reshape(1, out_dim)


def init_params(key, d_enc, d_dec, hid):
    keys = jax.random.split(key, 8)
    p = {}
    p["we0_ih"], p["we0_hh"], p["be0"] = _lstm_layer_params(keys[0], d_enc, hid)
    p["we1_ih"], p["we1_hh"], p["be1"] = _lstm_layer_params(keys[1], hid, hid)
    p["wd0_ih"], p["wd0_hh"], p["bd0"] = _lstm_layer_params(keys[2], d_dec, hid)
    p["wd1_ih"], p["wd1_hh"], p["bd1"] = _lstm_layer_params(keys[3], hid, hid)
    p["wm1"], p["bm1"] = _linear_params(keys[4], hid, hid // 2)
    p["wm2"], p["bm2"] = _linear_params(keys[5], hid // 2, hid // 4)
    p["wpw"], p["bpw"] = _linear_params(keys[6], hid // 4, 1)
    p["wnw"], p["bnw"] = _linear_params(keys[7], hid // 4, 1)
    return p


# ----------------------- pure-JAX reference (for checking) ------------------

def reference_forward(xe, xd, params):
    B = xe.shape[0]
    H = params["we1_hh"].shape[0]

    def lstm_step(x, h, c, w_ih, w_hh, b):
        gates = x @ w_ih + h @ w_hh + b
        i = jax.nn.sigmoid(gates[:, 0:H])
        f = jax.nn.sigmoid(gates[:, H:2 * H])
        g = jnp.tanh(gates[:, 2 * H:3 * H])
        o = jax.nn.sigmoid(gates[:, 3 * H:4 * H])
        c = f * c + i * g
        h = o * jnp.tanh(c)
        return h, c

    def run_lstm(xs, states, layer0, layer1):
        (h0, c0), (h1, c1) = states
        outs = []
        for t in range(xs.shape[1]):
            h0, c0 = lstm_step(xs[:, t], h0, c0, *layer0)
            h1, c1 = lstm_step(h0, h1, c1, *layer1)
            outs.append(h1)
        return jnp.stack(outs, axis=1), ((h0, c0), (h1, c1))

    zeros = jnp.zeros((B, H), jnp.float32)
    enc0 = (params["we0_ih"], params["we0_hh"], params["be0"])
    enc1 = (params["we1_ih"], params["we1_hh"], params["be1"])
    dec0 = (params["wd0_ih"], params["wd0_hh"], params["bd0"])
    dec1 = (params["wd1_ih"], params["wd1_hh"], params["bd1"])
    _, states = run_lstm(xe, ((zeros, zeros), (zeros, zeros)), enc0, enc1)
    out, _ = run_lstm(xd, states, dec0, dec1)
    m1 = jax.nn.relu(out @ params["wm1"] + params["bm1"])
    m2 = jax.nn.relu(m1 @ params["wm2"] + params["bm2"])
    power = (m2 @ params["wpw"] + params["bpw"])[..., 0]
    notuse = (m2 @ params["wnw"] + params["bnw"])[..., 0]
    return power, notuse


if __name__ == "__main__":
    d_enc, d_dec, hid = 7, 7, 32
    B, Te, Td = 2, 8, 6

    key = jax.random.PRNGKey(0)
    kxe, kxd, kp = jax.random.split(key, 3)
    xe = jax.random.normal(kxe, (B, Te, d_enc), jnp.float32)
    xd = jax.random.normal(kxd, (B, Td, d_dec), jnp.float32)
    params = init_params(kp, d_enc, d_dec, hid)

    power, notuse = jax.jit(encdec_power_forward)(xe, xd, params)
    jax.block_until_ready((power, notuse))

    ref_p, ref_n = reference_forward(xe, xd, params)
    assert power.shape == (B, Td) and notuse.shape == (B, Td)
    assert bool(jnp.all(jnp.isfinite(power))) and bool(jnp.all(jnp.isfinite(notuse)))
    assert bool(jnp.allclose(power, ref_p, atol=1e-2, rtol=1e-2))
    assert bool(jnp.allclose(notuse, ref_n, atol=1e-2, rtol=1e-2))

    print("KERNEL_OK")
</pallas_src>

<mosaic_0001>
module attributes {stable_mosaic.version = 11 : i64} {
  func.func @_encdec_kernel(%arg0: memref<64x7xf32, #tpu.memory_space<vmem>>, %arg1: memref<48x7xf32, #tpu.memory_space<vmem>>, %arg2: memref<7x128xf32, #tpu.memory_space<vmem>>, %arg3: memref<32x128xf32, #tpu.memory_space<vmem>>, %arg4: memref<1x128xf32, #tpu.memory_space<vmem>>, %arg5: memref<32x128xf32, #tpu.memory_space<vmem>>, %arg6: memref<32x128xf32, #tpu.memory_space<vmem>>, %arg7: memref<1x128xf32, #tpu.memory_space<vmem>>, %arg8: memref<7x128xf32, #tpu.memory_space<vmem>>, %arg9: memref<32x128xf32, #tpu.memory_space<vmem>>, %arg10: memref<1x128xf32, #tpu.memory_space<vmem>>, %arg11: memref<32x128xf32, #tpu.memory_space<vmem>>, %arg12: memref<32x128xf32, #tpu.memory_space<vmem>>, %arg13: memref<1x128xf32, #tpu.memory_space<vmem>>, %arg14: memref<32x16xf32, #tpu.memory_space<vmem>>, %arg15: memref<1x16xf32, #tpu.memory_space<vmem>>, %arg16: memref<16x8xf32, #tpu.memory_space<vmem>>, %arg17: memref<1x8xf32, #tpu.memory_space<vmem>>, %arg18: memref<8x2xf32, #tpu.memory_space<vmem>>, %arg19: memref<1x2xf32, #tpu.memory_space<vmem>>, %arg20: memref<48x2xf32, #tpu.memory_space<vmem>>) attributes {dimension_semantics = [], scalar_prefetch = 0 : i64, scratch_operands = 0 : i64, tpu.core_type = #tpu.core_type<tc>} {
    %c0 = arith.constant 0 : index
    %c0_0 = arith.constant 0 : index
    %0 = vector.load %arg3[%c0, %c0_0] : memref<32x128xf32, #tpu.memory_space<vmem>>, vector<32x128xf32>
    %c0_1 = arith.constant 0 : index
    %c0_2 = arith.constant 0 : index
    %1 = vector.load %arg5[%c0_1, %c0_2] : memref<32x128xf32, #tpu.memory_space<vmem>>, vector<32x128xf32>
    %c0_3 = arith.constant 0 : index
    %c0_4 = arith.constant 0 : index
    %2 = vector.load %arg6[%c0_3, %c0_4] : memref<32x128xf32, #tpu.memory_space<vmem>>, vector<32x128xf32>
    %c0_5 = arith.constant 0 : index
    %c0_6 = arith.constant 0 : index
    %3 = vector.load %arg9[%c0_5, %c0_6] : memref<32x128xf32, #tpu.memory_space<vmem>>, vector<32x128xf32>
    %c0_7 = arith.constant 0 : index
    %c0_8 = arith.constant 0 : index
    %4 = vector.load %arg11[%c0_7, %c0_8] : memref<32x128xf32, #tpu.memory_space<vmem>>, vector<32x128xf32>
    %c0_9 = arith.constant 0 : index
    %c0_10 = arith.constant 0 : index
    %5 = vector.load %arg12[%c0_9, %c0_10] : memref<32x128xf32, #tpu.memory_space<vmem>>, vector<32x128xf32>
    %c0_11 = arith.constant 0 : index
    %c0_12 = arith.constant 0 : index
    %6 = vector.load %arg7[%c0_11, %c0_12] : memref<1x128xf32, #tpu.memory_space<vmem>>, vector<1x128xf32>
    %7 = vector.shape_cast %6 : vector<1x128xf32> to vector<1x128xf32>
    %8 = vector.broadcast %7 : vector<1x128xf32> to vector<8x128xf32>
    %c0_13 = arith.constant 0 : index
    %c0_14 = arith.constant 0 : index
    %9 = vector.load %arg13[%c0_13, %c0_14] : memref<1x128xf32, #tpu.memory_space<vmem>>, vector<1x128xf32>
    %10 = vector.shape_cast %9 : vector<1x128xf32> to vector<1x128xf32>
    %11 = vector.broadcast %10 : vector<1x128xf32> to vector<8x128xf32>
    %c0_15 = arith.constant 0 : index
    %c0_16 = arith.constant 0 : index
    %12 = vector.load %arg0[%c0_15, %c0_16] : memref<64x7xf32, #tpu.memory_space<vmem>>, vector<64x7xf32>
    %c0_17 = arith.constant 0 : index
    %c0_18 = arith.constant 0 : index
    %13 = vector.load %arg2[%c0_17, %c0_18] : memref<7x128xf32, #tpu.memory_space<vmem>>, vector<7x128xf32>
    %cst = arith.constant dense<0.000000e+00> : vector<64x128xf32>
    %14 = tpu.matmul %12, %13, %cst {dimension_numbers = #tpu.dot_dimension_numbers<[1], [0], [0], [1], [0, 0, 1, 1], [], []>} : vector<64x7xf32>, vector<7x128xf32>, vector<64x128xf32> -> vector<64x128xf32>
    %c0_19 = arith.constant 0 : index
    %c0_20 = arith.constant 0 : index
    %15 = vector.load %arg4[%c0_19, %c0_20] : memref<1x128xf32, #tpu.memory_space<vmem>>, vector<1x128xf32>
    %16 = vector.broadcast %15 : vector<1x128xf32> to vector<64x128xf32>
    %17 = arith.addf %14, %16 : vector<64x128xf32>
    %c0_21 = arith.constant 0 : index
    %c0_22 = arith.constant 0 : index
    %18 = vector.load %arg1[%c0_21, %c0_22] : memref<48x7xf32, #tpu.memory_space<vmem>>, vector<48x7xf32>
    %c0_23 = arith.constant 0 : index
    %c0_24 = arith.constant 0 : index
    %19 = vector.load %arg8[%c0_23, %c0_24] : memref<7x128xf32, #tpu.memory_space<vmem>>, vector<7x128xf32>
    %cst_25 = arith.constant dense<0.000000e+00> : vector<48x128xf32>
    %20 = tpu.matmul %18, %19, %cst_25 {dimension_numbers = #tpu.dot_dimension_numbers<[1], [0], [0], [1], [0, 0, 1, 1], [], []>} : vector<48x7xf32>, vector<7x128xf32>, vector<48x128xf32> -> vector<48x128xf32>
    %c0_26 = arith.constant 0 : index
    %c0_27 = arith.constant 0 : index
    %21 = vector.load %arg10[%c0_26, %c0_27] : memref<1x128xf32, #tpu.memory_space<vmem>>, vector<1x128xf32>
    %22 = vector.broadcast %21 : vector<1x128xf32> to vector<48x128xf32>
    %23 = arith.addf %20, %22 : vector<48x128xf32>
    %cst_28 = arith.constant 0.000000e+00 : f32
    %24 = vector.broadcast %cst_28 : f32 to vector<8x32xf32>
    %25 = vector.extract_strided_slice %17 {offsets = [0, 0], sizes = [8, 128], strides = [1, 1]} : vector<64x128xf32> to vector<8x128xf32>
    %cst_29 = arith.constant dense<0.000000e+00> : vector<8x128xf32>
    %26 = tpu.matmul %24, %0, %cst_29 {dimension_numbers = #tpu.dot_dimension_numbers<[1], [0], [0], [1], [0, 0, 1, 1], [], []>} : vector<8x32xf32>, vector<32x128xf32>, vector<8x128xf32> -> vector<8x128xf32>
    %27 = arith.addf %25, %26 : vector<8x128xf32>
    %28 = vector.extract_strided_slice %27 {offsets = [0, 0], sizes = [8, 96], strides = [1, 1]} : vector<8x128xf32> to vector<8x96xf32>
    %29 = arith.negf %28 : vector<8x96xf32>
    %30 = math.exp %29 : vector<8x96xf32>
    %cst_30 = arith.constant 1.000000e+00 : f32
    %31 = vector.broadcast %cst_30 : f32 to vector<8x96xf32>
    %32 = arith.addf %31, %30 : vector<8x96xf32>
    %33 = arith.divf %31, %32 : vector<8x96xf32>
    %34 = vector.extract_strided_slice %27 {offsets = [0, 96], sizes = [8, 32], strides = [1, 1]} : vector<8x128xf32> to vector<8x32xf32>
    %35 = math.tanh %34 : vector<8x32xf32>
    %36 = vector.extract_strided_slice %33 {offsets = [0, 32], sizes = [8, 32], strides = [1, 1]} : vector<8x96xf32> to vector<8x32xf32>
    %37 = arith.mulf %36, %24 : vector<8x32xf32>
    %38 = vector.extract_strided_slice %33 {offsets = [0, 0], sizes = [8, 32], strides = [1, 1]} : vector<8x96xf32> to vector<8x32xf32>
    %39 = arith.mulf %38, %35 : vector<8x32xf32>
    %40 = arith.addf %37, %39 : vector<8x32xf32>
    %41 = vector.extract_strided_slice %33 {offsets = [0, 64], sizes = [8, 32], strides = [1, 1]} : vector<8x96xf32> to vector<8x32xf32>
    %42 = math.tanh %40 : vector<8x32xf32>
    %43 = arith.mulf %41, %42 : vector<8x32xf32>
    %cst_31 = arith.constant dense<0.000000e+00> : vector<8x128xf32>
    %44 = tpu.matmul %43, %1, %cst_31 {dimension_numbers = #tpu.dot_dimension_numbers<[1], [0], [0], [1], [0, 0, 1, 1], [], []>} : vector<8x32xf32>, vector<32x128xf32>, vector<8x128xf32> -> vector<8x128xf32>
    %45 = arith.addf %44, %8 : vector<8x128xf32>
    %cst_32 = arith.constant dense<0.000000e+00> : vector<8x128xf32>
    %46 = tpu.matmul %24, %2, %cst_32 {dimension_numbers = #tpu.dot_dimension_numbers<[1], [0], [0], [1], [0, 0, 1, 1], [], []>} : vector<8x32xf32>, vector<32x128xf32>, vector<8x128xf32> -> vector<8x128xf32>
    %47 = arith.addf %45, %46 : vector<8x128xf32>
    %48 = vector.extract_strided_slice %47 {offsets = [0, 0], sizes = [8, 96], strides = [1, 1]} : vector<8x128xf32> to vector<8x96xf32>
    %49 = arith.negf %48 : vector<8x96xf32>
    %50 = math.exp %49 : vector<8x96xf32>
    %cst_33 = arith.constant 1.000000e+00 : f32
    %51 = vector.broadcast %cst_33 : f32 to vector<8x96xf32>
    %52 = arith.addf %51, %50 : vector<8x96xf32>
    %53 = arith.divf %51, %52 : vector<8x96xf32>
    %54 = vector.extract_strided_slice %47 {offsets = [0, 96], sizes = [8, 32], strides = [1, 1]} : vector<8x128xf32> to vector<8x32xf32>
    %55 = math.tanh %54 : vector<8x32xf32>
    %56 = vector.extract_strided_slice %53 {offsets = [0, 32], sizes = [8, 32], strides = [1, 1]} : vector<8x96xf32> to vector<8x32xf32>
    %57 = arith.mulf %56, %24 : vector<8x32xf32>
    %58 = vector.extract_strided_slice %53 {offsets = [0, 0], sizes = [8, 32], strides = [1, 1]} : vector<8x96xf32> to vector<8x32xf32>
    %59 = arith.mulf %58, %55 : vector<8x32xf32>
    %60 = arith.addf %57, %59 : vector<8x32xf32>
    %61 = vector.extract_strided_slice %53 {offsets = [0, 64], sizes = [8, 32], strides = [1, 1]} : vector<8x96xf32> to vector<8x32xf32>
    %62 = math.tanh %60 : vector<8x32xf32>
    %63 = arith.mulf %61, %62 : vector<8x32xf32>
    %64 = vector.extract_strided_slice %17 {offsets = [8, 0], sizes = [8, 128], strides = [1, 1]} : vector<64x128xf32> to vector<8x128xf32>
    %cst_34 = arith.constant dense<0.000000e+00> : vector<8x128xf32>
    %65 = tpu.matmul %43, %0, %cst_34 {dimension_numbers = #tpu.dot_dimension_numbers<[1], [0], [0], [1], [0, 0, 1, 1], [], []>} : vector<8x32xf32>, vector<32x128xf32>, vector<8x128xf32> -> vector<8x128xf32>
    %66 = arith.addf %64, %65 : vector<8x128xf32>
    %67 = vector.extract_strided_slice %66 {offsets = [0, 0], sizes = [8, 96], strides = [1, 1]} : vector<8x128xf32> to vector<8x96xf32>
    %68 = arith.negf %67 : vector<8x96xf32>
    %69 = math.exp %68 : vector<8x96xf32>
    %cst_35 = arith.constant 1.000000e+00 : f32
    %70 = vector.broadcast %cst_35 : f32 to vector<8x96xf32>
    %71 = arith.addf %70, %69 : vector<8x96xf32>
    %72 = arith.divf %70, %71 : vector<8x96xf32>
    %73 = vector.extract_strided_slice %66 {offsets = [0, 96], sizes = [8, 32], strides = [1, 1]} : vector<8x128xf32> to vector<8x32xf32>
    %74 = math.tanh %73 : vector<8x32xf32>
    %75 = vector.extract_strided_slice %72 {offsets = [0, 32], sizes = [8, 32], strides = [1, 1]} : vector<8x96xf32> to vector<8x32xf32>
    %76 = arith.mulf %75, %40 : vector<8x32xf32>
    %77 = vector.extract_strided_slice %72 {offsets = [0, 0], sizes = [8, 32], strides = [1, 1]} : vector<8x96xf32> to vector<8x32xf32>
    %78 = arith.mulf %77, %74 : vector<8x32xf32>
    %79 = arith.addf %76, %78 : vector<8x32xf32>
    %80 = vector.extract_strided_slice %72 {offsets = [0, 64], sizes = [8, 32], strides = [1, 1]} : vector<8x96xf32> to vector<8x32xf32>
    %81 = math.tanh %79 : vector<8x32xf32>
    %82 = arith.mulf %80, %81 : vector<8x32xf32>
    %cst_36 = arith.constant dense<0.000000e+00> : vector<8x128xf32>
    %83 = tpu.matmul %82, %1, %cst_36 {dimension_numbers = #tpu.dot_dimension_numbers<[1], [0], [0], [1], [0, 0, 1, 1], [], []>} : vector<8x32xf32>, vector<32x128xf32>, vector<8x128xf32> -> vector<8x128xf32>
    %84 = arith.addf %83, %8 : vector<8x128xf32>
    %cst_37 = arith.constant dense<0.000000e+00> : vector<8x128xf32>
    %85 = tpu.matmul %63, %2, %cst_37 {dimension_numbers = #tpu.dot_dimension_numbers<[1], [0], [0], [1], [0, 0, 1, 1], [], []>} : vector<8x32xf32>, vector<32x128xf32>, vector<8x128xf32> -> vector<8x128xf32>
    %86 = arith.addf %84, %85 : vector<8x128xf32>
    %87 = vector.extract_strided_slice %86 {offsets = [0, 0], sizes = [8, 96], strides = [1, 1]} : vector<8x128xf32> to vector<8x96xf32>
    %88 = arith.negf %87 : vector<8x96xf32>
    %89 = math.exp %88 : vector<8x96xf32>
    %cst_38 = arith.constant 1.000000e+00 : f32
    %90 = vector.broadcast %cst_38 : f32 to vector<8x96xf32>
    %91 = arith.addf %90, %89 : vector<8x96xf32>
    %92 = arith.divf %90, %91 : vector<8x96xf32>
    %93 = vector.extract_strided_slice %86 {offsets = [0, 96], sizes = [8, 32], strides = [1, 1]} : vector<8x128xf32> to vector<8x32xf32>
    %94 = math.tanh %93 : vector<8x32xf32>
    %95 = vector.extract_strided_slice %92 {offsets = [0, 32], sizes = [8, 32], strides = [1, 1]} : vector<8x96xf32> to vector<8x32xf32>
    %96 = arith.mulf %95, %60 : vector<8x32xf32>
    %97 = vector.extract_strided_slice %92 {offsets = [0, 0], sizes = [8, 32], strides = [1, 1]} : vector<8x96xf32> to vector<8x32xf32>
    %98 = arith.mulf %97, %94 : vector<8x32xf32>
    %99 = arith.addf %96, %98 : vector<8x32xf32>
    %100 = vector.extract_strided_slice %92 {offsets = [0, 64], sizes = [8, 32], strides = [1, 1]} : vector<8x96xf32> to vector<8x32xf32>
    %101 = math.tanh %99 : vector<8x32xf32>
    %102 = arith.mulf %100, %101 : vector<8x32xf32>
    %103 = vector.extract_strided_slice %17 {offsets = [16, 0], sizes = [8, 128], strides = [1, 1]} : vector<64x128xf32> to vector<8x128xf32>
    %cst_39 = arith.constant dense<0.000000e+00> : vector<8x128xf32>
    %104 = tpu.matmul %82, %0, %cst_39 {dimension_numbers = #tpu.dot_dimension_numbers<[1], [0], [0], [1], [0, 0, 1, 1], [], []>} : vector<8x32xf32>, vector<32x128xf32>, vector<8x128xf32> -> vector<8x128xf32>
    %105 = arith.addf %103, %104 : vector<8x128xf32>
    %106 = vector.extract_strided_slice %105 {offsets = [0, 0], sizes = [8, 96], strides = [1, 1]} : vector<8x128xf32> to vector<8x96xf32>
    %107 = arith.negf %106 : vector<8x96xf32>
    %108 = math.exp %107 : vector<8x96xf32>
    %cst_40 = arith.constant 1.000000e+00 : f32
    %109 = vector.broadcast %cst_40 : f32 to vector<8x96xf32>
    %110 = arith.addf %109, %108 : vector<8x96xf32>
    %111 = arith.divf %109, %110 : vector<8x96xf32>
    %112 = vector.extract_strided_slice %105 {offsets = [0, 96], sizes = [8, 32], strides = [1, 1]} : vector<8x128xf32> to vector<8x32xf32>
    %113 = math.tanh %112 : vector<8x32xf32>
    %114 = vector.extract_strided_slice %111 {offsets = [0, 32], sizes = [8, 32], strides = [1, 1]} : vector<8x96xf32> to vector<8x32xf32>
    %115 = arith.mulf %114, %79 : vector<8x32xf32>
    %116 = vector.extract_strided_slice %111 {offsets = [0, 0], sizes = [8, 32], strides = [1, 1]} : vector<8x96xf32> to vector<8x32xf32>
    %117 = arith.mulf %116, %113 : vector<8x32xf32>
    %118 = arith.addf %115, %117 : vector<8x32xf32>
    %119 = vector.extract_strided_slice %111 {offsets = [0, 64], sizes = [8, 32], strides = [1, 1]} : vector<8x96xf32> to vector<8x32xf32>
    %120 = math.tanh %118 : vector<8x32xf32>
    %121 = arith.mulf %119, %120 : vector<8x32xf32>
    %cst_41 = arith.constant dense<0.000000e+00> : vector<8x128xf32>
    %122 = tpu.matmul %121, %1, %cst_41 {dimension_numbers = #tpu.dot_dimension_numbers<[1], [0], [0], [1], [0, 0, 1, 1], [], []>} : vector<8x32xf32>, vector<32x128xf32>, vector<8x128xf32> -> vector<8x128xf32>
    %123 = arith.addf %122, %8 : vector<8x128xf32>
    %cst_42 = arith.constant dense<0.000000e+00> : vector<8x128xf32>
    %124 = tpu.matmul %102, %2, %cst_42 {dimension_numbers = #tpu.dot_dimension_numbers<[1], [0], [0], [1], [0, 0, 1, 1], [], []>} : vector<8x32xf32>, vector<32x128xf32>, vector<8x128xf32> -> vector<8x128xf32>
    %125 = arith.addf %123, %124 : vector<8x128xf32>
    %126 = vector.extract_strided_slice %125 {offsets = [0, 0], sizes = [8, 96], strides = [1, 1]} : vector<8x128xf32> to vector<8x96xf32>
    %127 = arith.negf %126 : vector<8x96xf32>
    %128 = math.exp %127 : vector<8x96xf32>
    %cst_43 = arith.constant 1.000000e+00 : f32
    %129 = vector.broadcast %cst_43 : f32 to vector<8x96xf32>
    %130 = arith.addf %129, %128 : vector<8x96xf32>
    %131 = arith.divf %129, %130 : vector<8x96xf32>
    %132 = vector.extract_strided_slice %125 {offsets = [0, 96], sizes = [8, 32], strides = [1, 1]} : vector<8x128xf32> to vector<8x32xf32>
    %133 = math.tanh %132 : vector<8x32xf32>
    %134 = vector.extract_strided_slice %131 {offsets = [0, 32], sizes = [8, 32], strides = [1, 1]} : vector<8x96xf32> to vector<8x32xf32>
    %135 = arith.mulf %134, %99 : vector<8x32xf32>
    %136 = vector.extract_strided_slice %131 {offsets = [0, 0], sizes = [8, 32], strides = [1, 1]} : vector<8x96xf32> to vector<8x32xf32>
    %137 = arith.mulf %136, %133 : vector<8x32xf32>
    %138 = arith.addf %135, %137 : vector<8x32xf32>
    %139 = vector.extract_strided_slice %131 {offsets = [0, 64], sizes = [8, 32], strides = [1, 1]} : vector<8x96xf32> to vector<8x32xf32>
    %140 = math.tanh %138 : vector<8x32xf32>
    %141 = arith.mulf %139, %140 : vector<8x32xf32>
    %142 = vector.extract_strided_slice %17 {offsets = [24, 0], sizes = [8, 128], strides = [1, 1]} : vector<64x128xf32> to vector<8x128xf32>
    %cst_44 = arith.constant dense<0.000000e+00> : vector<8x128xf32>
    %143 = tpu.matmul %121, %0, %cst_44 {dimension_numbers = #tpu.dot_dimension_numbers<[1], [0], [0], [1], [0, 0, 1, 1], [], []>} : vector<8x32xf32>, vector<32x128xf32>, vector<8x128xf32> -> vector<8x128xf32>
    %144 = arith.addf %142, %143 : vector<8x128xf32>
    %145 = vector.extract_strided_slice %144 {offsets = [0, 0], sizes = [8, 96], strides = [1, 1]} : vector<8x128xf32> to vector<8x96xf32>
    %146 = arith.negf %145 : vector<8x96xf32>
    %147 = math.exp %146 : vector<8x96xf32>
    %cst_45 = arith.constant 1.000000e+00 : f32
    %148 = vector.broadcast %cst_45 : f32 to vector<8x96xf32>
    %149 = arith.addf %148, %147 : vector<8x96xf32>
    %150 = arith.divf %148, %149 : vector<8x96xf32>
    %151 = vector.extract_strided_slice %144 {offsets = [0, 96], sizes = [8, 32], strides = [1, 1]} : vector<8x128xf32> to vector<8x32xf32>
    %152 = math.tanh %151 : vector<8x32xf32>
    %153 = vector.extract_strided_slice %150 {offsets = [0, 32], sizes = [8, 32], strides = [1, 1]} : vector<8x96xf32> to vector<8x32xf32>
    %154 = arith.mulf %153, %118 : vector<8x32xf32>
    %155 = vector.extract_strided_slice %150 {offsets = [0, 0], sizes = [8, 32], strides = [1, 1]} : vector<8x96xf32> to vector<8x32xf32>
    %156 = arith.mulf %155, %152 : vector<8x32xf32>
    %157 = arith.addf %154, %156 : vector<8x32xf32>
    %158 = vector.extract_strided_slice %150 {offsets = [0, 64], sizes = [8, 32], strides = [1, 1]} : vector<8x96xf32> to vector<8x32xf32>
    %159 = math.tanh %157 : vector<8x32xf32>
    %160 = arith.mulf %158, %159 : vector<8x32xf32>
    %cst_46 = arith.constant dense<0.000000e+00> : vector<8x128xf32>
    %161 = tpu.matmul %160, %1, %cst_46 {dimension_numbers = #tpu.dot_dimension_numbers<[1], [0], [0], [1], [0, 0, 1, 1], [], []>} : vector<8x32xf32>, vector<32x128xf32>, vector<8x128xf32> -> vector<8x128xf32>
    %162 = arith.addf %161, %8 : vector<8x128xf32>
    %cst_47 = arith.constant dense<0.000000e+00> : vector<8x128xf32>
    %163 = tpu.matmul %141, %2, %cst_47 {dimension_numbers = #tpu.dot_dimension_numbers<[1], [0], [0], [1], [0, 0, 1, 1], [], []>} : vector<8x32xf32>, vector<32x128xf32>, vector<8x128xf32> -> vector<8x128xf32>
    %164 = arith.addf %162, %163 : vector<8x128xf32>
    %165 = vector.extract_strided_slice %164 {offsets = [0, 0], sizes = [8, 96], strides = [1, 1]} : vector<8x128xf32> to vector<8x96xf32>
    %166 = arith.negf %165 : vector<8x96xf32>
    %167 = math.exp %166 : vector<8x96xf32>
    %cst_48 = arith.constant 1.000000e+00 : f32
    %168 = vector.broadcast %cst_48 : f32 to vector<8x96xf32>
    %169 = arith.addf %168, %167 : vector<8x96xf32>
    %170 = arith.divf %168, %169 : vector<8x96xf32>
    %171 = vector.extract_strided_slice %164 {offsets = [0, 96], sizes = [8, 32], strides = [1, 1]} : vector<8x128xf32> to vector<8x32xf32>
    %172 = math.tanh %171 : vector<8x32xf32>
    %173 = vector.extract_strided_slice %170 {offsets = [0, 32], sizes = [8, 32], strides = [1, 1]} : vector<8x96xf32> to vector<8x32xf32>
    %174 = arith.mulf %173, %138 : vector<8x32xf32>
    %175 = vector.extract_strided_slice %170 {offsets = [0, 0], sizes = [8, 32], strides = [1, 1]} : vector<8x96xf32> to vector<8x32xf32>
    %176 = arith.mulf %175, %172 : vector<8x32xf32>
    %177 = arith.addf %174, %176 : vector<8x32xf32>
    %178 = vector.extract_strided_slice %170 {offsets = [0, 64], sizes = [8, 32], strides = [1, 1]} : vector<8x96xf32> to vector<8x32xf32>
    %179 = math.tanh %177 : vector<8x32xf32>
    %180 = arith.mulf %178, %179 : vector<8x32xf32>
    %181 = vector.extract_strided_slice %17 {offsets = [32, 0], sizes = [8, 128], strides = [1, 1]} : vector<64x128xf32> to vector<8x128xf32>
    %cst_49 = arith.constant dense<0.000000e+00> : vector<8x128xf32>
    %182 = tpu.matmul %160, %0, %cst_49 {dimension_numbers = #tpu.dot_dimension_numbers<[1], [0], [0], [1], [0, 0, 1, 1], [], []>} : vector<8x32xf32>, vector<32x128xf32>, vector<8x128xf32> -> vector<8x128xf32>
    %183 = arith.addf %181, %182 : vector<8x128xf32>
    %184 = vector.extract_strided_slice %183 {offsets = [0, 0], sizes = [8, 96], strides = [1, 1]} : vector<8x128xf32> to vector<8x96xf32>
    %185 = arith.negf %184 : vector<8x96xf32>
    %186 = math.exp %185 : vector<8x96xf32>
    %cst_50 = arith.constant 1.000000e+00 : f32
    %187 = vector.broadcast %cst_50 : f32 to vector<8x96xf32>
    %188 = arith.addf %187, %186 : vector<8x96xf32>
    %189 = arith.divf %187, %188 : vector<8x96xf32>
    %190 = vector.extract_strided_slice %183 {offsets = [0, 96], sizes = [8, 32], strides = [1, 1]} : vector<8x128xf32> to vector<8x32xf32>
    %191 = math.tanh %190 : vector<8x32xf32>
    %192 = vector.extract_strided_slice %189 {offsets = [0, 32], sizes = [8, 32], strides = [1, 1]} : vector<8x96xf32> to vector<8x32xf32>
    %193 = arith.mulf %192, %157 : vector<8x32xf32>
    %194 = vector.extract_strided_slice %189 {offsets = [0, 0], sizes = [8, 32], strides = [1, 1]} : vector<8x96xf32> to vector<8x32xf32>
    %195 = arith.mulf %194, %191 : vector<8x32xf32>
    %196 = arith.addf %193, %195 : vector<8x32xf32>
    %197 = vector.extract_strided_slice %189 {offsets = [0, 64], sizes = [8, 32], strides = [1, 1]} : vector<8x96xf32> to vector<8x32xf32>
    %198 = math.tanh %196 : vector<8x32xf32>
    %199 = arith.mulf %197, %198 : vector<8x32xf32>
    %cst_51 = arith.constant dense<0.000000e+00> : vector<8x128xf32>
    %200 = tpu.matmul %199, %1, %cst_51 {dimension_numbers = #tpu.dot_dimension_numbers<[1], [0], [0], [1], [0, 0, 1, 1], [], []>} : vector<8x32xf32>, vector<32x128xf32>, vector<8x128xf32> -> vector<8x128xf32>
    %201 = arith.addf %200, %8 : vector<8x128xf32>
    %cst_52 = arith.constant dense<0.000000e+00> : vector<8x128xf32>
    %202 = tpu.matmul %180, %2, %cst_52 {dimension_numbers = #tpu.dot_dimension_numbers<[1], [0], [0], [1], [0, 0, 1, 1], [], []>} : vector<8x32xf32>, vector<32x128xf32>, vector<8x128xf32> -> vector<8x128xf32>
    %203 = arith.addf %201, %202 : vector<8x128xf32>
    %204 = vector.extract_strided_slice %203 {offsets = [0, 0], sizes = [8, 96], strides = [1, 1]} : vector<8x128xf32> to vector<8x96xf32>
    %205 = arith.negf %204 : vector<8x96xf32>
    %206 = math.exp %205 : vector<8x96xf32>
    %cst_53 = arith.constant 1.000000e+00 : f32
    %207 = vector.broadcast %cst_53 : f32 to vector<8x96xf32>
    %208 = arith.addf %207, %206 : vector<8x96xf32>
    %209 = arith.divf %207, %208 : vector<8x96xf32>
    %210 = vector.extract_strided_slice %203 {offsets = [0, 96], sizes = [8, 32], strides = [1, 1]} : vector<8x128xf32> to vector<8x32xf32>
    %211 = math.tanh %210 : vector<8x32xf32>
    %212 = vector.extract_strided_slice %209 {offsets = [0, 32], sizes = [8, 32], strides = [1, 1]} : vector<8x96xf32> to vector<8x32xf32>
    %213 = arith.mulf %212, %177 : vector<8x32xf32>
    %214 = vector.extract_strided_slice %209 {offsets = [0, 0], sizes = [8, 32], strides = [1, 1]} : vector<8x96xf32> to vector<8x32xf32>
    %215 = arith.mulf %214, %211 : vector<8x32xf32>
    %216 = arith.addf %213, %215 : vector<8x32xf32>
    %217 = vector.extract_strided_slice %209 {offsets = [0, 64], sizes = [8, 32], strides = [1, 1]} : vector<8x96xf32> to vector<8x32xf32>
    %218 = math.tanh %216 : vector<8x32xf32>
    %219 = arith.mulf %217, %218 : vector<8x32xf32>
    %220 = vector.extract_strided_slice %17 {offsets = [40, 0], sizes = [8, 128], strides = [1, 1]} : vector<64x128xf32> to vector<8x128xf32>
    %cst_54 = arith.constant dense<0.000000e+00> : vector<8x128xf32>
    %221 = tpu.matmul %199, %0, %cst_54 {dimension_numbers = #tpu.dot_dimension_numbers<[1], [0], [0], [1], [0, 0, 1, 1], [], []>} : vector<8x32xf32>, vector<32x128xf32>, vector<8x128xf32> -> vector<8x128xf32>
    %222 = arith.addf %220, %221 : vector<8x128xf32>
    %223 = vector.extract_strided_slice %222 {offsets = [0, 0], sizes = [8, 96], strides = [1, 1]} : vector<8x128xf32> to vector<8x96xf32>
    %224 = arith.negf %223 : vector<8x96xf32>
    %225 = math.exp %224 : vector<8x96xf32>
    %cst_55 = arith.constant 1.000000e+00 : f32
    %226 = vector.broadcast %cst_55 : f32 to vector<8x96xf32>
    %227 = arith.addf %226, %225 : vector<8x96xf32>
    %228 = arith.divf %226, %227 : vector<8x96xf32>
    %229 = vector.extract_strided_slice %222 {offsets = [0, 96], sizes = [8, 32], strides = [1, 1]} : vector<8x128xf32> to vector<8x32xf32>
    %230 = math.tanh %229 : vector<8x32xf32>
    %231 = vector.extract_strided_slice %228 {offsets = [0, 32], sizes = [8, 32], strides = [1, 1]} : vector<8x96xf32> to vector<8x32xf32>
    %232 = arith.mulf %231, %196 : vector<8x32xf32>
    %233 = vector.extract_strided_slice %228 {offsets = [0, 0], sizes = [8, 32], strides = [1, 1]} : vector<8x96xf32> to vector<8x32xf32>
    %234 = arith.mulf %233, %230 : vector<8x32xf32>
    %235 = arith.addf %232, %234 : vector<8x32xf32>
    %236 = vector.extract_strided_slice %228 {offsets = [0, 64], sizes = [8, 32], strides = [1, 1]} : vector<8x96xf32> to vector<8x32xf32>
    %237 = math.tanh %235 : vector<8x32xf32>
    %238 = arith.mulf %236, %237 : vector<8x32xf32>
    %cst_56 = arith.constant dense<0.000000e+00> : vector<8x128xf32>
    %239 = tpu.matmul %238, %1, %cst_56 {dimension_numbers = #tpu.dot_dimension_numbers<[1], [0], [0], [1], [0, 0, 1, 1], [], []>} : vector<8x32xf32>, vector<32x128xf32>, vector<8x128xf32> -> vector<8x128xf32>
    %240 = arith.addf %239, %8 : vector<8x128xf32>
    %cst_57 = arith.constant dense<0.000000e+00> : vector<8x128xf32>
    %241 = tpu.matmul %219, %2, %cst_57 {dimension_numbers = #tpu.dot_dimension_numbers<[1], [0], [0], [1], [0, 0, 1, 1], [], []>} : vector<8x32xf32>, vector<32x128xf32>, vector<8x128xf32> -> vector<8x128xf32>
    %242 = arith.addf %240, %241 : vector<8x128xf32>
    %243 = vector.extract_strided_slice %242 {offsets = [0, 0], sizes = [8, 96], strides = [1, 1]} : vector<8x128xf32> to vector<8x96xf32>
    %244 = arith.negf %243 : vector<8x96xf32>
    %245 = math.exp %244 : vector<8x96xf32>
    %cst_58 = arith.constant 1.000000e+00 : f32
    %246 = vector.broadcast %cst_58 : f32 to vector<8x96xf32>
    %247 = arith.addf %246, %245 : vector<8x96xf32>
    %248 = arith.divf %246, %247 : vector<8x96xf32>
    %249 = vector.extract_strided_slice %242 {offsets = [0, 96], sizes = [8, 32], strides = [1, 1]} : vector<8x128xf32> to vector<8x32xf32>
    %250 = math.tanh %249 : vector<8x32xf32>
    %251 = vector.extract_strided_slice %248 {offsets = [0, 32], sizes = [8, 32], strides = [1, 1]} : vector<8x96xf32> to vector<8x32xf32>
    %252 = arith.mulf %251, %216 : vector<8x32xf32>
    %253 = vector.extract_strided_slice %248 {offsets = [0, 0], sizes = [8, 32], strides = [1, 1]} : vector<8x96xf32> to vector<8x32xf32>
    %254 = arith.mulf %253, %250 : vector<8x32xf32>
    %255 = arith.addf %252, %254 : vector<8x32xf32>
    %256 = vector.extract_strided_slice %248 {offsets = [0, 64], sizes = [8, 32], strides = [1, 1]} : vector<8x96xf32> to vector<8x32xf32>
    %257 = math.tanh %255 : vector<8x32xf32>
    %258 = arith.mulf %256, %257 : vector<8x32xf32>
    %259 = vector.extract_strided_slice %17 {offsets = [48, 0], sizes = [8, 128], strides = [1, 1]} : vector<64x128xf32> to vector<8x128xf32>
    %cst_59 = arith.constant dense<0.000000e+00> : vector<8x128xf32>
    %260 = tpu.matmul %238, %0, %cst_59 {dimension_numbers = #tpu.dot_dimension_numbers<[1], [0], [0], [1], [0, 0, 1, 1], [], []>} : vector<8x32xf32>, vector<32x128xf32>, vector<8x128xf32> -> vector<8x128xf32>
    %261 = arith.addf %259, %260 : vector<8x128xf32>
    %262 = vector.extract_strided_slice %261 {offsets = [0, 0], sizes = [8, 96], strides = [1, 1]} : vector<8x128xf32> to vector<8x96xf32>
    %263 = arith.negf %262 : vector<8x96xf32>
    %264 = math.exp %263 : vector<8x96xf32>
    %cst_60 = arith.constant 1.000000e+00 : f32
    %265 = vector.broadcast %cst_60 : f32 to vector<8x96xf32>
    %266 = arith.addf %265, %264 : vector<8x96xf32>
    %267 = arith.divf %265, %266 : vector<8x96xf32>
    %268 = vector.extract_strided_slice %261 {offsets = [0, 96], sizes = [8, 32], strides = [1, 1]} : vector<8x128xf32> to vector<8x32xf32>
    %269 = math.tanh %268 : vector<8x32xf32>
    %270 = vector.extract_strided_slice %267 {offsets = [0, 32], sizes = [8, 32], strides = [1, 1]} : vector<8x96xf32> to vector<8x32xf32>
    %271 = arith.mulf %270, %235 : vector<8x32xf32>
    %272 = vector.extract_strided_slice %267 {offsets = [0, 0], sizes = [8, 32], strides = [1, 1]} : vector<8x96xf32> to vector<8x32xf32>
    %273 = arith.mulf %272, %269 : vector<8x32xf32>
    %274 = arith.addf %271, %273 : vector<8x32xf32>
    %275 = vector.extract_strided_slice %267 {offsets = [0, 64], sizes = [8, 32], strides = [1, 1]} : vector<8x96xf32> to vector<8x32xf32>
    %276 = math.tanh %274 : vector<8x32xf32>
    %277 = arith.mulf %275, %276 : vector<8x32xf32>
    %cst_61 = arith.constant dense<0.000000e+00> : vector<8x128xf32>
    %278 = tpu.matmul %277, %1, %cst_61 {dimension_numbers = #tpu.dot_dimension_numbers<[1], [0], [0], [1], [0, 0, 1, 1], [], []>} : vector<8x32xf32>, vector<32x128xf32>, vector<8x128xf32> -> vector<8x128xf32>
    %279 = arith.addf %278, %8 : vector<8x128xf32>
    %cst_62 = arith.constant dense<0.000000e+00> : vector<8x128xf32>
    %280 = tpu.matmul %258, %2, %cst_62 {dimension_numbers = #tpu.dot_dimension_numbers<[1], [0], [0], [1], [0, 0, 1, 1], [], []>} : vector<8x32xf32>, vector<32x128xf32>, vector<8x128xf32> -> vector<8x128xf32>
    %281 = arith.addf %279, %280 : vector<8x128xf32>
    %282 = vector.extract_strided_slice %281 {offsets = [0, 0], sizes = [8, 96], strides = [1, 1]} : vector<8x128xf32> to vector<8x96xf32>
    %283 = arith.negf %282 : vector<8x96xf32>
    %284 = math.exp %283 : vector<8x96xf32>
    %cst_63 = arith.constant 1.000000e+00 : f32
    %285 = vector.broadcast %cst_63 : f32 to vector<8x96xf32>
    %286 = arith.addf %285, %284 : vector<8x96xf32>
    %287 = arith.divf %285, %286 : vector<8x96xf32>
    %288 = vector.extract_strided_slice %281 {offsets = [0, 96], sizes = [8, 32], strides = [1, 1]} : vector<8x128xf32> to vector<8x32xf32>
    %289 = math.tanh %288 : vector<8x32xf32>
    %290 = vector.extract_strided_slice %287 {offsets = [0, 32], sizes = [8, 32], strides = [1, 1]} : vector<8x96xf32> to vector<8x32xf32>
    %291 = arith.mulf %290, %255 : vector<8x32xf32>
    %292 = vector.extract_strided_slice %287 {offsets = [0, 0], sizes = [8, 32], strides = [1, 1]} : vector<8x96xf32> to vector<8x32xf32>
    %293 = arith.mulf %292, %289 : vector<8x32xf32>
    %294 = arith.addf %291, %293 : vector<8x32xf32>
    %295 = vector.extract_strided_slice %287 {offsets = [0, 64], sizes = [8, 32], strides = [1, 1]} : vector<8x96xf32> to vector<8x32xf32>
    %296 = math.tanh %294 : vector<8x32xf32>
    %297 = arith.mulf %295, %296 : vector<8x32xf32>
    %298 = vector.extract_strided_slice %17 {offsets = [56, 0], sizes = [8, 128], strides = [1, 1]} : vector<64x128xf32> to vector<8x128xf32>
    %cst_64 = arith.constant dense<0.000000e+00> : vector<8x128xf32>
    %299 = tpu.matmul %277, %0, %cst_64 {dimension_numbers = #tpu.dot_dimension_numbers<[1], [0], [0], [1], [0, 0, 1, 1], [], []>} : vector<8x32xf32>, vector<32x128xf32>, vector<8x128xf32> -> vector<8x128xf32>
    %300 = arith.addf %298, %299 : vector<8x128xf32>
    %301 = vector.extract_strided_slice %300 {offsets = [0, 0], sizes = [8, 96], strides = [1, 1]} : vector<8x128xf32> to vector<8x96xf32>
    %302 = arith.negf %301 : vector<8x96xf32>
    %303 = math.exp %302 : vector<8x96xf32>
    %cst_65 = arith.constant 1.000000e+00 : f32
    %304 = vector.broadcast %cst_65 : f32 to vector<8x96xf32>
    %305 = arith.addf %304, %303 : vector<8x96xf32>
    %306 = arith.divf %304, %305 : vector<8x96xf32>
    %307 = vector.extract_strided_slice %300 {offsets = [0, 96], sizes = [8, 32], strides = [1, 1]} : vector<8x128xf32> to vector<8x32xf32>
    %308 = math.tanh %307 : vector<8x32xf32>
    %309 = vector.extract_strided_slice %306 {offsets = [0, 32], sizes = [8, 32], strides = [1, 1]} : vector<8x96xf32> to vector<8x32xf32>
    %310 = arith.mulf %309, %274 : vector<8x32xf32>
    %311 = vector.extract_strided_slice %306 {offsets = [0, 0], sizes = [8, 32], strides = [1, 1]} : vector<8x96xf32> to vector<8x32xf32>
    %312 = arith.mulf %311, %308 : vector<8x32xf32>
    %313 = arith.addf %310, %312 : vector<8x32xf32>
    %314 = vector.extract_strided_slice %306 {offsets = [0, 64], sizes = [8, 32], strides = [1, 1]} : vector<8x96xf32> to vector<8x32xf32>
    %315 = math.tanh %313 : vector<8x32xf32>
    %316 = arith.mulf %314, %315 : vector<8x32xf32>
    %cst_66 = arith.constant dense<0.000000e+00> : vector<8x128xf32>
    %317 = tpu.matmul %316, %1, %cst_66 {dimension_numbers = #tpu.dot_dimension_numbers<[1], [0], [0], [1], [0, 0, 1, 1], [], []>} : vector<8x32xf32>, vector<32x128xf32>, vector<8x128xf32> -> vector<8x128xf32>
    %318 = arith.addf %317, %8 : vector<8x128xf32>
    %cst_67 = arith.constant dense<0.000000e+00> : vector<8x128xf32>
    %319 = tpu.matmul %297, %2, %cst_67 {dimension_numbers = #tpu.dot_dimension_numbers<[1], [0], [0], [1], [0, 0, 1, 1], [], []>} : vector<8x32xf32>, vector<32x128xf32>, vector<8x128xf32> -> vector<8x128xf32>
    %320 = arith.addf %318, %319 : vector<8x128xf32>
    %321 = vector.extract_strided_slice %320 {offsets = [0, 0], sizes = [8, 96], strides = [1, 1]} : vector<8x128xf32> to vector<8x96xf32>
    %322 = arith.negf %321 : vector<8x96xf32>
    %323 = math.exp %322 : vector<8x96xf32>
    %cst_68 = arith.constant 1.000000e+00 : f32
    %324 = vector.broadcast %cst_68 : f32 to vector<8x96xf32>
    %325 = arith.addf %324, %323 : vector<8x96xf32>
    %326 = arith.divf %324, %325 : vector<8x96xf32>
    %327 = vector.extract_strided_slice %320 {offsets = [0, 96], sizes = [8, 32], strides = [1, 1]} : vector<8x128xf32> to vector<8x32xf32>
    %328 = math.tanh %327 : vector<8x32xf32>
    %329 = vector.extract_strided_slice %326 {offsets = [0, 32], sizes = [8, 32], strides = [1, 1]} : vector<8x96xf32> to vector<8x32xf32>
    %330 = arith.mulf %329, %294 : vector<8x32xf32>
    %331 = vector.extract_strided_slice %326 {offsets = [0, 0], sizes = [8, 32], strides = [1, 1]} : vector<8x96xf32> to vector<8x32xf32>
    %332 = arith.mulf %331, %328 : vector<8x32xf32>
    %333 = arith.addf %330, %332 : vector<8x32xf32>
    %334 = vector.extract_strided_slice %326 {offsets = [0, 64], sizes = [8, 32], strides = [1, 1]} : vector<8x96xf32> to vector<8x32xf32>
    %335 = math.tanh %333 : vector<8x32xf32>
    %336 = arith.mulf %334, %335 : vector<8x32xf32>
    %337 = vector.extract_strided_slice %23 {offsets = [0, 0], sizes = [8, 128], strides = [1, 1]} : vector<48x128xf32> to vector<8x128xf32>
    %cst_69 = arith.constant dense<0.000000e+00> : vector<8x128xf32>
    %338 = tpu.matmul %316, %3, %cst_69 {dimension_numbers = #tpu.dot_dimension_numbers<[1], [0], [0], [1], [0, 0, 1, 1], [], []>} : vector<8x32xf32>, vector<32x128xf32>, vector<8x128xf32> -> vector<8x128xf32>
    %339 = arith.addf %337, %338 : vector<8x128xf32>
    %340 = vector.extract_strided_slice %339 {offsets = [0, 0], sizes = [8, 96], strides = [1, 1]} : vector<8x128xf32> to vector<8x96xf32>
    %341 = arith.negf %340 : vector<8x96xf32>
    %342 = math.exp %341 : vector<8x96xf32>
    %cst_70 = arith.constant 1.000000e+00 : f32
    %343 = vector.broadcast %cst_70 : f32 to vector<8x96xf32>
    %344 = arith.addf %343, %342 : vector<8x96xf32>
    %345 = arith.divf %343, %344 : vector<8x96xf32>
    %346 = vector.extract_strided_slice %339 {offsets = [0, 96], sizes = [8, 32], strides = [1, 1]} : vector<8x128xf32> to vector<8x32xf32>
    %347 = math.tanh %346 : vector<8x32xf32>
    %348 = vector.extract_strided_slice %345 {offsets = [0, 32], sizes = [8, 32], strides = [1, 1]} : vector<8x96xf32> to vector<8x32xf32>
    %349 = arith.mulf %348, %313 : vector<8x32xf32>
    %350 = vector.extract_strided_slice %345 {offsets = [0, 0], sizes = [8, 32], strides = [1, 1]} : vector<8x96xf32> to vector<8x32xf32>
    %351 = arith.mulf %350, %347 : vector<8x32xf32>
    %352 = arith.addf %349, %351 : vector<8x32xf32>
    %353 = vector.extract_strided_slice %345 {offsets = [0, 64], sizes = [8, 32], strides = [1, 1]} : vector<8x96xf32> to vector<8x32xf32>
    %354 = math.tanh %352 : vector<8x32xf32>
    %355 = arith.mulf %353, %354 : vector<8x32xf32>
    %cst_71 = arith.constant dense<0.000000e+00> : vector<8x128xf32>
    %356 = tpu.matmul %355, %4, %cst_71 {dimension_numbers = #tpu.dot_dimension_numbers<[1], [0], [0], [1], [0, 0, 1, 1], [], []>} : vector<8x32xf32>, vector<32x128xf32>, vector<8x128xf32> -> vector<8x128xf32>
    %357 = arith.addf %356, %11 : vector<8x128xf32>
    %cst_72 = arith.constant dense<0.000000e+00> : vector<8x128xf32>
    %358 = tpu.matmul %336, %5, %cst_72 {dimension_numbers = #tpu.dot_dimension_numbers<[1], [0], [0], [1], [0, 0, 1, 1], [], []>} : vector<8x32xf32>, vector<32x128xf32>, vector<8x128xf32> -> vector<8x128xf32>
    %359 = arith.addf %357, %358 : vector<8x128xf32>
    %360 = vector.extract_strided_slice %359 {offsets = [0, 0], sizes = [8, 96], strides = [1, 1]} : vector<8x128xf32> to vector<8x96xf32>
    %361 = arith.negf %360 : vector<8x96xf32>
    %362 = math.exp %361 : vector<8x96xf32>
    %cst_73 = arith.constant 1.000000e+00 : f32
    %363 = vector.broadcast %cst_73 : f32 to vector<8x96xf32>
    %364 = arith.addf %363, %362 : vector<8x96xf32>
    %365 = arith.divf %363, %364 : vector<8x96xf32>
    %366 = vector.extract_strided_slice %359 {offsets = [0, 96], sizes = [8, 32], strides = [1, 1]} : vector<8x128xf32> to vector<8x32xf32>
    %367 = math.tanh %366 : vector<8x32xf32>
    %368 = vector.extract_strided_slice %365 {offsets = [0, 32], sizes = [8, 32], strides = [1, 1]} : vector<8x96xf32> to vector<8x32xf32>
    %369 = arith.mulf %368, %333 : vector<8x32xf32>
    %370 = vector.extract_strided_slice %365 {offsets = [0, 0], sizes = [8, 32], strides = [1, 1]} : vector<8x96xf32> to vector<8x32xf32>
    %371 = arith.mulf %370, %367 : vector<8x32xf32>
    %372 = arith.addf %369, %371 : vector<8x32xf32>
    %373 = vector.extract_strided_slice %365 {offsets = [0, 64], sizes = [8, 32], strides = [1, 1]} : vector<8x96xf32> to vector<8x32xf32>
    %374 = math.tanh %372 : vector<8x32xf32>
    %375 = arith.mulf %373, %374 : vector<8x32xf32>
    %376 = vector.extract_strided_slice %23 {offsets = [8, 0], sizes = [8, 128], strides = [1, 1]} : vector<48x128xf32> to vector<8x128xf32>
    %cst_74 = arith.constant dense<0.000000e+00> : vector<8x128xf32>
    %377 = tpu.matmul %355, %3, %cst_74 {dimension_numbers = #tpu.dot_dimension_numbers<[1], [0], [0], [1], [0, 0, 1, 1], [], []>} : vector<8x32xf32>, vector<32x128xf32>, vector<8x128xf32> -> vector<8x128xf32>
    %378 = arith.addf %376, %377 : vector<8x128xf32>
    %379 = vector.extract_strided_slice %378 {offsets = [0, 0], sizes = [8, 96], strides = [1, 1]} : vector<8x128xf32> to vector<8x96xf32>
    %380 = arith.negf %379 : vector<8x96xf32>
    %381 = math.exp %380 : vector<8x96xf32>
    %cst_75 = arith.constant 1.000000e+00 : f32
    %382 = vector.broadcast %cst_75 : f32 to vector<8x96xf32>
    %383 = arith.addf %382, %381 : vector<8x96xf32>
    %384 = arith.divf %382, %383 : vector<8x96xf32>
    %385 = vector.extract_strided_slice %378 {offsets = [0, 96], sizes = [8, 32], strides = [1, 1]} : vector<8x128xf32> to vector<8x32xf32>
    %386 = math.tanh %385 : vector<8x32xf32>
    %387 = vector.extract_strided_slice %384 {offsets = [0, 32], sizes = [8, 32], strides = [1, 1]} : vector<8x96xf32> to vector<8x32xf32>
    %388 = arith.mulf %387, %352 : vector<8x32xf32>
    %389 = vector.extract_strided_slice %384 {offsets = [0, 0], sizes = [8, 32], strides = [1, 1]} : vector<8x96xf32> to vector<8x32xf32>
    %390 = arith.mulf %389, %386 : vector<8x32xf32>
    %391 = arith.addf %388, %390 : vector<8x32xf32>
    %392 = vector.extract_strided_slice %384 {offsets = [0, 64], sizes = [8, 32], strides = [1, 1]} : vector<8x96xf32> to vector<8x32xf32>
    %393 = math.tanh %391 : vector<8x32xf32>
    %394 = arith.mulf %392, %393 : vector<8x32xf32>
    %cst_76 = arith.constant dense<0.000000e+00> : vector<8x128xf32>
    %395 = tpu.matmul %394, %4, %cst_76 {dimension_numbers = #tpu.dot_dimension_numbers<[1], [0], [0], [1], [0, 0, 1, 1], [], []>} : vector<8x32xf32>, vector<32x128xf32>, vector<8x128xf32> -> vector<8x128xf32>
    %396 = arith.addf %395, %11 : vector<8x128xf32>
    %cst_77 = arith.constant dense<0.000000e+00> : vector<8x128xf32>
    %397 = tpu.matmul %375, %5, %cst_77 {dimension_numbers = #tpu.dot_dimension_numbers<[1], [0], [0], [1], [0, 0, 1, 1], [], []>} : vector<8x32xf32>, vector<32x128xf32>, vector<8x128xf32> -> vector<8x128xf32>
    %398 = arith.addf %396, %397 : vector<8x128xf32>
    %399 = vector.extract_strided_slice %398 {offsets = [0, 0], sizes = [8, 96], strides = [1, 1]} : vector<8x128xf32> to vector<8x96xf32>
    %400 = arith.negf %399 : vector<8x96xf32>
    %401 = math.exp %400 : vector<8x96xf32>
    %cst_78 = arith.constant 1.000000e+00 : f32
    %402 = vector.broadcast %cst_78 : f32 to vector<8x96xf32>
    %403 = arith.addf %402, %401 : vector<8x96xf32>
    %404 = arith.divf %402, %403 : vector<8x96xf32>
    %405 = vector.extract_strided_slice %398 {offsets = [0, 96], sizes = [8, 32], strides = [1, 1]} : vector<8x128xf32> to vector<8x32xf32>
    %406 = math.tanh %405 : vector<8x32xf32>
    %407 = vector.extract_strided_slice %404 {offsets = [0, 32], sizes = [8, 32], strides = [1, 1]} : vector<8x96xf32> to vector<8x32xf32>
    %408 = arith.mulf %407, %372 : vector<8x32xf32>
    %409 = vector.extract_strided_slice %404 {offsets = [0, 0], sizes = [8, 32], strides = [1, 1]} : vector<8x96xf32> to vector<8x32xf32>
    %410 = arith.mulf %409, %406 : vector<8x32xf32>
    %411 = arith.addf %408, %410 : vector<8x32xf32>
    %412 = vector.extract_strided_slice %404 {offsets = [0, 64], sizes = [8, 32], strides = [1, 1]} : vector<8x96xf32> to vector<8x32xf32>
    %413 = math.tanh %411 : vector<8x32xf32>
    %414 = arith.mulf %412, %413 : vector<8x32xf32>
    %415 = vector.extract_strided_slice %23 {offsets = [16, 0], sizes = [8, 128], strides = [1, 1]} : vector<48x128xf32> to vector<8x128xf32>
    %cst_79 = arith.constant dense<0.000000e+00> : vector<8x128xf32>
    %416 = tpu.matmul %394, %3, %cst_79 {dimension_numbers = #tpu.dot_dimension_numbers<[1], [0], [0], [1], [0, 0, 1, 1], [], []>} : vector<8x32xf32>, vector<32x128xf32>, vector<8x128xf32> -> vector<8x128xf32>
    %417 = arith.addf %415, %416 : vector<8x128xf32>
    %418 = vector.extract_strided_slice %417 {offsets = [0, 0], sizes = [8, 96], strides = [1, 1]} : vector<8x128xf32> to vector<8x96xf32>
    %419 = arith.negf %418 : vector<8x96xf32>
    %420 = math.exp %419 : vector<8x96xf32>
    %cst_80 = arith.constant 1.000000e+00 : f32
    %421 = vector.broadcast %cst_80 : f32 to vector<8x96xf32>
    %422 = arith.addf %421, %420 : vector<8x96xf32>
    %423 = arith.divf %421, %422 : vector<8x96xf32>
    %424 = vector.extract_strided_slice %417 {offsets = [0, 96], sizes = [8, 32], strides = [1, 1]} : vector<8x128xf32> to vector<8x32xf32>
    %425 = math.tanh %424 : vector<8x32xf32>
    %426 = vector.extract_strided_slice %423 {offsets = [0, 32], sizes = [8, 32], strides = [1, 1]} : vector<8x96xf32> to vector<8x32xf32>
    %427 = arith.mulf %426, %391 : vector<8x32xf32>
    %428 = vector.extract_strided_slice %423 {offsets = [0, 0], sizes = [8, 32], strides = [1, 1]} : vector<8x96xf32> to vector<8x32xf32>
    %429 = arith.mulf %428, %425 : vector<8x32xf32>
    %430 = arith.addf %427, %429 : vector<8x32xf32>
    %431 = vector.extract_strided_slice %423 {offsets = [0, 64], sizes = [8, 32], strides = [1, 1]} : vector<8x96xf32> to vector<8x32xf32>
    %432 = math.tanh %430 : vector<8x32xf32>
    %433 = arith.mulf %431, %432 : vector<8x32xf32>
    %cst_81 = arith.constant dense<0.000000e+00> : vector<8x128xf32>
    %434 = tpu.matmul %433, %4, %cst_81 {dimension_numbers = #tpu.dot_dimension_numbers<[1], [0], [0], [1], [0, 0, 1, 1], [], []>} : vector<8x32xf32>, vector<32x128xf32>, vector<8x128xf32> -> vector<8x128xf32>
    %435 = arith.addf %434, %11 : vector<8x128xf32>
    %cst_82 = arith.constant dense<0.000000e+00> : vector<8x128xf32>
    %436 = tpu.matmul %414, %5, %cst_82 {dimension_numbers = #tpu.dot_dimension_numbers<[1], [0], [0], [1], [0, 0, 1, 1], [], []>} : vector<8x32xf32>, vector<32x128xf32>, vector<8x128xf32> -> vector<8x128xf32>
    %437 = arith.addf %435, %436 : vector<8x128xf32>
    %438 = vector.extract_strided_slice %437 {offsets = [0, 0], sizes = [8, 96], strides = [1, 1]} : vector<8x128xf32> to vector<8x96xf32>
    %439 = arith.negf %438 : vector<8x96xf32>
    %440 = math.exp %439 : vector<8x96xf32>
    %cst_83 = arith.constant 1.000000e+00 : f32
    %441 = vector.broadcast %cst_83 : f32 to vector<8x96xf32>
    %442 = arith.addf %441, %440 : vector<8x96xf32>
    %443 = arith.divf %441, %442 : vector<8x96xf32>
    %444 = vector.extract_strided_slice %437 {offsets = [0, 96], sizes = [8, 32], strides = [1, 1]} : vector<8x128xf32> to vector<8x32xf32>
    %445 = math.tanh %444 : vector<8x32xf32>
    %446 = vector.extract_strided_slice %443 {offsets = [0, 32], sizes = [8, 32], strides = [1, 1]} : vector<8x96xf32> to vector<8x32xf32>
    %447 = arith.mulf %446, %411 : vector<8x32xf32>
    %448 = vector.extract_strided_slice %443 {offsets = [0, 0], sizes = [8, 32], strides = [1, 1]} : vector<8x96xf32> to vector<8x32xf32>
    %449 = arith.mulf %448, %445 : vector<8x32xf32>
    %450 = arith.addf %447, %449 : vector<8x32xf32>
    %451 = vector.extract_strided_slice %443 {offsets = [0, 64], sizes = [8, 32], strides = [1, 1]} : vector<8x96xf32> to vector<8x32xf32>
    %452 = math.tanh %450 : vector<8x32xf32>
    %453 = arith.mulf %451, %452 : vector<8x32xf32>
    %454 = vector.extract_strided_slice %23 {offsets = [24, 0], sizes = [8, 128], strides = [1, 1]} : vector<48x128xf32> to vector<8x128xf32>
    %cst_84 = arith.constant dense<0.000000e+00> : vector<8x128xf32>
    %455 = tpu.matmul %433, %3, %cst_84 {dimension_numbers = #tpu.dot_dimension_numbers<[1], [0], [0], [1], [0, 0, 1, 1], [], []>} : vector<8x32xf32>, vector<32x128xf32>, vector<8x128xf32> -> vector<8x128xf32>
    %456 = arith.addf %454, %455 : vector<8x128xf32>
    %457 = vector.extract_strided_slice %456 {offsets = [0, 0], sizes = [8, 96], strides = [1, 1]} : vector<8x128xf32> to vector<8x96xf32>
    %458 = arith.negf %457 : vector<8x96xf32>
    %459 = math.exp %458 : vector<8x96xf32>
    %cst_85 = arith.constant 1.000000e+00 : f32
    %460 = vector.broadcast %cst_85 : f32 to vector<8x96xf32>
    %461 = arith.addf %460, %459 : vector<8x96xf32>
    %462 = arith.divf %460, %461 : vector<8x96xf32>
    %463 = vector.extract_strided_slice %456 {offsets = [0, 96], sizes = [8, 32], strides = [1, 1]} : vector<8x128xf32> to vector<8x32xf32>
    %464 = math.tanh %463 : vector<8x32xf32>
    %465 = vector.extract_strided_slice %462 {offsets = [0, 32], sizes = [8, 32], strides = [1, 1]} : vector<8x96xf32> to vector<8x32xf32>
    %466 = arith.mulf %465, %430 : vector<8x32xf32>
    %467 = vector.extract_strided_slice %462 {offsets = [0, 0], sizes = [8, 32], strides = [1, 1]} : vector<8x96xf32> to vector<8x32xf32>
    %468 = arith.mulf %467, %464 : vector<8x32xf32>
    %469 = arith.addf %466, %468 : vector<8x32xf32>
    %470 = vector.extract_strided_slice %462 {offsets = [0, 64], sizes = [8, 32], strides = [1, 1]} : vector<8x96xf32> to vector<8x32xf32>
    %471 = math.tanh %469 : vector<8x32xf32>
    %472 = arith.mulf %470, %471 : vector<8x32xf32>
    %cst_86 = arith.constant dense<0.000000e+00> : vector<8x128xf32>
    %473 = tpu.matmul %472, %4, %cst_86 {dimension_numbers = #tpu.dot_dimension_numbers<[1], [0], [0], [1], [0, 0, 1, 1], [], []>} : vector<8x32xf32>, vector<32x128xf32>, vector<8x128xf32> -> vector<8x128xf32>
    %474 = arith.addf %473, %11 : vector<8x128xf32>
    %cst_87 = arith.constant dense<0.000000e+00> : vector<8x128xf32>
    %475 = tpu.matmul %453, %5, %cst_87 {dimension_numbers = #tpu.dot_dimension_numbers<[1], [0], [0], [1], [0, 0, 1, 1], [], []>} : vector<8x32xf32>, vector<32x128xf32>, vector<8x128xf32> -> vector<8x128xf32>
    %476 = arith.addf %474, %475 : vector<8x128xf32>
    %477 = vector.extract_strided_slice %476 {offsets = [0, 0], sizes = [8, 96], strides = [1, 1]} : vector<8x128xf32> to vector<8x96xf32>
    %478 = arith.negf %477 : vector<8x96xf32>
    %479 = math.exp %478 : vector<8x96xf32>
    %cst_88 = arith.constant 1.000000e+00 : f32
    %480 = vector.broadcast %cst_88 : f32 to vector<8x96xf32>
    %481 = arith.addf %480, %479 : vector<8x96xf32>
    %482 = arith.divf %480, %481 : vector<8x96xf32>
    %483 = vector.extract_strided_slice %476 {offsets = [0, 96], sizes = [8, 32], strides = [1, 1]} : vector<8x128xf32> to vector<8x32xf32>
    %484 = math.tanh %483 : vector<8x32xf32>
    %485 = vector.extract_strided_slice %482 {offsets = [0, 32], sizes = [8, 32], strides = [1, 1]} : vector<8x96xf32> to vector<8x32xf32>
    %486 = arith.mulf %485, %450 : vector<8x32xf32>
    %487 = vector.extract_strided_slice %482 {offsets = [0, 0], sizes = [8, 32], strides = [1, 1]} : vector<8x96xf32> to vector<8x32xf32>
    %488 = arith.mulf %487, %484 : vector<8x32xf32>
    %489 = arith.addf %486, %488 : vector<8x32xf32>
    %490 = vector.extract_strided_slice %482 {offsets = [0, 64], sizes = [8, 32], strides = [1, 1]} : vector<8x96xf32> to vector<8x32xf32>
    %491 = math.tanh %489 : vector<8x32xf32>
    %492 = arith.mulf %490, %491 : vector<8x32xf32>
    %493 = vector.extract_strided_slice %23 {offsets = [32, 0], sizes = [8, 128], strides = [1, 1]} : vector<48x128xf32> to vector<8x128xf32>
    %cst_89 = arith.constant dense<0.000000e+00> : vector<8x128xf32>
    %494 = tpu.matmul %472, %3, %cst_89 {dimension_numbers = #tpu.dot_dimension_numbers<[1], [0], [0], [1], [0, 0, 1, 1], [], []>} : vector<8x32xf32>, vector<32x128xf32>, vector<8x128xf32> -> vector<8x128xf32>
    %495 = arith.addf %493, %494 : vector<8x128xf32>
    %496 = vector.extract_strided_slice %495 {offsets = [0, 0], sizes = [8, 96], strides = [1, 1]} : vector<8x128xf32> to vector<8x96xf32>
    %497 = arith.negf %496 : vector<8x96xf32>
    %498 = math.exp %497 : vector<8x96xf32>
    %cst_90 = arith.constant 1.000000e+00 : f32
    %499 = vector.broadcast %cst_90 : f32 to vector<8x96xf32>
    %500 = arith.addf %499, %498 : vector<8x96xf32>
    %501 = arith.divf %499, %500 : vector<8x96xf32>
    %502 = vector.extract_strided_slice %495 {offsets = [0, 96], sizes = [8, 32], strides = [1, 1]} : vector<8x128xf32> to vector<8x32xf32>
    %503 = math.tanh %502 : vector<8x32xf32>
    %504 = vector.extract_strided_slice %501 {offsets = [0, 32], sizes = [8, 32], strides = [1, 1]} : vector<8x96xf32> to vector<8x32xf32>
    %505 = arith.mulf %504, %469 : vector<8x32xf32>
    %506 = vector.extract_strided_slice %501 {offsets = [0, 0], sizes = [8, 32], strides = [1, 1]} : vector<8x96xf32> to vector<8x32xf32>
    %507 = arith.mulf %506, %503 : vector<8x32xf32>
    %508 = arith.addf %505, %507 : vector<8x32xf32>
    %509 = vector.extract_strided_slice %501 {offsets = [0, 64], sizes = [8, 32], strides = [1, 1]} : vector<8x96xf32> to vector<8x32xf32>
    %510 = math.tanh %508 : vector<8x32xf32>
    %511 = arith.mulf %509, %510 : vector<8x32xf32>
    %cst_91 = arith.constant dense<0.000000e+00> : vector<8x128xf32>
    %512 = tpu.matmul %511, %4, %cst_91 {dimension_numbers = #tpu.dot_dimension_numbers<[1], [0], [0], [1], [0, 0, 1, 1], [], []>} : vector<8x32xf32>, vector<32x128xf32>, vector<8x128xf32> -> vector<8x128xf32>
    %513 = arith.addf %512, %11 : vector<8x128xf32>
    %cst_92 = arith.constant dense<0.000000e+00> : vector<8x128xf32>
    %514 = tpu.matmul %492, %5, %cst_92 {dimension_numbers = #tpu.dot_dimension_numbers<[1], [0], [0], [1], [0, 0, 1, 1], [], []>} : vector<8x32xf32>, vector<32x128xf32>, vector<8x128xf32> -> vector<8x128xf32>
    %515 = arith.addf %513, %514 : vector<8x128xf32>
    %516 = vector.extract_strided_slice %515 {offsets = [0, 0], sizes = [8, 96], strides = [1, 1]} : vector<8x128xf32> to vector<8x96xf32>
    %517 = arith.negf %516 : vector<8x96xf32>
    %518 = math.exp %517 : vector<8x96xf32>
    %cst_93 = arith.constant 1.000000e+00 : f32
    %519 = vector.broadcast %cst_93 : f32 to vector<8x96xf32>
    %520 = arith.addf %519, %518 : vector<8x96xf32>
    %521 = arith.divf %519, %520 : vector<8x96xf32>
    %522 = vector.extract_strided_slice %515 {offsets = [0, 96], sizes = [8, 32], strides = [1, 1]} : vector<8x128xf32> to vector<8x32xf32>
    %523 = math.tanh %522 : vector<8x32xf32>
    %524 = vector.extract_strided_slice %521 {offsets = [0, 32], sizes = [8, 32], strides = [1, 1]} : vector<8x96xf32> to vector<8x32xf32>
    %525 = arith.mulf %524, %489 : vector<8x32xf32>
    %526 = vector.extract_strided_slice %521 {offsets = [0, 0], sizes = [8, 32], strides = [1, 1]} : vector<8x96xf32> to vector<8x32xf32>
    %527 = arith.mulf %526, %523 : vector<8x32xf32>
    %528 = arith.addf %525, %527 : vector<8x32xf32>
    %529 = vector.extract_strided_slice %521 {offsets = [0, 64], sizes = [8, 32], strides = [1, 1]} : vector<8x96xf32> to vector<8x32xf32>
    %530 = math.tanh %528 : vector<8x32xf32>
    %531 = arith.mulf %529, %530 : vector<8x32xf32>
    %532 = vector.extract_strided_slice %23 {offsets = [40, 0], sizes = [8, 128], strides = [1, 1]} : vector<48x128xf32> to vector<8x128xf32>
    %cst_94 = arith.constant dense<0.000000e+00> : vector<8x128xf32>
    %533 = tpu.matmul %511, %3, %cst_94 {dimension_numbers = #tpu.dot_dimension_numbers<[1], [0], [0], [1], [0, 0, 1, 1], [], []>} : vector<8x32xf32>, vector<32x128xf32>, vector<8x128xf32> -> vector<8x128xf32>
    %534 = arith.addf %532, %533 : vector<8x128xf32>
    %535 = vector.extract_strided_slice %534 {offsets = [0, 0], sizes = [8, 96], strides = [1, 1]} : vector<8x128xf32> to vector<8x96xf32>
    %536 = arith.negf %535 : vector<8x96xf32>
    %537 = math.exp %536 : vector<8x96xf32>
    %cst_95 = arith.constant 1.000000e+00 : f32
    %538 = vector.broadcast %cst_95 : f32 to vector<8x96xf32>
    %539 = arith.addf %538, %537 : vector<8x96xf32>
    %540 = arith.divf %538, %539 : vector<8x96xf32>
    %541 = vector.extract_strided_slice %534 {offsets = [0, 96], sizes = [8, 32], strides = [1, 1]} : vector<8x128xf32> to vector<8x32xf32>
    %542 = math.tanh %541 : vector<8x32xf32>
    %543 = vector.extract_strided_slice %540 {offsets = [0, 32], sizes = [8, 32], strides = [1, 1]} : vector<8x96xf32> to vector<8x32xf32>
    %544 = arith.mulf %543, %508 : vector<8x32xf32>
    %545 = vector.extract_strided_slice %540 {offsets = [0, 0], sizes = [8, 32], strides = [1, 1]} : vector<8x96xf32> to vector<8x32xf32>
    %546 = arith.mulf %545, %542 : vector<8x32xf32>
    %547 = arith.addf %544, %546 : vector<8x32xf32>
    %548 = vector.extract_strided_slice %540 {offsets = [0, 64], sizes = [8, 32], strides = [1, 1]} : vector<8x96xf32> to vector<8x32xf32>
    %549 = math.tanh %547 : vector<8x32xf32>
    %550 = arith.mulf %548, %549 : vector<8x32xf32>
    %cst_96 = arith.constant dense<0.000000e+00> : vector<8x128xf32>
    %551 = tpu.matmul %550, %4, %cst_96 {dimension_numbers = #tpu.dot_dimension_numbers<[1], [0], [0], [1], [0, 0, 1, 1], [], []>} : vector<8x32xf32>, vector<32x128xf32>, vector<8x128xf32> -> vector<8x128xf32>
    %552 = arith.addf %551, %11 : vector<8x128xf32>
    %cst_97 = arith.constant dense<0.000000e+00> : vector<8x128xf32>
    %553 = tpu.matmul %531, %5, %cst_97 {dimension_numbers = #tpu.dot_dimension_numbers<[1], [0], [0], [1], [0, 0, 1, 1], [], []>} : vector<8x32xf32>, vector<32x128xf32>, vector<8x128xf32> -> vector<8x128xf32>
    %554 = arith.addf %552, %553 : vector<8x128xf32>
    %555 = vector.extract_strided_slice %554 {offsets = [0, 0], sizes = [8, 96], strides = [1, 1]} : vector<8x128xf32> to vector<8x96xf32>
    %556 = arith.negf %555 : vector<8x96xf32>
    %557 = math.exp %556 : vector<8x96xf32>
    %cst_98 = arith.constant 1.000000e+00 : f32
    %558 = vector.broadcast %cst_98 : f32 to vector<8x96xf32>
    %559 = arith.addf %558, %557 : vector<8x96xf32>
    %560 = arith.divf %558, %559 : vector<8x96xf32>
    %561 = vector.extract_strided_slice %554 {offsets = [0, 96], sizes = [8, 32], strides = [1, 1]} : vector<8x128xf32> to vector<8x32xf32>
    %562 = math.tanh %561 : vector<8x32xf32>
    %563 = vector.extract_strided_slice %560 {offsets = [0, 32], sizes = [8, 32], strides = [1, 1]} : vector<8x96xf32> to vector<8x32xf32>
    %564 = arith.mulf %563, %528 : vector<8x32xf32>
    %565 = vector.extract_strided_slice %560 {offsets = [0, 0], sizes = [8, 32], strides = [1, 1]} : vector<8x96xf32> to vector<8x32xf32>
    %566 = arith.mulf %565, %562 : vector<8x32xf32>
    %567 = arith.addf %564, %566 : vector<8x32xf32>
    %568 = vector.extract_strided_slice %560 {offsets = [0, 64], sizes = [8, 32], strides = [1, 1]} : vector<8x96xf32> to vector<8x32xf32>
    %569 = math.tanh %567 : vector<8x32xf32>
    %570 = arith.mulf %568, %569 : vector<8x32xf32>
    %571 = tpu.concatenate %375, %414, %453, %492, %531, %570 in 0 : vector<8x32xf32>, vector<8x32xf32>, vector<8x32xf32>, vector<8x32xf32>, vector<8x32xf32>, vector<8x32xf32> -> vector<48x32xf32>
    %c0_99 = arith.constant 0 : index
    %c0_100 = arith.constant 0 : index
    %572 = vector.load %arg14[%c0_99, %c0_100] : memref<32x16xf32, #tpu.memory_space<vmem>>, vector<32x16xf32>
    %cst_101 = arith.constant dense<0.000000e+00> : vector<48x16xf32>
    %573 = tpu.matmul %571, %572, %cst_101 {dimension_numbers = #tpu.dot_dimension_numbers<[1], [0], [0], [1], [0, 0, 1, 1], [], []>} : vector<48x32xf32>, vector<32x16xf32>, vector<48x16xf32> -> vector<48x16xf32>
    %c0_102 = arith.constant 0 : index
    %c0_103 = arith.constant 0 : index
    %574 = vector.load %arg15[%c0_102, %c0_103] : memref<1x16xf32, #tpu.memory_space<vmem>>, vector<1x16xf32>
    %575 = vector.broadcast %574 : vector<1x16xf32> to vector<48x16xf32>
    %576 = arith.addf %573, %575 : vector<48x16xf32>
    %cst_104 = arith.constant 0.000000e+00 : f32
    %577 = vector.broadcast %cst_104 : f32 to vector<48x16xf32>
    %578 = arith.maximumf %576, %577 : vector<48x16xf32>
    %c0_105 = arith.constant 0 : index
    %c0_106 = arith.constant 0 : index
    %579 = vector.load %arg16[%c0_105, %c0_106] : memref<16x8xf32, #tpu.memory_space<vmem>>, vector<16x8xf32>
    %cst_107 = arith.constant dense<0.000000e+00> : vector<48x8xf32>
    %580 = tpu.matmul %578, %579, %cst_107 {dimension_numbers = #tpu.dot_dimension_numbers<[1], [0], [0], [1], [0, 0, 1, 1], [], []>} : vector<48x16xf32>, vector<16x8xf32>, vector<48x8xf32> -> vector<48x8xf32>
    %c0_108 = arith.constant 0 : index
    %c0_109 = arith.constant 0 : index
    %581 = vector.load %arg17[%c0_108, %c0_109] : memref<1x8xf32, #tpu.memory_space<vmem>>, vector<1x8xf32>
    %582 = vector.broadcast %581 : vector<1x8xf32> to vector<48x8xf32>
    %583 = arith.addf %580, %582 : vector<48x8xf32>
    %cst_110 = arith.constant 0.000000e+00 : f32
    %584 = vector.broadcast %cst_110 : f32 to vector<48x8xf32>
    %585 = arith.maximumf %583, %584 : vector<48x8xf32>
    %c0_111 = arith.constant 0 : index
    %c0_112 = arith.constant 0 : index
    %586 = vector.load %arg18[%c0_111, %c0_112] : memref<8x2xf32, #tpu.memory_space<vmem>>, vector<8x2xf32>
    %cst_113 = arith.constant dense<0.000000e+00> : vector<48x2xf32>
    %587 = tpu.matmul %585, %586, %cst_113 {dimension_numbers = #tpu.dot_dimension_numbers<[1], [0], [0], [1], [0, 0, 1, 1], [], []>} : vector<48x8xf32>, vector<8x2xf32>, vector<48x2xf32> -> vector<48x2xf32>
    %c0_114 = arith.constant 0 : index
    %c0_115 = arith.constant 0 : index
    %588 = vector.load %arg19[%c0_114, %c0_115] : memref<1x2xf32, #tpu.memory_space<vmem>>, vector<1x2xf32>
    %589 = vector.broadcast %588 : vector<1x2xf32> to vector<48x2xf32>
    %590 = arith.addf %587, %589 : vector<48x2xf32>
    %c0_116 = arith.constant 0 : index
    %c0_117 = arith.constant 0 : index
    %591 = vector.load %arg20[%c0_116, %c0_117] : memref<48x2xf32, #tpu.memory_space<vmem>>, vector<48x2xf32>
    tpu.vector_store %arg20[%c0_116, %c0_117], %590 {strides = array<i32>} : memref<48x2xf32, #tpu.memory_space<vmem>>, vector<48x2xf32>,
    return
  }
}

</mosaic_0001>

<llo_original>
// kernel: encdec_power_forward.1
$region0: #{encdec_power_forward.1}
  #allocation0 [shape = 'u32[]', space=smem, size = 0x4, offset = 0x4, fixed_abs, tag = 'smem constant byte address 0x4 - core index']
  #allocation1 [shape = 'u32[72,128]{1,0:T(1,128)}', space=vmem, size = 0x9000, scoped, tag = 'internal scratch']
  %s0 = inlined_call_operand.vmem [shape: f32[64,7], index: 0, kind: input, shape index: {}]
  %s1 = inlined_call_operand.vmem [shape: f32[48,7], index: 1, kind: input, shape index: {}]
  %s2 = inlined_call_operand.vmem [shape: f32[7,128], index: 2, kind: input, shape index: {}]
  %s3 = inlined_call_operand.vmem [shape: f32[32,128], index: 3, kind: input, shape index: {}]
  %s4 = inlined_call_operand.vmem [shape: f32[1,128], index: 4, kind: input, shape index: {}]
  %s5 = inlined_call_operand.vmem [shape: f32[32,128], index: 5, kind: input, shape index: {}]
  %s6 = inlined_call_operand.vmem [shape: f32[32,128], index: 6, kind: input, shape index: {}]
  %s7 = inlined_call_operand.vmem [shape: f32[1,128], index: 7, kind: input, shape index: {}]
  %s8 = inlined_call_operand.vmem [shape: f32[7,128], index: 8, kind: input, shape index: {}]
  %s9 = inlined_call_operand.vmem [shape: f32[32,128], index: 9, kind: input, shape index: {}]
  %s10 = inlined_call_operand.vmem [shape: f32[1,128], index: 10, kind: input, shape index: {}]
  %s11 = inlined_call_operand.vmem [shape: f32[32,128], index: 11, kind: input, shape index: {}]
  %s12 = inlined_call_operand.vmem [shape: f32[32,128], index: 12, kind: input, shape index: {}]
  %s13 = inlined_call_operand.vmem [shape: f32[1,128], index: 13, kind: input, shape index: {}]
  %s14 = inlined_call_operand.vmem [shape: f32[32,16], index: 14, kind: input, shape index: {}]
  %s15 = inlined_call_operand.vmem [shape: f32[1,16], index: 15, kind: input, shape index: {}]
  %s16 = inlined_call_operand.vmem [shape: f32[16,8], index: 16, kind: input, shape index: {}]
  %s17 = inlined_call_operand.vmem [shape: f32[1,8], index: 17, kind: input, shape index: {}]
  %s18 = inlined_call_operand.vmem [shape: f32[8,2], index: 18, kind: input, shape index: {}]
  %s19 = inlined_call_operand.vmem [shape: f32[1,2], index: 19, kind: input, shape index: {}]
  %s20 = inlined_call_operand.vmem [shape: f32[48,2], index: 20, kind: output, shape index: {}]
  %s21 = sld [smem:[#allocation0]]
  $region90: #{encdec_power_forward.1} parent=0
    _
  %s23 = ssub.s32 1, %s21
  %s24 = scalar_select 0, %s23, %s21
  // Predicated region
  $region2: #{encdec_power_forward.1} parent=0 // pred_check
    _
  $region3: #{encdec_power_forward.1} parent=0 // pred_check_branch
    %26 = sbr.rel (0) target = $region5
  $region4: #{encdec_power_forward.1} parent=0 // pred_region
    _
  $region5: #{encdec_power_forward.1} parent=0 // pred_fallthru
    _
  // Predicated region
  $region6: #{encdec_power_forward.1} parent=0 // pred_check
    _
  $region7: #{encdec_power_forward.1} parent=0 // pred_check_branch
    %28 = sbr.rel (0) target = $region9
  $region8: #{encdec_power_forward.1} parent=0 // pred_region
    _
  $region9: #{encdec_power_forward.1} parent=0 // pred_fallthru
    _
  // Predicated region
  $region10: #{encdec_power_forward.1} parent=0 // pred_check
    _
  $region11: #{encdec_power_forward.1} parent=0 // pred_check_branch
    %30 = sbr.rel (0) target = $region13
  $region12: #{encdec_power_forward.1} parent=0 // pred_region
    _
  $region13: #{encdec_power_forward.1} parent=0 // pred_fallthru
    _
  // Predicated region
  $region14: #{encdec_power_forward.1} parent=0 // pred_check
    _
  $region15: #{encdec_power_forward.1} parent=0 // pred_check_branch
    %32 = sbr.rel (0) target = $region17
  $region16: #{encdec_power_forward.1} parent=0 // pred_region
    _
  $region17: #{encdec_power_forward.1} parent=0 // pred_fallthru
    _
  // Predicated region
  $region18: #{encdec_power_forward.1} parent=0 // pred_check
    _
  $region19: #{encdec_power_forward.1} parent=0 // pred_check_branch
    %34 = sbr.rel (0) target = $region21
  $region20: #{encdec_power_forward.1} parent=0 // pred_region
    _
  $region21: #{encdec_power_forward.1} parent=0 // pred_fallthru
    _
  // Predicated region
  $region22: #{encdec_power_forward.1} parent=0 // pred_check
    _
  $region23: #{encdec_power_forward.1} parent=0 // pred_check_branch
    %36 = sbr.rel (0) target = $region25
  $region24: #{encdec_power_forward.1} parent=0 // pred_region
    _
  $region25: #{encdec_power_forward.1} parent=0 // pred_fallthru
    _
  // Predicated region
  $region26: #{encdec_power_forward.1} parent=0 // pred_check
    _
  $region27: #{encdec_power_forward.1} parent=0 // pred_check_branch
    %38 = sbr.rel (0) target = $region29
  $region28: #{encdec_power_forward.1} parent=0 // pred_region
    _
  $region29: #{encdec_power_forward.1} parent=0 // pred_fallthru
    _
  // Predicated region
  $region30: #{encdec_power_forward.1} parent=0 // pred_check
    _
  $region31: #{encdec_power_forward.1} parent=0 // pred_check_branch
    %40 = sbr.rel (0) target = $region33
  $region32: #{encdec_power_forward.1} parent=0 // pred_region
    _
  $region33: #{encdec_power_forward.1} parent=0 // pred_fallthru
    _
  // Predicated region
  $region34: #{encdec_power_forward.1} parent=0 // pred_check
    _
  $region35: #{encdec_power_forward.1} parent=0 // pred_check_branch
    %42 = sbr.rel (0) target = $region37
  $region36: #{encdec_power_forward.1} parent=0 // pred_region
    _
  $region37: #{encdec_power_forward.1} parent=0 // pred_fallthru
    _
  // Predicated region
  $region38: #{encdec_power_forward.1} parent=0 // pred_check
    _
  $region39: #{encdec_power_forward.1} parent=0 // pred_check_branch
    %44 = sbr.rel (0) target = $region41
  $region40: #{encdec_power_forward.1} parent=0 // pred_region
    _
  $region41: #{encdec_power_forward.1} parent=0 // pred_fallthru
    _
  // Predicated region
  $region42: #{encdec_power_forward.1} parent=0 // pred_check
    _
  $region43: #{encdec_power_forward.1} parent=0 // pred_check_branch
    %46 = sbr.rel (0) target = $region45
  $region44: #{encdec_power_forward.1} parent=0 // pred_region
    _
  $region45: #{encdec_power_forward.1} parent=0 // pred_fallthru
    _
  // Predicated region
  $region46: #{encdec_power_forward.1} parent=0 // pred_check
    _
  $region47: #{encdec_power_forward.1} parent=0 // pred_check_branch
    %48 = sbr.rel (0) target = $region49
  $region48: #{encdec_power_forward.1} parent=0 // pred_region
    _
  $region49: #{encdec_power_forward.1} parent=0 // pred_fallthru
    _
  // Predicated region
  $region50: #{encdec_power_forward.1} parent=0 // pred_check
    _
  $region51: #{encdec_power_forward.1} parent=0 // pred_check_branch
    %50 = sbr.rel (0) target = $region53
  $region52: #{encdec_power_forward.1} parent=0 // pred_region
    _
  $region53: #{encdec_power_forward.1} parent=0 // pred_fallthru
    _
  // Predicated region
  $region54: #{encdec_power_forward.1} parent=0 // pred_check
    _
  $region55: #{encdec_power_forward.1} parent=0 // pred_check_branch
    %52 = sbr.rel (0) target = $region57
  $region56: #{encdec_power_forward.1} parent=0 // pred_region
    _
  $region57: #{encdec_power_forward.1} parent=0 // pred_fallthru
    _
  // Predicated region
  $region58: #{encdec_power_forward.1} parent=0 // pred_check
    _
  $region59: #{encdec_power_forward.1} parent=0 // pred_check_branch
    %54 = sbr.rel (0) target = $region61
  $region60: #{encdec_power_forward.1} parent=0 // pred_region
    _
  $region61: #{encdec_power_forward.1} parent=0 // pred_fallthru
    _
  // Predicated region
  $region62: #{encdec_power_forward.1} parent=0 // pred_check
    _
  $region63: #{encdec_power_forward.1} parent=0 // pred_check_branch
    %56 = sbr.rel (0) target = $region65
  $region64: #{encdec_power_forward.1} parent=0 // pred_region
    _
  $region65: #{encdec_power_forward.1} parent=0 // pred_fallthru
    _
  // Predicated region
  $region66: #{encdec_power_forward.1} parent=0 // pred_check
    _
  $region67: #{encdec_power_forward.1} parent=0 // pred_check_branch
    %58 = sbr.rel (0) target = $region69
  $region68: #{encdec_power_forward.1} parent=0 // pred_region
    _
  $region69: #{encdec_power_forward.1} parent=0 // pred_fallthru
    _
  // Predicated region
  $region70: #{encdec_power_forward.1} parent=0 // pred_check
    _
  $region71: #{encdec_power_forward.1} parent=0 // pred_check_branch
    %60 = sbr.rel (0) target = $region73
  $region72: #{encdec_power_forward.1} parent=0 // pred_region
    _
  $region73: #{encdec_power_forward.1} parent=0 // pred_fallthru
    _
  // Predicated region
  $region74: #{encdec_power_forward.1} parent=0 // pred_check
    _
  $region75: #{encdec_power_forward.1} parent=0 // pred_check_branch
    %62 = sbr.rel (0) target = $region77
  $region76: #{encdec_power_forward.1} parent=0 // pred_region
    _
  $region77: #{encdec_power_forward.1} parent=0 // pred_fallthru
    _
  // Predicated region
  $region78: #{encdec_power_forward.1} parent=0 // pred_check
    _
  $region79: #{encdec_power_forward.1} parent=0 // pred_check_branch
    %64 = sbr.rel (0) target = $region81
  $region80: #{encdec_power_forward.1} parent=0 // pred_region
    _
  $region81: #{encdec_power_forward.1} parent=0 // pred_fallthru
    _
  %v65 = vld [vmem:[%s3] sm:$0xff]
  %v66 = vld [vmem:[%s3 + $0x8] sm:$0xff]
  %v67 = vld [vmem:[%s3 + $0x10] sm:$0xff]
  %v68 = vld [vmem:[%s3 + $0x18] sm:$0xff]
  %v69 = vld [vmem:[%s5] sm:$0xff]
  %v70 = vld [vmem:[%s5 + $0x8] sm:$0xff]
  %v71 = vld [vmem:[%s5 + $0x10] sm:$0xff]
  %v72 = vld [vmem:[%s5 + $0x18] sm:$0xff]
  %v73 = vld [vmem:[%s6] sm:$0xff]
  %v74 = vld [vmem:[%s6 + $0x8] sm:$0xff]
  %v75 = vld [vmem:[%s6 + $0x10] sm:$0xff]
  %v76 = vld [vmem:[%s6 + $0x18] sm:$0xff]
  %v77 = vld [vmem:[%s9] sm:$0xff]
  %v78 = vld [vmem:[%s9 + $0x8] sm:$0xff]
  %v79 = vld [vmem:[%s9 + $0x10] sm:$0xff]
  %v80 = vld [vmem:[%s9 + $0x18] sm:$0xff]
  %v81 = vld [vmem:[%s11] sm:$0xff]
  %v82 = vld [vmem:[%s11 + $0x8] sm:$0xff]
  %v83 = vld [vmem:[%s11 + $0x10] sm:$0xff]
  %v84 = vld [vmem:[%s11 + $0x18] sm:$0xff]
  %v85 = vld [vmem:[%s12] sm:$0xff]
  %v86 = vld [vmem:[%s12 + $0x8] sm:$0xff]
  %v87 = vld [vmem:[%s12 + $0x10] sm:$0xff]
  %v88 = vld [vmem:[%s12 + $0x18] sm:$0xff]
  %v89 = vld [vmem:[%s7] sm:$0x1]
  %v91 = vperm.slane %v89, 0
  %v93 = vld [vmem:[%s13] sm:$0x1]
  %v95 = vperm.slane %v93, 0
  %v97 = vld [vmem:[%s0] sm:$0xff]
  %v98 = vld [vmem:[%s0 + $0x8] sm:$0xff]
  %v99 = vld [vmem:[%s0 + $0x10] sm:$0xff]
  %v100 = vld [vmem:[%s0 + $0x18] sm:$0xff]
  %v101 = vld [vmem:[%s0 + $0x20] sm:$0xff]
  %v102 = vld [vmem:[%s0 + $0x28] sm:$0xff]
  %v103 = vld [vmem:[%s0 + $0x30] sm:$0xff]
  %v104 = vld [vmem:[%s0 + $0x38] sm:$0xff]
  %v105 = vld [vmem:[%s2] sm:$0x7f]
  %v106 = vld [vmem:[%s4] sm:$0x1]
  %v108 = vperm.slane %v106, 0
  %vm110 = vcmask 56320
  %v112 = vsel %vm110, %v97, 0
  %v115 = vsel %vm110, %v98, 0
  %v118 = vsel %vm110, %v99, 0
  %v121 = vsel %vm110, %v100, 0
  %v124 = vsel %vm110, %v101, 0
  %v127 = vsel %vm110, %v102, 0
  %v130 = vsel %vm110, %v103, 0
  %v133 = vsel %vm110, %v104, 0
  %vm135 = vcmask 1046528
  %v137 = vsel %vm135, %v105, 0
  %139 = vmatpush.msra.mxu0 0.0
  %140 = vmatpush.msra.mxu0 0.0
  %141 = vmatpush.msra.mxu0 0.0
  %142 = vmatpush.msra.mxu0 0.0
  %143 = vmatpush.msra.mxu0 0.0
  %144 = vmatpush.msra.mxu0 0.0
  %145 = vmatpush.msra.mxu0 0.0
  %146 = vmatpush.msra.mxu0 0.0
  %147 = vmatpush.msra.mxu0 0.0
  %148 = vmatpush.msra.mxu0 0.0
  %149 = vmatpush.msra.mxu0 0.0
  %150 = vmatpush.msra.mxu0 0.0
  %151 = vmatpush.msra.mxu0 0.0
  %152 = vmatpush.msra.mxu0 0.0
  %153 = vmatpush.msra.mxu0 0.0
  %154 = vmatpush.msra.mxu0 %v137
  %155 = vmatmul.f32.gmra.mxu0 %v112
  %v156 = vpop.f32.mrf.mxu0
  %v157 = vadd.f32 %v108, %v156
  %158 = vmatmul.f32.gmra.mxu0 %v115
  %v159 = vpop.f32.mrf.mxu0
  %v160 = vadd.f32 %v108, %v159
  %161 = vmatmul.f32.gmra.mxu0 %v118
  %v162 = vpop.f32.mrf.mxu0
  %v163 = vadd.f32 %v108, %v162
  %164 = vmatmul.f32.gmra.mxu0 %v121
  %v165 = vpop.f32.mrf.mxu0
  %v166 = vadd.f32 %v108, %v165
  %167 = vmatmul.f32.gmra.mxu0 %v124
  %v168 = vpop.f32.mrf.mxu0
  %v169 = vadd.f32 %v108, %v168
  %170 = vmatmul.f32.gmra.mxu0 %v127
  %v171 = vpop.f32.mrf.mxu0
  %v172 = vadd.f32 %v108, %v171
  %173 = vmatmul.f32.gmra.mxu0 %v130
  %v174 = vpop.f32.mrf.mxu0
  %v175 = vadd.f32 %v108, %v174
  %176 = vmatmul.f32.gmra.mxu0 %v133
  %v177 = vpop.f32.mrf.mxu0
  %v178 = vadd.f32 %v108, %v177
  %179 = vdwg.mxu0
  %v180 = vld [vmem:[%s1] sm:$0xff]
  %v181 = vld [vmem:[%s1 + $0x8] sm:$0xff]
  %v182 = vld [vmem:[%s1 + $0x10] sm:$0xff]
  %v183 = vld [vmem:[%s1 + $0x18] sm:$0xff]
  %v184 = vld [vmem:[%s1 + $0x20] sm:$0xff]
  %v185 = vld [vmem:[%s1 + $0x28] sm:$0xff]
  %v186 = vld [vmem:[%s8] sm:$0x7f]
  %v187 = vld [vmem:[%s10] sm:$0x1]
  %v189 = vperm.slane %v187, 0
  %v192 = vsel %vm110, %v180, 0
  %v195 = vsel %vm110, %v181, 0
  %v198 = vsel %vm110, %v182, 0
  %v201 = vsel %vm110, %v183, 0
  %v204 = vsel %vm110, %v184, 0
  %v207 = vsel %vm110, %v185, 0
  %v210 = vsel %vm135, %v186, 0
  %212 = vmatpush.msra.mxu0 0.0
  %213 = vmatpush.msra.mxu0 0.0
  %214 = vmatpush.msra.mxu0 0.0
  %215 = vmatpush.msra.mxu0 0.0
  %216 = vmatpush.msra.mxu0 0.0
  %217 = vmatpush.msra.mxu0 0.0
  %218 = vmatpush.msra.mxu0 0.0
  %219 = vmatpush.msra.mxu0 0.0
  %220 = vmatpush.msra.mxu0 0.0
  %221 = vmatpush.msra.mxu0 0.0
  %222 = vmatpush.msra.mxu0 0.0
  %223 = vmatpush.msra.mxu0 0.0
  %224 = vmatpush.msra.mxu0 0.0
  %225 = vmatpush.msra.mxu0 0.0
  %226 = vmatpush.msra.mxu0 0.0
  %227 = vmatpush.msra.mxu0 %v210
  %228 = vmatmul.f32.gmra.mxu0 %v192
  %v229 = vpop.f32.mrf.mxu0
  %v230 = vadd.f32 %v189, %v229
  %231 = vmatmul.f32.gmra.mxu0 %v195
  %v232 = vpop.f32.mrf.mxu0
  %v233 = vadd.f32 %v189, %v232
  %234 = vmatmul.f32.gmra.mxu0 %v198
  %v235 = vpop.f32.mrf.mxu0
  %v236 = vadd.f32 %v189, %v235
  %237 = vmatmul.f32.gmra.mxu0 %v201
  %v238 = vpop.f32.mrf.mxu0
  %v239 = vadd.f32 %v189, %v238
  %240 = vmatmul.f32.gmra.mxu0 %v204
  %v241 = vpop.f32.mrf.mxu0
  %v242 = vadd.f32 %v189, %v241
  %243 = vmatmul.f32.gmra.mxu0 %v207
  %v244 = vpop.f32.mrf.mxu0
  %v245 = vadd.f32 %v189, %v244
  %246 = vdwg.mxu0
  %vm247 = vcmask 261120
  %v249 = vsel %vm247, 0.0, 0
  %251 = vmatpush.msra.mxu0 0.0
  %252 = vmatpush.msra.mxu0 0.0
  %253 = vmatpush.msra.mxu0 0.0
  %254 = vmatpush.msra.mxu0 0.0
  %255 = vmatpush.msra.mxu0 0.0
  %256 = vmatpush.msra.mxu0 0.0
  %257 = vmatpush.msra.mxu0 0.0
  %258 = vmatpush.msra.mxu0 0.0
  %259 = vmatpush.msra.mxu0 0.0
  %260 = vmatpush.msra.mxu0 0.0
  %261 = vmatpush.msra.mxu0 0.0
  %262 = vmatpush.msra.mxu0 0.0
  %263 = vmatpush.msra.mxu0 %v68
  %264 = vmatpush.msra.mxu0 %v67
  %265 = vmatpush.msra.mxu0 %v66
  %266 = vmatpush.msra.mxu0 %v65
  %267 = vmatmul.f32.gmra.mxu0 %v249
  %v268 = vpop.f32.mrf.mxu0
  %v269 = vadd.f32 0.0, %v268
  %270 = vdwg.mxu0
  %v271 = vadd.f32 %v157, %v269
  %v272 = vxor.u32 %v271, 2147483648
  %v273 = vmul.f32 %v272, 1.442695
  %v274 = vpow.pop %v273
  %v275 = vadd.f32 %v274, 1.0
  %v276 = vrcp.pop %v275
  %v277 = vmul.f32 %v275, %v276
  %v278 = vsub.f32 1.0, %v277
  %v279 = vmul.f32 %v276, %v278
  %v280 = vadd.f32 %v276, %v279
  %vm281 = vweird.f32 %v275
  %vm282 = vweird.f32 %v276
  %vm283 = vmor %vm281, %vm282
  %v284 = vsel %vm283, %v276, %v280
  %v285 = vand.u32 2147483647, %v275
  %vm286 = vcmp.eq.f32.partialorder %v285, 8.507059e+37
  %v287 = vand.u32 %v275, 2147483648
  %v288 = vor.u32 1.1754944e-38, %v287
  %v289 = vsel %vm286, %v288, %v284
  %v290 = vmul.f32 1.0, %v289
  %v291 = vtanh.pop %v271
  %v292 = vmul.f32 %v290, 0.0
  %294 = vrot.lane.b32.xlu0 %v291, 32
  %v295 = vpop.permute.xlu0 %294
  %v297 = vmul.f32 %v290, %v295
  %299 = vrot.lane.b32.xlu0 %v297, 32
  %v300 = vpop.permute.xlu0 %299
  %v302 = vadd.f32 %v292, %v300
  %v303 = vtanh.pop %v302
  %305 = vrot.lane.b32.xlu0 %v303, 32
  %v306 = vpop.permute.xlu0 %305
  %v308 = vmul.f32 %v290, %v306
  %310 = vrot.lane.b32.xlu0 %v308, 64
  %v311 = vpop.permute.xlu0 %310
  %v312 = vsel %vm247, %v311, 0
  %314 = vmatpush.msra.mxu0 0.0
  %315 = vmatpush.msra.mxu0 0.0
  %316 = vmatpush.msra.mxu0 0.0
  %317 = vmatpush.msra.mxu0 0.0
  %318 = vmatpush.msra.mxu0 0.0
  %319 = vmatpush.msra.mxu0 0.0
  %320 = vmatpush.msra.mxu0 0.0
  %321 = vmatpush.msra.mxu0 0.0
  %322 = vmatpush.msra.mxu0 0.0
  %323 = vmatpush.msra.mxu0 0.0
  %324 = vmatpush.msra.mxu0 0.0
  %325 = vmatpush.msra.mxu0 0.0
  %326 = vmatpush.msra.mxu0 %v72
  %327 = vmatpush.msra.mxu0 %v71
  %328 = vmatpush.msra.mxu0 %v70
  %329 = vmatpush.msra.mxu0 %v69
  %330 = vmatmul.f32.gmra.mxu0 %v312
  %v331 = vpop.f32.mrf.mxu0
  %v332 = vadd.f32 %v91, %v331
  %333 = vdwg.mxu0
  %334 = vmatpush.msra.mxu0 0.0
  %335 = vmatpush.msra.mxu0 0.0
  %336 = vmatpush.msra.mxu0 0.0
  %337 = vmatpush.msra.mxu0 0.0
  %338 = vmatpush.msra.mxu0 0.0
  %339 = vmatpush.msra.mxu0 0.0
  %340 = vmatpush.msra.mxu0 0.0
  %341 = vmatpush.msra.mxu0 0.0
  %342 = vmatpush.msra.mxu0 0.0
  %343 = vmatpush.msra.mxu0 0.0
  %344 = vmatpush.msra.mxu0 0.0
  %345 = vmatpush.msra.mxu0 0.0
  %346 = vmatpush.msra.mxu0 %v76
  %347 = vmatpush.msra.mxu0 %v75
  %348 = vmatpush.msra.mxu0 %v74
  %349 = vmatpush.msra.mxu0 %v73
  %350 = vmatmul.f32.gmra.mxu0 %v249
  %v351 = vpop.f32.mrf.mxu0
  %v352 = vadd.f32 0.0, %v351
  %353 = vdwg.mxu0
  %v354 = vadd.f32 %v332, %v352
  %v355 = vxor.u32 %v354, 2147483648
  %v356 = vmul.f32 %v355, 1.442695
  %v357 = vpow.pop %v356
  %v358 = vadd.f32 %v357, 1.0
  %v359 = vrcp.pop %v358
  %v360 = vmul.f32 %v358, %v359
  %v361 = vsub.f32 1.0, %v360
  %v362 = vmul.f32 %v359, %v361
  %v363 = vadd.f32 %v359, %v362
  %vm364 = vweird.f32 %v358
  %vm365 = vweird.f32 %v359
  %vm366 = vmor %vm364, %vm365
  %v367 = vsel %vm366, %v359, %v363
  %v368 = vand.u32 2147483647, %v358
  %vm369 = vcmp.eq.f32.partialorder %v368, 8.507059e+37
  %v370 = vand.u32 %v358, 2147483648
  %v371 = vor.u32 1.1754944e-38, %v370
  %v372 = vsel %vm369, %v371, %v367
  %v373 = vmul.f32 1.0, %v372
  %v374 = vtanh.pop %v354
  %v375 = vmul.f32 %v373, 0.0
  %377 = vrot.lane.b32.xlu0 %v374, 32
  %v378 = vpop.permute.xlu0 %377
  %v380 = vmul.f32 %v373, %v378
  %382 = vrot.lane.b32.xlu0 %v380, 32
  %v383 = vpop.permute.xlu0 %382
  %v385 = vadd.f32 %v375, %v383
  %v386 = vtanh.pop %v385
  %388 = vrot.lane.b32.xlu0 %v386, 32
  %v389 = vpop.permute.xlu0 %388
  %v391 = vmul.f32 %v373, %v389
  %392 = vmatpush.msra.mxu0 0.0
  %393 = vmatpush.msra.mxu0 0.0
  %394 = vmatpush.msra.mxu0 0.0
  %395 = vmatpush.msra.mxu0 0.0
  %396 = vmatpush.msra.mxu0 0.0
  %397 = vmatpush.msra.mxu0 0.0
  %398 = vmatpush.msra.mxu0 0.0
  %399 = vmatpush.msra.mxu0 0.0
  %400 = vmatpush.msra.mxu0 0.0
  %401 = vmatpush.msra.mxu0 0.0
  %402 = vmatpush.msra.mxu0 0.0
  %403 = vmatpush.msra.mxu0 0.0
  %404 = vmatpush.msra.mxu0 %v68
  %405 = vmatpush.msra.mxu0 %v67
  %406 = vmatpush.msra.mxu0 %v66
  %407 = vmatpush.msra.mxu0 %v65
  %408 = vmatmul.f32.gmra.mxu0 %v312
  %v409 = vpop.f32.mrf.mxu0
  %v410 = vadd.f32 0.0, %v409
  %411 = vdwg.mxu0
  %v412 = vadd.f32 %v160, %v410
  %v413 = vxor.u32 %v412, 2147483648
  %v414 = vmul.f32 %v413, 1.442695
  %v415 = vpow.pop %v414
  %v416 = vadd.f32 %v415, 1.0
  %v417 = vrcp.pop %v416
  %v418 = vmul.f32 %v416, %v417
  %v419 = vsub.f32 1.0, %v418
  %v420 = vmul.f32 %v417, %v419
  %v421 = vadd.f32 %v417, %v420
  %vm422 = vweird.f32 %v416
  %vm423 = vweird.f32 %v417
  %vm424 = vmor %vm422, %vm423
  %v425 = vsel %vm424, %v417, %v421
  %v426 = vand.u32 2147483647, %v416
  %vm427 = vcmp.eq.f32.partialorder %v426, 8.507059e+37
  %v428 = vand.u32 %v416, 2147483648
  %v429 = vor.u32 1.1754944e-38, %v428
  %v430 = vsel %vm427, %v429, %v425
  %v431 = vmul.f32 1.0, %v430
  %v432 = vtanh.pop %v412
  %v433 = vmul.f32 %v431, %v302
  %435 = vrot.lane.b32.xlu0 %v432, 32
  %v436 = vpop.permute.xlu0 %435
  %v438 = vmul.f32 %v431, %v436
  %440 = vrot.lane.b32.xlu0 %v438, 32
  %v441 = vpop.permute.xlu0 %440
  %v443 = vadd.f32 %v433, %v441
  %v444 = vtanh.pop %v443
  %446 = vrot.lane.b32.xlu0 %v444, 32
  %v447 = vpop.permute.xlu0 %446
  %v449 = vmul.f32 %v431, %v447
  %451 = vrot.lane.b32.xlu0 %v449, 64
  %v452 = vpop.permute.xlu0 %451
  %v453 = vsel %vm247, %v452, 0
  %455 = vmatpush.msra.mxu0 0.0
  %456 = vmatpush.msra.mxu0 0.0
  %457 = vmatpush.msra.mxu0 0.0
  %458 = vmatpush.msra.mxu0 0.0
  %459 = vmatpush.msra.mxu0 0.0
  %460 = vmatpush.msra.mxu0 0.0
  %461 = vmatpush.msra.mxu0 0.0
  %462 = vmatpush.msra.mxu0 0.0
  %463 = vmatpush.msra.mxu0 0.0
  %464 = vmatpush.msra.mxu0 0.0
  %465 = vmatpush.msra.mxu0 0.0
  %466 = vmatpush.msra.mxu0 0.0
  %467 = vmatpush.msra.mxu0 %v72
  %468 = vmatpush.msra.mxu0 %v71
  %469 = vmatpush.msra.mxu0 %v70
  %470 = vmatpush.msra.mxu0 %v69
  %471 = vmatmul.f32.gmra.mxu0 %v453
  %v472 = vpop.f32.mrf.mxu0
  %v473 = vadd.f32 %v91, %v472
  %474 = vdwg.mxu0
  %476 = vrot.lane.b32.xlu0 %v391, 64
  %v477 = vpop.permute.xlu0 %476
  %v478 = vsel %vm247, %v477, 0
  %480 = vmatpush.msra.mxu0 0.0
  %481 = vmatpush.msra.mxu0 0.0
  %482 = vmatpush.msra.mxu0 0.0
  %483 = vmatpush.msra.mxu0 0.0
  %484 = vmatpush.msra.mxu0 0.0
  %485 = vmatpush.msra.mxu0 0.0
  %486 = vmatpush.msra.mxu0 0.0
  %487 = vmatpush.msra.mxu0 0.0
  %488 = vmatpush.msra.mxu0 0.0
  %489 = vmatpush.msra.mxu0 0.0
  %490 = vmatpush.msra.mxu0 0.0
  %491 = vmatpush.msra.mxu0 0.0
  %492 = vmatpush.msra.mxu0 %v76
  %493 = vmatpush.msra.mxu0 %v75
  %494 = vmatpush.msra.mxu0 %v74
  %495 = vmatpush.msra.mxu0 %v73
  %496 = vmatmul.f32.gmra.mxu0 %v478
  %v497 = vpop.f32.mrf.mxu0
  %v498 = vadd.f32 0.0, %v497
  %499 = vdwg.mxu0
  %v500 = vadd.f32 %v473, %v498
  %v501 = vxor.u32 %v500, 2147483648
  %v502 = vmul.f32 %v501, 1.442695
  %v503 = vpow.pop %v502
  %v504 = vadd.f32 %v503, 1.0
  %v505 = vrcp.pop %v504
  %v506 = vmul.f32 %v504, %v505
  %v507 = vsub.f32 1.0, %v506
  %v508 = vmul.f32 %v505, %v507
  %v509 = vadd.f32 %v505, %v508
  %vm510 = vweird.f32 %v504
  %vm511 = vweird.f32 %v505
  %vm512 = vmor %vm510, %vm511
  %v513 = vsel %vm512, %v505, %v509
  %v514 = vand.u32 2147483647, %v504
  %vm515 = vcmp.eq.f32.partialorder %v514, 8.507059e+37
  %v516 = vand.u32 %v504, 2147483648
  %v517 = vor.u32 1.1754944e-38, %v516
  %v518 = vsel %vm515, %v517, %v513
  %v519 = vmul.f32 1.0, %v518
  %v520 = vtanh.pop %v500
  %v521 = vmul.f32 %v519, %v385
  %523 = vrot.lane.b32.xlu0 %v520, 32
  %v524 = vpop.permute.xlu0 %523
  %v526 = vmul.f32 %v519, %v524
  %528 = vrot.lane.b32.xlu0 %v526, 32
  %v529 = vpop.permute.xlu0 %528
  %v531 = vadd.f32 %v521, %v529
  %v532 = vtanh.pop %v531
  %534 = vrot.lane.b32.xlu0 %v532, 32
  %v535 = vpop.permute.xlu0 %534
  %v537 = vmul.f32 %v519, %v535
  %538 = vmatpush.msra.mxu0 0.0
  %539 = vmatpush.msra.mxu0 0.0
  %540 = vmatpush.msra.mxu0 0.0
  %541 = vmatpush.msra.mxu0 0.0
  %542 = vmatpush.msra.mxu0 0.0
  %543 = vmatpush.msra.mxu0 0.0
  %544 = vmatpush.msra.mxu0 0.0
  %545 = vmatpush.msra.mxu0 0.0
  %546 = vmatpush.msra.mxu0 0.0
  %547 = vmatpush.msra.mxu0 0.0
  %548 = vmatpush.msra.mxu0 0.0
  %549 = vmatpush.msra.mxu0 0.0
  %550 = vmatpush.msra.mxu0 %v68
  %551 = vmatpush.msra.mxu0 %v67
  %552 = vmatpush.msra.mxu0 %v66
  %553 = vmatpush.msra.mxu0 %v65
  %554 = vmatmul.f32.gmra.mxu0 %v453
  %v555 = vpop.f32.mrf.mxu0
  %v556 = vadd.f32 0.0, %v555
  %557 = vdwg.mxu0
  %v558 = vadd.f32 %v163, %v556
  %v559 = vxor.u32 %v558, 2147483648
  %v560 = vmul.f32 %v559, 1.442695
  %v561 = vpow.pop %v560
  %v562 = vadd.f32 %v561, 1.0
  %v563 = vrcp.pop %v562
  %v564 = vmul.f32 %v562, %v563
  %v565 = vsub.f32 1.0, %v564
  %v566 = vmul.f32 %v563, %v565
  %v567 = vadd.f32 %v563, %v566
  %vm568 = vweird.f32 %v562
  %vm569 = vweird.f32 %v563
  %vm570 = vmor %vm568, %vm569
  %v571 = vsel %vm570, %v563, %v567
  %v572 = vand.u32 2147483647, %v562
  %vm573 = vcmp.eq.f32.partialorder %v572, 8.507059e+37
  %v574 = vand.u32 %v562, 2147483648
  %v575 = vor.u32 1.1754944e-38, %v574
  %v576 = vsel %vm573, %v575, %v571
  %v577 = vmul.f32 1.0, %v576
  %v578 = vtanh.pop %v558
  %v579 = vmul.f32 %v577, %v443
  %581 = vrot.lane.b32.xlu0 %v578, 32
  %v582 = vpop.permute.xlu0 %581
  %v584 = vmul.f32 %v577, %v582
  %586 = vrot.lane.b32.xlu0 %v584, 32
  %v587 = vpop.permute.xlu0 %586
  %v589 = vadd.f32 %v579, %v587
  %v590 = vtanh.pop %v589
  %592 = vrot.lane.b32.xlu0 %v590, 32
  %v593 = vpop.permute.xlu0 %592
  %v595 = vmul.f32 %v577, %v593
  %597 = vrot.lane.b32.xlu0 %v595, 64
  %v598 = vpop.permute.xlu0 %597
  %v599 = vsel %vm247, %v598, 0
  %601 = vmatpush.msra.mxu0 0.0
  %602 = vmatpush.msra.mxu0 0.0
  %603 = vmatpush.msra.mxu0 0.0
  %604 = vmatpush.msra.mxu0 0.0
  %605 = vmatpush.msra.mxu0 0.0
  %606 = vmatpush.msra.mxu0 0.0
  %607 = vmatpush.msra.mxu0 0.0
  %608 = vmatpush.msra.mxu0 0.0
  %609 = vmatpush.msra.mxu0 0.0
  %610 = vmatpush.msra.mxu0 0.0
  %611 = vmatpush.msra.mxu0 0.0
  %612 = vmatpush.msra.mxu0 0.0
  %613 = vmatpush.msra.mxu0 %v72
  %614 = vmatpush.msra.mxu0 %v71
  %615 = vmatpush.msra.mxu0 %v70
  %616 = vmatpush.msra.mxu0 %v69
  %617 = vmatmul.f32.gmra.mxu0 %v599
  %v618 = vpop.f32.mrf.mxu0
  %v619 = vadd.f32 %v91, %v618
  %620 = vdwg.mxu0
  %622 = vrot.lane.b32.xlu0 %v537, 64
  %v623 = vpop.permute.xlu0 %622
  %v624 = vsel %vm247, %v623, 0
  %626 = vmatpush.msra.mxu0 0.0
  %627 = vmatpush.msra.mxu0 0.0
  %628 = vmatpush.msra.mxu0 0.0
  %629 = vmatpush.msra.mxu0 0.0
  %630 = vmatpush.msra.mxu0 0.0
  %631 = vmatpush.msra.mxu0 0.0
  %632 = vmatpush.msra.mxu0 0.0
  %633 = vmatpush.msra.mxu0 0.0
  %634 = vmatpush.msra.mxu0 0.0
  %635 = vmatpush.msra.mxu0 0.0
  %636 = vmatpush.msra.mxu0 0.0
  %637 = vmatpush.msra.mxu0 0.0
  %638 = vmatpush.msra.mxu0 %v76
  %639 = vmatpush.msra.mxu0 %v75
  %640 = vmatpush.msra.mxu0 %v74
  %641 = vmatpush.msra.mxu0 %v73
  %642 = vmatmul.f32.gmra.mxu0 %v624
  %v643 = vpop.f32.mrf.mxu0
  %v644 = vadd.f32 0.0, %v643
  %645 = vdwg.mxu0
  %v646 = vadd.f32 %v619, %v644
  %v647 = vxor.u32 %v646, 2147483648
  %v648 = vmul.f32 %v647, 1.442695
  %v649 = vpow.pop %v648
  %v650 = vadd.f32 %v649, 1.0
  %v651 = vrcp.pop %v650
  %v652 = vmul.f32 %v650, %v651
  %v653 = vsub.f32 1.0, %v652
  %v654 = vmul.f32 %v651, %v653
  %v655 = vadd.f32 %v651, %v654
  %vm656 = vweird.f32 %v650
  %vm657 = vweird.f32 %v651
  %vm658 = vmor %vm656, %vm657
  %v659 = vsel %vm658, %v651, %v655
  %v660 = vand.u32 2147483647, %v650
  %vm661 = vcmp.eq.f32.partialorder %v660, 8.507059e+37
  %v662 = vand.u32 %v650, 2147483648
  %v663 = vor.u32 1.1754944e-38, %v662
  %v664 = vsel %vm661, %v663, %v659
  %v665 = vmul.f32 1.0, %v664
  %v666 = vtanh.pop %v646
  %v667 = vmul.f32 %v665, %v531
  %669 = vrot.lane.b32.xlu0 %v666, 32
  %v670 = vpop.permute.xlu0 %669
  %v672 = vmul.f32 %v665, %v670
  %674 = vrot.lane.b32.xlu0 %v672, 32
  %v675 = vpop.permute.xlu0 %674
  %v677 = vadd.f32 %v667, %v675
  %v678 = vtanh.pop %v677
  %680 = vrot.lane.b32.xlu0 %v678, 32
  %v681 = vpop.permute.xlu0 %680
  %v683 = vmul.f32 %v665, %v681
  %684 = vmatpush.msra.mxu0 0.0
  %685 = vmatpush.msra.mxu0 0.0
  %686 = vmatpush.msra.mxu0 0.0
  %687 = vmatpush.msra.mxu0 0.0
  %688 = vmatpush.msra.mxu0 0.0
  %689 = vmatpush.msra.mxu0 0.0
  %690 = vmatpush.msra.mxu0 0.0
  %691 = vmatpush.msra.mxu0 0.0
  %692 = vmatpush.msra.mxu0 0.0
  %693 = vmatpush.msra.mxu0 0.0
  %694 = vmatpush.msra.mxu0 0.0
  %695 = vmatpush.msra.mxu0 0.0
  %696 = vmatpush.msra.mxu0 %v68
  %697 = vmatpush.msra.mxu0 %v67
  %698 = vmatpush.msra.mxu0 %v66
  %699 = vmatpush.msra.mxu0 %v65
  %700 = vmatmul.f32.gmra.mxu0 %v599
  %v701 = vpop.f32.mrf.mxu0
  %v702 = vadd.f32 0.0, %v701
  %703 = vdwg.mxu0
  %v704 = vadd.f32 %v166, %v702
  %v705 = vxor.u32 %v704, 2147483648
  %v706 = vmul.f32 %v705, 1.442695
  %v707 = vpow.pop %v706
  %v708 = vadd.f32 %v707, 1.0
  %v709 = vrcp.pop %v708
  %v710 = vmul.f32 %v708, %v709
  %v711 = vsub.f32 1.0, %v710
  %v712 = vmul.f32 %v709, %v711
  %v713 = vadd.f32 %v709, %v712
  %vm714 = vweird.f32 %v708
  %vm715 = vweird.f32 %v709
  %vm716 = vmor %vm714, %vm715
  %v717 = vsel %vm716, %v709, %v713
  %v718 = vand.u32 2147483647, %v708
  %vm719 = vcmp.eq.f32.partialorder %v718, 8.507059e+37
  %v720 = vand.u32 %v708, 2147483648
  %v721 = vor.u32 1.1754944e-38, %v720
  %v722 = vsel %vm719, %v721, %v717
  %v723 = vmul.f32 1.0, %v722
  %v724 = vtanh.pop %v704
  %v725 = vmul.f32 %v723, %v589
  %727 = vrot.lane.b32.xlu0 %v724, 32
  %v728 = vpop.permute.xlu0 %727
  %v730 = vmul.f32 %v723, %v728
  %732 = vrot.lane.b32.xlu0 %v730, 32
  %v733 = vpop.permute.xlu0 %732
  %v735 = vadd.f32 %v725, %v733
  %v736 = vtanh.pop %v735
  %738 = vrot.lane.b32.xlu0 %v736, 32
  %v739 = vpop.permute.xlu0 %738
  %v741 = vmul.f32 %v723, %v739
  %743 = vrot.lane.b32.xlu0 %v741, 64
  %v744 = vpop.permute.xlu0 %743
  %v745 = vsel %vm247, %v744, 0
  %747 = vmatpush.msra.mxu0 0.0
  %748 = vmatpush.msra.mxu0 0.0
  %749 = vmatpush.msra.mxu0 0.0
  %750 = vmatpush.msra.mxu0 0.0
  %751 = vmatpush.msra.mxu0 0.0
  %752 = vmatpush.msra.mxu0 0.0
  %753 = vmatpush.msra.mxu0 0.0
  %754 = vmatpush.msra.mxu0 0.0
  %755 = vmatpush.msra.mxu0 0.0
  %756 = vmatpush.msra.mxu0 0.0
  %757 = vmatpush.msra.mxu0 0.0
  %758 = vmatpush.msra.mxu0 0.0
  %759 = vmatpush.msra.mxu0 %v72
  %760 = vmatpush.msra.mxu0 %v71
  %761 = vmatpush.msra.mxu0 %v70
  %762 = vmatpush.msra.mxu0 %v69
  %763 = vmatmul.f32.gmra.mxu0 %v745
  %v764 = vpop.f32.mrf.mxu0
  %v765 = vadd.f32 %v91, %v764
  %766 = vdwg.mxu0
  %768 = vrot.lane.b32.xlu0 %v683, 64
  %v769 = vpop.permute.xlu0 %768
  %v770 = vsel %vm247, %v769, 0
  %772 = vmatpush.msra.mxu0 0.0
  %773 = vmatpush.msra.mxu0 0.0
  %774 = vmatpush.msra.mxu0 0.0
  %775 = vmatpush.msra.mxu0 0.0
  %776 = vmatpush.msra.mxu0 0.0
  %777 = vmatpush.msra.mxu0 0.0
  %778 = vmatpush.msra.mxu0 0.0
  %779 = vmatpush.msra.mxu0 0.0
  %780 = vmatpush.msra.mxu0 0.0
  %781 = vmatpush.msra.mxu0 0.0
  %782 = vmatpush.msra.mxu0 0.0
  %783 = vmatpush.msra.mxu0 0.0
  %784 = vmatpush.msra.mxu0 %v76
  %785 = vmatpush.msra.mxu0 %v75
  %786 = vmatpush.msra.mxu0 %v74
  %787 = vmatpush.msra.mxu0 %v73
  %788 = vmatmul.f32.gmra.mxu0 %v770
  %v789 = vpop.f32.mrf.mxu0
  %v790 = vadd.f32 0.0, %v789
  %791 = vdwg.mxu0
  %v792 = vadd.f32 %v765, %v790
  %v793 = vxor.u32 %v792, 2147483648
  %v794 = vmul.f32 %v793, 1.442695
  %v795 = vpow.pop %v794
  %v796 = vadd.f32 %v795, 1.0
  %v797 = vrcp.pop %v796
  %v798 = vmul.f32 %v796, %v797
  %v799 = vsub.f32 1.0, %v798
  %v800 = vmul.f32 %v797, %v799
  %v801 = vadd.f32 %v797, %v800
  %vm802 = vweird.f32 %v796
  %vm803 = vweird.f32 %v797
  %vm804 = vmor %vm802, %vm803
  %v805 = vsel %vm804, %v797, %v801
  %v806 = vand.u32 2147483647, %v796
  %vm807 = vcmp.eq.f32.partialorder %v806, 8.507059e+37
  %v808 = vand.u32 %v796, 2147483648
  %v809 = vor.u32 1.1754944e-38, %v808
  %v810 = vsel %vm807, %v809, %v805
  %v811 = vmul.f32 1.0, %v810
  %v812 = vtanh.pop %v792
  %v813 = vmul.f32 %v811, %v677
  %815 = vrot.lane.b32.xlu0 %v812, 32
  %v816 = vpop.permute.xlu0 %815
  %v818 = vmul.f32 %v811, %v816
  %820 = vrot.lane.b32.xlu0 %v818, 32
  %v821 = vpop.permute.xlu0 %820
  %v823 = vadd.f32 %v813, %v821
  %v824 = vtanh.pop %v823
  %826 = vrot.lane.b32.xlu0 %v824, 32
  %v827 = vpop.permute.xlu0 %826
  %v829 = vmul.f32 %v811, %v827
  %830 = vmatpush.msra.mxu0 0.0
  %831 = vmatpush.msra.mxu0 0.0
  %832 = vmatpush.msra.mxu0 0.0
  %833 = vmatpush.msra.mxu0 0.0
  %834 = vmatpush.msra.mxu0 0.0
  %835 = vmatpush.msra.mxu0 0.0
  %836 = vmatpush.msra.mxu0 0.0
  %837 = vmatpush.msra.mxu0 0.0
  %838 = vmatpush.msra.mxu0 0.0
  %839 = vmatpush.msra.mxu0 0.0
  %840 = vmatpush.msra.mxu0 0.0
  %841 = vmatpush.msra.mxu0 0.0
  %842 = vmatpush.msra.mxu0 %v68
  %843 = vmatpush.msra.mxu0 %v67
  %844 = vmatpush.msra.mxu0 %v66
  %845 = vmatpush.msra.mxu0 %v65
  %846 = vmatmul.f32.gmra.mxu0 %v745
  %v847 = vpop.f32.mrf.mxu0
  %v848 = vadd.f32 0.0, %v847
  %849 = vdwg.mxu0
  %v850 = vadd.f32 %v169, %v848
  %v851 = vxor.u32 %v850, 2147483648
  %v852 = vmul.f32 %v851, 1.442695
  %v853 = vpow.pop %v852
  %v854 = vadd.f32 %v853, 1.0
  %v855 = vrcp.pop %v854
  %v856 = vmul.f32 %v854, %v855
  %v857 = vsub.f32 1.0, %v856
  %v858 = vmul.f32 %v855, %v857
  %v859 = vadd.f32 %v855, %v858
  %vm860 = vweird.f32 %v854
  %vm861 = vweird.f32 %v855
  %vm862 = vmor %vm860, %vm861
  %v863 = vsel %vm862, %v855, %v859
  %v864 = vand.u32 2147483647, %v854
  %vm865 = vcmp.eq.f32.partialorder %v864, 8.507059e+37
  %v866 = vand.u32 %v854, 2147483648
  %v867 = vor.u32 1.1754944e-38, %v866
  %v868 = vsel %vm865, %v867, %v863
  %v869 = vmul.f32 1.0, %v868
  %v870 = vtanh.pop %v850
  %v871 = vmul.f32 %v869, %v735
  %873 = vrot.lane.b32.xlu0 %v870, 32
  %v874 = vpop.permute.xlu0 %873
  %v876 = vmul.f32 %v869, %v874
  %878 = vrot.lane.b32.xlu0 %v876, 32
  %v879 = vpop.permute.xlu0 %878
  %v881 = vadd.f32 %v871, %v879
  %v882 = vtanh.pop %v881
  %884 = vrot.lane.b32.xlu0 %v882, 32
  %v885 = vpop.permute.xlu0 %884
  %v887 = vmul.f32 %v869, %v885
  %889 = vrot.lane.b32.xlu0 %v887, 64
  %v890 = vpop.permute.xlu0 %889
  %v891 = vsel %vm247, %v890, 0
  %893 = vmatpush.msra.mxu0 0.0
  %894 = vmatpush.msra.mxu0 0.0
  %895 = vmatpush.msra.mxu0 0.0
  %896 = vmatpush.msra.mxu0 0.0
  %897 = vmatpush.msra.mxu0 0.0
  %898 = vmatpush.msra.mxu0 0.0
  %899 = vmatpush.msra.mxu0 0.0
  %900 = vmatpush.msra.mxu0 0.0
  %901 = vmatpush.msra.mxu0 0.0
  %902 = vmatpush.msra.mxu0 0.0
  %903 = vmatpush.msra.mxu0 0.0
  %904 = vmatpush.msra.mxu0 0.0
  %905 = vmatpush.msra.mxu0 %v72
  %906 = vmatpush.msra.mxu0 %v71
  %907 = vmatpush.msra.mxu0 %v70
  %908 = vmatpush.msra.mxu0 %v69
  %909 = vmatmul.f32.gmra.mxu0 %v891
  %v910 = vpop.f32.mrf.mxu0
  %v911 = vadd.f32 %v91, %v910
  %912 = vdwg.mxu0
  %914 = vrot.lane.b32.xlu0 %v829, 64
  %v915 = vpop.permute.xlu0 %914
  %v916 = vsel %vm247, %v915, 0
  %918 = vmatpush.msra.mxu0 0.0
  %919 = vmatpush.msra.mxu0 0.0
  %920 = vmatpush.msra.mxu0 0.0
  %921 = vmatpush.msra.mxu0 0.0
  %922 = vmatpush.msra.mxu0 0.0
  %923 = vmatpush.msra.mxu0 0.0
  %924 = vmatpush.msra.mxu0 0.0
  %925 = vmatpush.msra.mxu0 0.0
  %926 = vmatpush.msra.mxu0 0.0
  %927 = vmatpush.msra.mxu0 0.0
  %928 = vmatpush.msra.mxu0 0.0
  %929 = vmatpush.msra.mxu0 0.0
  %930 = vmatpush.msra.mxu0 %v76
  %931 = vmatpush.msra.mxu0 %v75
  %932 = vmatpush.msra.mxu0 %v74
  %933 = vmatpush.msra.mxu0 %v73
  %934 = vmatmul.f32.gmra.mxu0 %v916
  %v935 = vpop.f32.mrf.mxu0
  %v936 = vadd.f32 0.0, %v935
  %937 = vdwg.mxu0
  %v938 = vadd.f32 %v911, %v936
  %v939 = vxor.u32 %v938, 2147483648
  %v940 = vmul.f32 %v939, 1.442695
  %v941 = vpow.pop %v940
  %v942 = vadd.f32 %v941, 1.0
  %v943 = vrcp.pop %v942
  %v944 = vmul.f32 %v942, %v943
  %v945 = vsub.f32 1.0, %v944
  %v946 = vmul.f32 %v943, %v945
  %v947 = vadd.f32 %v943, %v946
  %vm948 = vweird.f32 %v942
  %vm949 = vweird.f32 %v943
  %vm950 = vmor %vm948, %vm949
  %v951 = vsel %vm950, %v943, %v947
  %v952 = vand.u32 2147483647, %v942
  %vm953 = vcmp.eq.f32.partialorder %v952, 8.507059e+37
  %v954 = vand.u32 %v942, 2147483648
  %v955 = vor.u32 1.1754944e-38, %v954
  %v956 = vsel %vm953, %v955, %v951
  %v957 = vmul.f32 1.0, %v956
  %v958 = vtanh.pop %v938
  %v959 = vmul.f32 %v957, %v823
  %961 = vrot.lane.b32.xlu0 %v958, 32
  %v962 = vpop.permute.xlu0 %961
  %v964 = vmul.f32 %v957, %v962
  %966 = vrot.lane.b32.xlu0 %v964, 32
  %v967 = vpop.permute.xlu0 %966
  %v969 = vadd.f32 %v959, %v967
  %v970 = vtanh.pop %v969
  %972 = vrot.lane.b32.xlu0 %v970, 32
  %v973 = vpop.permute.xlu0 %972
  %v975 = vmul.f32 %v957, %v973
  %976 = vmatpush.msra.mxu0 0.0
  %977 = vmatpush.msra.mxu0 0.0
  %978 = vmatpush.msra.mxu0 0.0
  %979 = vmatpush.msra.mxu0 0.0
  %980 = vmatpush.msra.mxu0 0.0
  %981 = vmatpush.msra.mxu0 0.0
  %982 = vmatpush.msra.mxu0 0.0
  %983 = vmatpush.msra.mxu0 0.0
  %984 = vmatpush.msra.mxu0 0.0
  %985 = vmatpush.msra.mxu0 0.0
  %986 = vmatpush.msra.mxu0 0.0
  %987 = vmatpush.msra.mxu0 0.0
  %988 = vmatpush.msra.mxu0 %v68
  %989 = vmatpush.msra.mxu0 %v67
  %990 = vmatpush.msra.mxu0 %v66
  %991 = vmatpush.msra.mxu0 %v65
  %992 = vmatmul.f32.gmra.mxu0 %v891
  %v993 = vpop.f32.mrf.mxu0
  %v994 = vadd.f32 0.0, %v993
  %995 = vdwg.mxu0
  %v996 = vadd.f32 %v172, %v994
  %v997 = vxor.u32 %v996, 2147483648
  %v998 = vmul.f32 %v997, 1.442695
  %v999 = vpow.pop %v998
  %v1000 = vadd.f32 %v999, 1.0
  %v1001 = vrcp.pop %v1000
  %v1002 = vmul.f32 %v1000, %v1001
  %v1003 = vsub.f32 1.0, %v1002
  %v1004 = vmul.f32 %v1001, %v1003
  %v1005 = vadd.f32 %v1001, %v1004
  %vm1006 = vweird.f32 %v1000
  %vm1007 = vweird.f32 %v1001
  %vm1008 = vmor %vm1006, %vm1007
  %v1009 = vsel %vm1008, %v1001, %v1005
  %v1010 = vand.u32 2147483647, %v1000
  %vm1011 = vcmp.eq.f32.partialorder %v1010, 8.507059e+37
  %v1012 = vand.u32 %v1000, 2147483648
  %v1013 = vor.u32 1.1754944e-38, %v1012
  %v1014 = vsel %vm1011, %v1013, %v1009
  %v1015 = vmul.f32 1.0, %v1014
  %v1016 = vtanh.pop %v996
  %v1017 = vmul.f32 %v1015, %v881
  %1019 = vrot.lane.b32.xlu0 %v1016, 32
  %v1020 = vpop.permute.xlu0 %1019
  %v1022 = vmul.f32 %v1015, %v1020
  %1024 = vrot.lane.b32.xlu0 %v1022, 32
  %v1025 = vpop.permute.xlu0 %1024
  %v1027 = vadd.f32 %v1017, %v1025
  %v1028 = vtanh.pop %v1027
  %1030 = vrot.lane.b32.xlu0 %v1028, 32
  %v1031 = vpop.permute.xlu0 %1030
  %v1033 = vmul.f32 %v1015, %v1031
  %1035 = vrot.lane.b32.xlu0 %v1033, 64
  %v1036 = vpop.permute.xlu0 %1035
  %v1037 = vsel %vm247, %v1036, 0
  %1039 = vmatpush.msra.mxu0 0.0
  %1040 = vmatpush.msra.mxu0 0.0
  %1041 = vmatpush.msra.mxu0 0.0
  %1042 = vmatpush.msra.mxu0 0.0
  %1043 = vmatpush.msra.mxu0 0.0
  %1044 = vmatpush.msra.mxu0 0.0
  %1045 = vmatpush.msra.mxu0 0.0
  %1046 = vmatpush.msra.mxu0 0.0
  %1047 = vmatpush.msra.mxu0 0.0
  %1048 = vmatpush.msra.mxu0 0.0
  %1049 = vmatpush.msra.mxu0 0.0
  %1050 = vmatpush.msra.mxu0 0.0
  %1051 = vmatpush.msra.mxu0 %v72
  %1052 = vmatpush.msra.mxu0 %v71
  %1053 = vmatpush.msra.mxu0 %v70
  %1054 = vmatpush.msra.mxu0 %v69
  %1055 = vmatmul.f32.gmra.mxu0 %v1037
  %v1056 = vpop.f32.mrf.mxu0
  %v1057 = vadd.f32 %v91, %v1056
  %1058 = vdwg.mxu0
  %1060 = vrot.lane.b32.xlu0 %v975, 64
  %v1061 = vpop.permute.xlu0 %1060
  %v1062 = vsel %vm247, %v1061, 0
  %1064 = vmatpush.msra.mxu0 0.0
  %1065 = vmatpush.msra.mxu0 0.0
  %1066 = vmatpush.msra.mxu0 0.0
  %1067 = vmatpush.msra.mxu0 0.0
  %1068 = vmatpush.msra.mxu0 0.0
  %1069 = vmatpush.msra.mxu0 0.0
  %1070 = vmatpush.msra.mxu0 0.0
  %1071 = vmatpush.msra.mxu0 0.0
  %1072 = vmatpush.msra.mxu0 0.0
  %1073 = vmatpush.msra.mxu0 0.0
  %1074 = vmatpush.msra.mxu0 0.0
  %1075 = vmatpush.msra.mxu0 0.0
  %1076 = vmatpush.msra.mxu0 %v76
  %1077 = vmatpush.msra.mxu0 %v75
  %1078 = vmatpush.msra.mxu0 %v74
  %1079 = vmatpush.msra.mxu0 %v73
  %1080 = vmatmul.f32.gmra.mxu0 %v1062
  %v1081 = vpop.f32.mrf.mxu0
  %v1082 = vadd.f32 0.0, %v1081
  %1083 = vdwg.mxu0
  %v1084 = vadd.f32 %v1057, %v1082
  %v1085 = vxor.u32 %v1084, 2147483648
  %v1086 = vmul.f32 %v1085, 1.442695
  %v1087 = vpow.pop %v1086
  %v1088 = vadd.f32 %v1087, 1.0
  %v1089 = vrcp.pop %v1088
  %v1090 = vmul.f32 %v1088, %v1089
  %v1091 = vsub.f32 1.0, %v1090
  %v1092 = vmul.f32 %v1089, %v1091
  %v1093 = vadd.f32 %v1089, %v1092
  %vm1094 = vweird.f32 %v1088
  %vm1095 = vweird.f32 %v1089
  %vm1096 = vmor %vm1094, %vm1095
  %v1097 = vsel %vm1096, %v1089, %v1093
  %v1098 = vand.u32 2147483647, %v1088
  %vm1099 = vcmp.eq.f32.partialorder %v1098, 8.507059e+37
  %v1100 = vand.u32 %v1088, 2147483648
  %v1101 = vor.u32 1.1754944e-38, %v1100
  %v1102 = vsel %vm1099, %v1101, %v1097
  %v1103 = vmul.f32 1.0, %v1102
  %v1104 = vtanh.pop %v1084
  %v1105 = vmul.f32 %v1103, %v969
  %1107 = vrot.lane.b32.xlu0 %v1104, 32
  %v1108 = vpop.permute.xlu0 %1107
  %v1110 = vmul.f32 %v1103, %v1108
  %1112 = vrot.lane.b32.xlu0 %v1110, 32
  %v1113 = vpop.permute.xlu0 %1112
  %v1115 = vadd.f32 %v1105, %v1113
  %v1116 = vtanh.pop %v1115
  %1118 = vrot.lane.b32.xlu0 %v1116, 32
  %v1119 = vpop.permute.xlu0 %1118
  %v1121 = vmul.f32 %v1103, %v1119
  %1122 = vmatpush.msra.mxu0 0.0
  %1123 = vmatpush.msra.mxu0 0.0
  %1124 = vmatpush.msra.mxu0 0.0
  %1125 = vmatpush.msra.mxu0 0.0
  %1126 = vmatpush.msra.mxu0 0.0
  %1127 = vmatpush.msra.mxu0 0.0
  %1128 = vmatpush.msra.mxu0 0.0
  %1129 = vmatpush.msra.mxu0 0.0
  %1130 = vmatpush.msra.mxu0 0.0
  %1131 = vmatpush.msra.mxu0 0.0
  %1132 = vmatpush.msra.mxu0 0.0
  %1133 = vmatpush.msra.mxu0 0.0
  %1134 = vmatpush.msra.mxu0 %v68
  %1135 = vmatpush.msra.mxu0 %v67
  %1136 = vmatpush.msra.mxu0 %v66
  %1137 = vmatpush.msra.mxu0 %v65
  %1138 = vmatmul.f32.gmra.mxu0 %v1037
  %v1139 = vpop.f32.mrf.mxu0
  %v1140 = vadd.f32 0.0, %v1139
  %1141 = vdwg.mxu0
  %v1142 = vadd.f32 %v175, %v1140
  %v1143 = vxor.u32 %v1142, 2147483648
  %v1144 = vmul.f32 %v1143, 1.442695
  %v1145 = vpow.pop %v1144
  %v1146 = vadd.f32 %v1145, 1.0
  %v1147 = vrcp.pop %v1146
  %v1148 = vmul.f32 %v1146, %v1147
  %v1149 = vsub.f32 1.0, %v1148
  %v1150 = vmul.f32 %v1147, %v1149
  %v1151 = vadd.f32 %v1147, %v1150
  %vm1152 = vweird.f32 %v1146
  %vm1153 = vweird.f32 %v1147
  %vm1154 = vmor %vm1152, %vm1153
  %v1155 = vsel %vm1154, %v1147, %v1151
  %v1156 = vand.u32 2147483647, %v1146
  %vm1157 = vcmp.eq.f32.partialorder %v1156, 8.507059e+37
  %v1158 = vand.u32 %v1146, 2147483648
  %v1159 = vor.u32 1.1754944e-38, %v1158
  %v1160 = vsel %vm1157, %v1159, %v1155
  %v1161 = vmul.f32 1.0, %v1160
  %v1162 = vtanh.pop %v1142
  %v1163 = vmul.f32 %v1161, %v1027
  %1165 = vrot.lane.b32.xlu0 %v1162, 32
  %v1166 = vpop.permute.xlu0 %1165
  %v1168 = vmul.f32 %v1161, %v1166
  %1170 = vrot.lane.b32.xlu0 %v1168, 32
  %v1171 = vpop.permute.xlu0 %1170
  %v1173 = vadd.f32 %v1163, %v1171
  %v1174 = vtanh.pop %v1173
  %1176 = vrot.lane.b32.xlu0 %v1174, 32
  %v1177 = vpop.permute.xlu0 %1176
  %v1179 = vmul.f32 %v1161, %v1177
  %1181 = vrot.lane.b32.xlu0 %v1179, 64
  %v1182 = vpop.permute.xlu0 %1181
  %v1183 = vsel %vm247, %v1182, 0
  %1185 = vmatpush.msra.mxu0 0.0
  %1186 = vmatpush.msra.mxu0 0.0
  %1187 = vmatpush.msra.mxu0 0.0
  %1188 = vmatpush.msra.mxu0 0.0
  %1189 = vmatpush.msra.mxu0 0.0
  %1190 = vmatpush.msra.mxu0 0.0
  %1191 = vmatpush.msra.mxu0 0.0
  %1192 = vmatpush.msra.mxu0 0.0
  %1193 = vmatpush.msra.mxu0 0.0
  %1194 = vmatpush.msra.mxu0 0.0
  %1195 = vmatpush.msra.mxu0 0.0
  %1196 = vmatpush.msra.mxu0 0.0
  %1197 = vmatpush.msra.mxu0 %v72
  %1198 = vmatpush.msra.mxu0 %v71
  %1199 = vmatpush.msra.mxu0 %v70
  %1200 = vmatpush.msra.mxu0 %v69
  %1201 = vmatmul.f32.gmra.mxu0 %v1183
  %v1202 = vpop.f32.mrf.mxu0
  %v1203 = vadd.f32 %v91, %v1202
  %1204 = vdwg.mxu0
  %1206 = vrot.lane.b32.xlu0 %v1121, 64
  %v1207 = vpop.permute.xlu0 %1206
  %v1208 = vsel %vm247, %v1207, 0
  %1210 = vmatpush.msra.mxu0 0.0
  %1211 = vmatpush.msra.mxu0 0.0
  %1212 = vmatpush.msra.mxu0 0.0
  %1213 = vmatpush.msra.mxu0 0.0
  %1214 = vmatpush.msra.mxu0 0.0
  %1215 = vmatpush.msra.mxu0 0.0
  %1216 = vmatpush.msra.mxu0 0.0
  %1217 = vmatpush.msra.mxu0 0.0
  %1218 = vmatpush.msra.mxu0 0.0
  %1219 = vmatpush.msra.mxu0 0.0
  %1220 = vmatpush.msra.mxu0 0.0
  %1221 = vmatpush.msra.mxu0 0.0
  %1222 = vmatpush.msra.mxu0 %v76
  %1223 = vmatpush.msra.mxu0 %v75
  %1224 = vmatpush.msra.mxu0 %v74
  %1225 = vmatpush.msra.mxu0 %v73
  %1226 = vmatmul.f32.gmra.mxu0 %v1208
  %v1227 = vpop.f32.mrf.mxu0
  %v1228 = vadd.f32 0.0, %v1227
  %1229 = vdwg.mxu0
  %v1230 = vadd.f32 %v1203, %v1228
  %v1231 = vxor.u32 %v1230, 2147483648
  %v1232 = vmul.f32 %v1231, 1.442695
  %v1233 = vpow.pop %v1232
  %v1234 = vadd.f32 %v1233, 1.0
  %v1235 = vrcp.pop %v1234
  %v1236 = vmul.f32 %v1234, %v1235
  %v1237 = vsub.f32 1.0, %v1236
  %v1238 = vmul.f32 %v1235, %v1237
  %v1239 = vadd.f32 %v1235, %v1238
  %vm1240 = vweird.f32 %v1234
  %vm1241 = vweird.f32 %v1235
  %vm1242 = vmor %vm1240, %vm1241
  %v1243 = vsel %vm1242, %v1235, %v1239
  %v1244 = vand.u32 2147483647, %v1234
  %vm1245 = vcmp.eq.f32.partialorder %v1244, 8.507059e+37
  %v1246 = vand.u32 %v1234, 2147483648
  %v1247 = vor.u32 1.1754944e-38, %v1246
  %v1248 = vsel %vm1245, %v1247, %v1243
  %v1249 = vmul.f32 1.0, %v1248
  %v1250 = vtanh.pop %v1230
  %v1251 = vmul.f32 %v1249, %v1115
  %1253 = vrot.lane.b32.xlu0 %v1250, 32
  %v1254 = vpop.permute.xlu0 %1253
  %v1256 = vmul.f32 %v1249, %v1254
  %1258 = vrot.lane.b32.xlu0 %v1256, 32
  %v1259 = vpop.permute.xlu0 %1258
  %v1261 = vadd.f32 %v1251, %v1259
  %v1262 = vtanh.pop %v1261
  %1264 = vrot.lane.b32.xlu0 %v1262, 32
  %v1265 = vpop.permute.xlu0 %1264
  %v1267 = vmul.f32 %v1249, %v1265
  %1268 = vmatpush.msra.mxu0 0.0
  %1269 = vmatpush.msra.mxu0 0.0
  %1270 = vmatpush.msra.mxu0 0.0
  %1271 = vmatpush.msra.mxu0 0.0
  %1272 = vmatpush.msra.mxu0 0.0
  %1273 = vmatpush.msra.mxu0 0.0
  %1274 = vmatpush.msra.mxu0 0.0
  %1275 = vmatpush.msra.mxu0 0.0
  %1276 = vmatpush.msra.mxu0 0.0
  %1277 = vmatpush.msra.mxu0 0.0
  %1278 = vmatpush.msra.mxu0 0.0
  %1279 = vmatpush.msra.mxu0 0.0
  %1280 = vmatpush.msra.mxu0 %v68
  %1281 = vmatpush.msra.mxu0 %v67
  %1282 = vmatpush.msra.mxu0 %v66
  %1283 = vmatpush.msra.mxu0 %v65
  %1284 = vmatmul.f32.gmra.mxu0 %v1183
  %v1285 = vpop.f32.mrf.mxu0
  %v1286 = vadd.f32 0.0, %v1285
  %1287 = vdwg.mxu0
  %v1288 = vadd.f32 %v178, %v1286
  %v1289 = vxor.u32 %v1288, 2147483648
  %v1290 = vmul.f32 %v1289, 1.442695
  %v1291 = vpow.pop %v1290
  %v1292 = vadd.f32 %v1291, 1.0
  %v1293 = vrcp.pop %v1292
  %v1294 = vmul.f32 %v1292, %v1293
  %v1295 = vsub.f32 1.0, %v1294
  %v1296 = vmul.f32 %v1293, %v1295
  %v1297 = vadd.f32 %v1293, %v1296
  %vm1298 = vweird.f32 %v1292
  %vm1299 = vweird.f32 %v1293
  %vm1300 = vmor %vm1298, %vm1299
  %v1301 = vsel %vm1300, %v1293, %v1297
  %v1302 = vand.u32 2147483647, %v1292
  %vm1303 = vcmp.eq.f32.partialorder %v1302, 8.507059e+37
  %v1304 = vand.u32 %v1292, 2147483648
  %v1305 = vor.u32 1.1754944e-38, %v1304
  %v1306 = vsel %vm1303, %v1305, %v1301
  %v1307 = vmul.f32 1.0, %v1306
  %v1308 = vtanh.pop %v1288
  %v1309 = vmul.f32 %v1307, %v1173
  %1311 = vrot.lane.b32.xlu0 %v1308, 32
  %v1312 = vpop.permute.xlu0 %1311
  %v1314 = vmul.f32 %v1307, %v1312
  %1316 = vrot.lane.b32.xlu0 %v1314, 32
  %v1317 = vpop.permute.xlu0 %1316
  %v1319 = vadd.f32 %v1309, %v1317
  %v1320 = vtanh.pop %v1319
  %1322 = vrot.lane.b32.xlu0 %v1320, 32
  %v1323 = vpop.permute.xlu0 %1322
  %v1325 = vmul.f32 %v1307, %v1323
  %1327 = vrot.lane.b32.xlu0 %v1325, 64
  %v1328 = vpop.permute.xlu0 %1327
  %v1329 = vsel %vm247, %v1328, 0
  %1331 = vmatpush.msra.mxu0 0.0
  %1332 = vmatpush.msra.mxu0 0.0
  %1333 = vmatpush.msra.mxu0 0.0
  %1334 = vmatpush.msra.mxu0 0.0
  %1335 = vmatpush.msra.mxu0 0.0
  %1336 = vmatpush.msra.mxu0 0.0
  %1337 = vmatpush.msra.mxu0 0.0
  %1338 = vmatpush.msra.mxu0 0.0
  %1339 = vmatpush.msra.mxu0 0.0
  %1340 = vmatpush.msra.mxu0 0.0
  %1341 = vmatpush.msra.mxu0 0.0
  %1342 = vmatpush.msra.mxu0 0.0
  %1343 = vmatpush.msra.mxu0 %v72
  %1344 = vmatpush.msra.mxu0 %v71
  %1345 = vmatpush.msra.mxu0 %v70
  %1346 = vmatpush.msra.mxu0 %v69
  %1347 = vmatmul.f32.gmra.mxu0 %v1329
  %v1348 = vpop.f32.mrf.mxu0
  %v1349 = vadd.f32 %v91, %v1348
  %1350 = vdwg.mxu0
  %1352 = vrot.lane.b32.xlu0 %v1267, 64
  %v1353 = vpop.permute.xlu0 %1352
  %v1354 = vsel %vm247, %v1353, 0
  %1356 = vmatpush.msra.mxu0 0.0
  %1357 = vmatpush.msra.mxu0 0.0
  %1358 = vmatpush.msra.mxu0 0.0
  %1359 = vmatpush.msra.mxu0 0.0
  %1360 = vmatpush.msra.mxu0 0.0
  %1361 = vmatpush.msra.mxu0 0.0
  %1362 = vmatpush.msra.mxu0 0.0
  %1363 = vmatpush.msra.mxu0 0.0
  %1364 = vmatpush.msra.mxu0 0.0
  %1365 = vmatpush.msra.mxu0 0.0
  %1366 = vmatpush.msra.mxu0 0.0
  %1367 = vmatpush.msra.mxu0 0.0
  %1368 = vmatpush.msra.mxu0 %v76
  %1369 = vmatpush.msra.mxu0 %v75
  %1370 = vmatpush.msra.mxu0 %v74
  %1371 = vmatpush.msra.mxu0 %v73
  %1372 = vmatmul.f32.gmra.mxu0 %v1354
  %v1373 = vpop.f32.mrf.mxu0
  %v1374 = vadd.f32 0.0, %v1373
  %1375 = vdwg.mxu0
  %v1376 = vadd.f32 %v1349, %v1374
  %v1377 = vxor.u32 %v1376, 2147483648
  %v1378 = vmul.f32 %v1377, 1.442695
  %v1379 = vpow.pop %v1378
  %v1380 = vadd.f32 %v1379, 1.0
  %v1381 = vrcp.pop %v1380
  %v1382 = vmul.f32 %v1380, %v1381
  %v1383 = vsub.f32 1.0, %v1382
  %v1384 = vmul.f32 %v1381, %v1383
  %v1385 = vadd.f32 %v1381, %v1384
  %vm1386 = vweird.f32 %v1380
  %vm1387 = vweird.f32 %v1381
  %vm1388 = vmor %vm1386, %vm1387
  %v1389 = vsel %vm1388, %v1381, %v1385
  %v1390 = vand.u32 2147483647, %v1380
  %vm1391 = vcmp.eq.f32.partialorder %v1390, 8.507059e+37
  %v1392 = vand.u32 %v1380, 2147483648
  %v1393 = vor.u32 1.1754944e-38, %v1392
  %v1394 = vsel %vm1391, %v1393, %v1389
  %v1395 = vmul.f32 1.0, %v1394
  %v1396 = vtanh.pop %v1376
  %v1397 = vmul.f32 %v1395, %v1261
  %1399 = vrot.lane.b32.xlu0 %v1396, 32
  %v1400 = vpop.permute.xlu0 %1399
  %v1402 = vmul.f32 %v1395, %v1400
  %1404 = vrot.lane.b32.xlu0 %v1402, 32
  %v1405 = vpop.permute.xlu0 %1404
  %v1407 = vadd.f32 %v1397, %v1405
  %v1408 = vtanh.pop %v1407
  %1410 = vrot.lane.b32.xlu0 %v1408, 32
  %v1411 = vpop.permute.xlu0 %1410
  %v1413 = vmul.f32 %v1395, %v1411
  %1414 = vmatpush.msra.mxu0 0.0
  %1415 = vmatpush.msra.mxu0 0.0
  %1416 = vmatpush.msra.mxu0 0.0
  %1417 = vmatpush.msra.mxu0 0.0
  %1418 = vmatpush.msra.mxu0 0.0
  %1419 = vmatpush.msra.mxu0 0.0
  %1420 = vmatpush.msra.mxu0 0.0
  %1421 = vmatpush.msra.mxu0 0.0
  %1422 = vmatpush.msra.mxu0 0.0
  %1423 = vmatpush.msra.mxu0 0.0
  %1424 = vmatpush.msra.mxu0 0.0
  %1425 = vmatpush.msra.mxu0 0.0
  %1426 = vmatpush.msra.mxu0 %v80
  %1427 = vmatpush.msra.mxu0 %v79
  %1428 = vmatpush.msra.mxu0 %v78
  %1429 = vmatpush.msra.mxu0 %v77
  %1430 = vmatmul.f32.gmra.mxu0 %v1329
  %v1431 = vpop.f32.mrf.mxu0
  %v1432 = vadd.f32 0.0, %v1431
  %1433 = vdwg.mxu0
  %v1434 = vadd.f32 %v230, %v1432
  %v1435 = vxor.u32 %v1434, 2147483648
  %v1436 = vmul.f32 %v1435, 1.442695
  %v1437 = vpow.pop %v1436
  %v1438 = vadd.f32 %v1437, 1.0
  %v1439 = vrcp.pop %v1438
  %v1440 = vmul.f32 %v1438, %v1439
  %v1441 = vsub.f32 1.0, %v1440
  %v1442 = vmul.f32 %v1439, %v1441
  %v1443 = vadd.f32 %v1439, %v1442
  %vm1444 = vweird.f32 %v1438
  %vm1445 = vweird.f32 %v1439
  %vm1446 = vmor %vm1444, %vm1445
  %v1447 = vsel %vm1446, %v1439, %v1443
  %v1448 = vand.u32 2147483647, %v1438
  %vm1449 = vcmp.eq.f32.partialorder %v1448, 8.507059e+37
  %v1450 = vand.u32 %v1438, 2147483648
  %v1451 = vor.u32 1.1754944e-38, %v1450
  %v1452 = vsel %vm1449, %v1451, %v1447
  %v1453 = vmul.f32 1.0, %v1452
  %v1454 = vtanh.pop %v1434
  %v1455 = vmul.f32 %v1453, %v1319
  %1457 = vrot.lane.b32.xlu0 %v1454, 32
  %v1458 = vpop.permute.xlu0 %1457
  %v1460 = vmul.f32 %v1453, %v1458
  %1462 = vrot.lane.b32.xlu0 %v1460, 32
  %v1463 = vpop.permute.xlu0 %1462
  %v1465 = vadd.f32 %v1455, %v1463
  %v1466 = vtanh.pop %v1465
  %1468 = vrot.lane.b32.xlu0 %v1466, 32
  %v1469 = vpop.permute.xlu0 %1468
  %v1471 = vmul.f32 %v1453, %v1469
  %1473 = vrot.lane.b32.xlu0 %v1471, 64
  %v1474 = vpop.permute.xlu0 %1473
  %v1475 = vsel %vm247, %v1474, 0
  %1477 = vmatpush.msra.mxu0 0.0
  %1478 = vmatpush.msra.mxu0 0.0
  %1479 = vmatpush.msra.mxu0 0.0
  %1480 = vmatpush.msra.mxu0 0.0
  %1481 = vmatpush.msra.mxu0 0.0
  %1482 = vmatpush.msra.mxu0 0.0
  %1483 = vmatpush.msra.mxu0 0.0
  %1484 = vmatpush.msra.mxu0 0.0
  %1485 = vmatpush.msra.mxu0 0.0
  %1486 = vmatpush.msra.mxu0 0.0
  %1487 = vmatpush.msra.mxu0 0.0
  %1488 = vmatpush.msra.mxu0 0.0
  %1489 = vmatpush.msra.mxu0 %v84
  %1490 = vmatpush.msra.mxu0 %v83
  %1491 = vmatpush.msra.mxu0 %v82
  %1492 = vmatpush.msra.mxu0 %v81
  %1493 = vmatmul.f32.gmra.mxu0 %v1475
  %v1494 = vpop.f32.mrf.mxu0
  %v1495 = vadd.f32 %v95, %v1494
  %1496 = vdwg.mxu0
  %1498 = vrot.lane.b32.xlu0 %v1413, 64
  %v1499 = vpop.permute.xlu0 %1498
  %v1500 = vsel %vm247, %v1499, 0
  %1502 = vmatpush.msra.mxu0 0.0
  %1503 = vmatpush.msra.mxu0 0.0
  %1504 = vmatpush.msra.mxu0 0.0
  %1505 = vmatpush.msra.mxu0 0.0
  %1506 = vmatpush.msra.mxu0 0.0
  %1507 = vmatpush.msra.mxu0 0.0
  %1508 = vmatpush.msra.mxu0 0.0
  %1509 = vmatpush.msra.mxu0 0.0
  %1510 = vmatpush.msra.mxu0 0.0
  %1511 = vmatpush.msra.mxu0 0.0
  %1512 = vmatpush.msra.mxu0 0.0
  %1513 = vmatpush.msra.mxu0 0.0
  %1514 = vmatpush.msra.mxu0 %v88
  %1515 = vmatpush.msra.mxu0 %v87
  %1516 = vmatpush.msra.mxu0 %v86
  %1517 = vmatpush.msra.mxu0 %v85
  %1518 = vmatmul.f32.gmra.mxu0 %v1500
  %v1519 = vpop.f32.mrf.mxu0
  %v1520 = vadd.f32 0.0, %v1519
  %1521 = vdwg.mxu0
  %v1522 = vadd.f32 %v1495, %v1520
  %v1523 = vxor.u32 %v1522, 2147483648
  %v1524 = vmul.f32 %v1523, 1.442695
  %v1525 = vpow.pop %v1524
  %v1526 = vadd.f32 %v1525, 1.0
  %v1527 = vrcp.pop %v1526
  %v1528 = vmul.f32 %v1526, %v1527
  %v1529 = vsub.f32 1.0, %v1528
  %v1530 = vmul.f32 %v1527, %v1529
  %v1531 = vadd.f32 %v1527, %v1530
  %vm1532 = vweird.f32 %v1526
  %vm1533 = vweird.f32 %v1527
  %vm1534 = vmor %vm1532, %vm1533
  %v1535 = vsel %vm1534, %v1527, %v1531
  %v1536 = vand.u32 2147483647, %v1526
  %vm1537 = vcmp.eq.f32.partialorder %v1536, 8.507059e+37
  %v1538 = vand.u32 %v1526, 2147483648
  %v1539 = vor.u32 1.1754944e-38, %v1538
  %v1540 = vsel %vm1537, %v1539, %v1535
  %v1541 = vmul.f32 1.0, %v1540
  %v1542 = vtanh.pop %v1522
  %v1543 = vmul.f32 %v1541, %v1407
  %1545 = vrot.lane.b32.xlu0 %v1542, 32
  %v1546 = vpop.permute.xlu0 %1545
  %v1548 = vmul.f32 %v1541, %v1546
  %1550 = vrot.lane.b32.xlu0 %v1548, 32
  %v1551 = vpop.permute.xlu0 %1550
  %v1553 = vadd.f32 %v1543, %v1551
  %v1554 = vtanh.pop %v1553
  %1556 = vrot.lane.b32.xlu0 %v1554, 32
  %v1557 = vpop.permute.xlu0 %1556
  %v1559 = vmul.f32 %v1541, %v1557
  %1560 = vmatpush.msra.mxu0 0.0
  %1561 = vmatpush.msra.mxu0 0.0
  %1562 = vmatpush.msra.mxu0 0.0
  %1563 = vmatpush.msra.mxu0 0.0
  %1564 = vmatpush.msra.mxu0 0.0
  %1565 = vmatpush.msra.mxu0 0.0
  %1566 = vmatpush.msra.mxu0 0.0
  %1567 = vmatpush.msra.mxu0 0.0
  %1568 = vmatpush.msra.mxu0 0.0
  %1569 = vmatpush.msra.mxu0 0.0
  %1570 = vmatpush.msra.mxu0 0.0
  %1571 = vmatpush.msra.mxu0 0.0
  %1572 = vmatpush.msra.mxu0 %v80
  %1573 = vmatpush.msra.mxu0 %v79
  %1574 = vmatpush.msra.mxu0 %v78
  %1575 = vmatpush.msra.mxu0 %v77
  %1576 = vmatmul.f32.gmra.mxu0 %v1475
  %v1577 = vpop.f32.mrf.mxu0
  %v1578 = vadd.f32 0.0, %v1577
  %1579 = vdwg.mxu0
  %v1580 = vadd.f32 %v233, %v1578
  %v1581 = vxor.u32 %v1580, 2147483648
  %v1582 = vmul.f32 %v1581, 1.442695
  %v1583 = vpow.pop %v1582
  %v1584 = vadd.f32 %v1583, 1.0
  %v1585 = vrcp.pop %v1584
  %v1586 = vmul.f32 %v1584, %v1585
  %v1587 = vsub.f32 1.0, %v1586
  %v1588 = vmul.f32 %v1585, %v1587
  %v1589 = vadd.f32 %v1585, %v1588
  %vm1590 = vweird.f32 %v1584
  %vm1591 = vweird.f32 %v1585
  %vm1592 = vmor %vm1590, %vm1591
  %v1593 = vsel %vm1592, %v1585, %v1589
  %v1594 = vand.u32 2147483647, %v1584
  %vm1595 = vcmp.eq.f32.partialorder %v1594, 8.507059e+37
  %v1596 = vand.u32 %v1584, 2147483648
  %v1597 = vor.u32 1.1754944e-38, %v1596
  %v1598 = vsel %vm1595, %v1597, %v1593
  %v1599 = vmul.f32 1.0, %v1598
  %v1600 = vtanh.pop %v1580
  %v1601 = vmul.f32 %v1599, %v1465
  %1603 = vrot.lane.b32.xlu0 %v1600, 32
  %v1604 = vpop.permute.xlu0 %1603
  %v1606 = vmul.f32 %v1599, %v1604
  %1608 = vrot.lane.b32.xlu0 %v1606, 32
  %v1609 = vpop.permute.xlu0 %1608
  %v1611 = vadd.f32 %v1601, %v1609
  %v1612 = vtanh.pop %v1611
  %1614 = vrot.lane.b32.xlu0 %v1612, 32
  %v1615 = vpop.permute.xlu0 %1614
  %v1617 = vmul.f32 %v1599, %v1615
  %1619 = vrot.lane.b32.xlu0 %v1617, 64
  %v1620 = vpop.permute.xlu0 %1619
  %v1621 = vsel %vm247, %v1620, 0
  %1623 = vmatpush.msra.mxu0 0.0
  %1624 = vmatpush.msra.mxu0 0.0
  %1625 = vmatpush.msra.mxu0 0.0
  %1626 = vmatpush.msra.mxu0 0.0
  %1627 = vmatpush.msra.mxu0 0.0
  %1628 = vmatpush.msra.mxu0 0.0
  %1629 = vmatpush.msra.mxu0 0.0
  %1630 = vmatpush.msra.mxu0 0.0
  %1631 = vmatpush.msra.mxu0 0.0
  %1632 = vmatpush.msra.mxu0 0.0
  %1633 = vmatpush.msra.mxu0 0.0
  %1634 = vmatpush.msra.mxu0 0.0
  %1635 = vmatpush.msra.mxu0 %v84
  %1636 = vmatpush.msra.mxu0 %v83
  %1637 = vmatpush.msra.mxu0 %v82
  %1638 = vmatpush.msra.mxu0 %v81
  %1639 = vmatmul.f32.gmra.mxu0 %v1621
  %v1640 = vpop.f32.mrf.mxu0
  %v1641 = vadd.f32 %v95, %v1640
  %1642 = vdwg.mxu0
  %1644 = vrot.lane.b32.xlu0 %v1559, 64
  %v1645 = vpop.permute.xlu0 %1644
  %v1646 = vsel %vm247, %v1645, 0
  %1648 = vmatpush.msra.mxu0 0.0
  %1649 = vmatpush.msra.mxu0 0.0
  %1650 = vmatpush.msra.mxu0 0.0
  %1651 = vmatpush.msra.mxu0 0.0
  %1652 = vmatpush.msra.mxu0 0.0
  %1653 = vmatpush.msra.mxu0 0.0
  %1654 = vmatpush.msra.mxu0 0.0
  %1655 = vmatpush.msra.mxu0 0.0
  %1656 = vmatpush.msra.mxu0 0.0
  %1657 = vmatpush.msra.mxu0 0.0
  %1658 = vmatpush.msra.mxu0 0.0
  %1659 = vmatpush.msra.mxu0 0.0
  %1660 = vmatpush.msra.mxu0 %v88
  %1661 = vmatpush.msra.mxu0 %v87
  %1662 = vmatpush.msra.mxu0 %v86
  %1663 = vmatpush.msra.mxu0 %v85
  %1664 = vmatmul.f32.gmra.mxu0 %v1646
  %v1665 = vpop.f32.mrf.mxu0
  %v1666 = vadd.f32 0.0, %v1665
  %1667 = vdwg.mxu0
  %v1668 = vadd.f32 %v1641, %v1666
  %v1669 = vxor.u32 %v1668, 2147483648
  %v1670 = vmul.f32 %v1669, 1.442695
  %v1671 = vpow.pop %v1670
  %v1672 = vadd.f32 %v1671, 1.0
  %v1673 = vrcp.pop %v1672
  %v1674 = vmul.f32 %v1672, %v1673
  %v1675 = vsub.f32 1.0, %v1674
  %v1676 = vmul.f32 %v1673, %v1675
  %v1677 = vadd.f32 %v1673, %v1676
  %vm1678 = vweird.f32 %v1672
  %vm1679 = vweird.f32 %v1673
  %vm1680 = vmor %vm1678, %vm1679
  %v1681 = vsel %vm1680, %v1673, %v1677
  %v1682 = vand.u32 2147483647, %v1672
  %vm1683 = vcmp.eq.f32.partialorder %v1682, 8.507059e+37
  %v1684 = vand.u32 %v1672, 2147483648
  %v1685 = vor.u32 1.1754944e-38, %v1684
  %v1686 = vsel %vm1683, %v1685, %v1681
  %v1687 = vmul.f32 1.0, %v1686
  %v1688 = vtanh.pop %v1668
  %v1689 = vmul.f32 %v1687, %v1553
  %1691 = vrot.lane.b32.xlu0 %v1688, 32
  %v1692 = vpop.permute.xlu0 %1691
  %v1694 = vmul.f32 %v1687, %v1692
  %1696 = vrot.lane.b32.xlu0 %v1694, 32
  %v1697 = vpop.permute.xlu0 %1696
  %v1699 = vadd.f32 %v1689, %v1697
  %v1700 = vtanh.pop %v1699
  %1702 = vrot.lane.b32.xlu0 %v1700, 32
  %v1703 = vpop.permute.xlu0 %1702
  %v1705 = vmul.f32 %v1687, %v1703
  %1706 = vmatpush.msra.mxu0 0.0
  %1707 = vmatpush.msra.mxu0 0.0
  %1708 = vmatpush.msra.mxu0 0.0
  %1709 = vmatpush.msra.mxu0 0.0
  %1710 = vmatpush.msra.mxu0 0.0
  %1711 = vmatpush.msra.mxu0 0.0
  %1712 = vmatpush.msra.mxu0 0.0
  %1713 = vmatpush.msra.mxu0 0.0
  %1714 = vmatpush.msra.mxu0 0.0
  %1715 = vmatpush.msra.mxu0 0.0
  %1716 = vmatpush.msra.mxu0 0.0
  %1717 = vmatpush.msra.mxu0 0.0
  %1718 = vmatpush.msra.mxu0 %v80
  %1719 = vmatpush.msra.mxu0 %v79
  %1720 = vmatpush.msra.mxu0 %v78
  %1721 = vmatpush.msra.mxu0 %v77
  %1722 = vmatmul.f32.gmra.mxu0 %v1621
  %v1723 = vpop.f32.mrf.mxu0
  %v1724 = vadd.f32 0.0, %v1723
  %1725 = vdwg.mxu0
  %v1726 = vadd.f32 %v236, %v1724
  %v1727 = vxor.u32 %v1726, 2147483648
  %v1728 = vmul.f32 %v1727, 1.442695
  %v1729 = vpow.pop %v1728
  %v1730 = vadd.f32 %v1729, 1.0
  %v1731 = vrcp.pop %v1730
  %v1732 = vmul.f32 %v1730, %v1731
  %v1733 = vsub.f32 1.0, %v1732
  %v1734 = vmul.f32 %v1731, %v1733
  %v1735 = vadd.f32 %v1731, %v1734
  %vm1736 = vweird.f32 %v1730
  %vm1737 = vweird.f32 %v1731
  %vm1738 = vmor %vm1736, %vm1737
  %v1739 = vsel %vm1738, %v1731, %v1735
  %v1740 = vand.u32 2147483647, %v1730
  %vm1741 = vcmp.eq.f32.partialorder %v1740, 8.507059e+37
  %v1742 = vand.u32 %v1730, 2147483648
  %v1743 = vor.u32 1.1754944e-38, %v1742
  %v1744 = vsel %vm1741, %v1743, %v1739
  %v1745 = vmul.f32 1.0, %v1744
  %v1746 = vtanh.pop %v1726
  %v1747 = vmul.f32 %v1745, %v1611
  %1749 = vrot.lane.b32.xlu0 %v1746, 32
  %v1750 = vpop.permute.xlu0 %1749
  %v1752 = vmul.f32 %v1745, %v1750
  %1754 = vrot.lane.b32.xlu0 %v1752, 32
  %v1755 = vpop.permute.xlu0 %1754
  %v1757 = vadd.f32 %v1747, %v1755
  %v1758 = vtanh.pop %v1757
  %1760 = vrot.lane.b32.xlu0 %v1758, 32
  %v1761 = vpop.permute.xlu0 %1760
  %v1763 = vmul.f32 %v1745, %v1761
  %1765 = vrot.lane.b32.xlu0 %v1763, 64
  %v1766 = vpop.permute.xlu0 %1765
  %v1767 = vsel %vm247, %v1766, 0
  %1769 = vmatpush.msra.mxu0 0.0
  %1770 = vmatpush.msra.mxu0 0.0
  %1771 = vmatpush.msra.mxu0 0.0
  %1772 = vmatpush.msra.mxu0 0.0
  %1773 = vmatpush.msra.mxu0 0.0
  %1774 = vmatpush.msra.mxu0 0.0
  %1775 = vmatpush.msra.mxu0 0.0
  %1776 = vmatpush.msra.mxu0 0.0
  %1777 = vmatpush.msra.mxu0 0.0
  %1778 = vmatpush.msra.mxu0 0.0
  %1779 = vmatpush.msra.mxu0 0.0
  %1780 = vmatpush.msra.mxu0 0.0
  %1781 = vmatpush.msra.mxu0 %v84
  %1782 = vmatpush.msra.mxu0 %v83
  %1783 = vmatpush.msra.mxu0 %v82
  %1784 = vmatpush.msra.mxu0 %v81
  %1785 = vmatmul.f32.gmra.mxu0 %v1767
  %v1786 = vpop.f32.mrf.mxu0
  %v1787 = vadd.f32 %v95, %v1786
  %1788 = vdwg.mxu0
  %1790 = vrot.lane.b32.xlu0 %v1705, 64
  %v1791 = vpop.permute.xlu0 %1790
  %v1792 = vsel %vm247, %v1791, 0
  %1794 = vmatpush.msra.mxu0 0.0
  %1795 = vmatpush.msra.mxu0 0.0
  %1796 = vmatpush.msra.mxu0 0.0
  %1797 = vmatpush.msra.mxu0 0.0
  %1798 = vmatpush.msra.mxu0 0.0
  %1799 = vmatpush.msra.mxu0 0.0
  %1800 = vmatpush.msra.mxu0 0.0
  %1801 = vmatpush.msra.mxu0 0.0
  %1802 = vmatpush.msra.mxu0 0.0
  %1803 = vmatpush.msra.mxu0 0.0
  %1804 = vmatpush.msra.mxu0 0.0
  %1805 = vmatpush.msra.mxu0 0.0
  %1806 = vmatpush.msra.mxu0 %v88
  %1807 = vmatpush.msra.mxu0 %v87
  %1808 = vmatpush.msra.mxu0 %v86
  %1809 = vmatpush.msra.mxu0 %v85
  %1810 = vmatmul.f32.gmra.mxu0 %v1792
  %v1811 = vpop.f32.mrf.mxu0
  %v1812 = vadd.f32 0.0, %v1811
  %1813 = vdwg.mxu0
  %v1814 = vadd.f32 %v1787, %v1812
  %v1815 = vxor.u32 %v1814, 2147483648
  %v1816 = vmul.f32 %v1815, 1.442695
  %v1817 = vpow.pop %v1816
  %v1818 = vadd.f32 %v1817, 1.0
  %v1819 = vrcp.pop %v1818
  %v1820 = vmul.f32 %v1818, %v1819
  %v1821 = vsub.f32 1.0, %v1820
  %v1822 = vmul.f32 %v1819, %v1821
  %v1823 = vadd.f32 %v1819, %v1822
  %vm1824 = vweird.f32 %v1818
  %vm1825 = vweird.f32 %v1819
  %vm1826 = vmor %vm1824, %vm1825
  %v1827 = vsel %vm1826, %v1819, %v1823
  %v1828 = vand.u32 2147483647, %v1818
  %vm1829 = vcmp.eq.f32.partialorder %v1828, 8.507059e+37
  %v1830 = vand.u32 %v1818, 2147483648
  %v1831 = vor.u32 1.1754944e-38, %v1830
  %v1832 = vsel %vm1829, %v1831, %v1827
  %v1833 = vmul.f32 1.0, %v1832
  %v1834 = vtanh.pop %v1814
  %v1835 = vmul.f32 %v1833, %v1699
  %1837 = vrot.lane.b32.xlu0 %v1834, 32
  %v1838 = vpop.permute.xlu0 %1837
  %v1840 = vmul.f32 %v1833, %v1838
  %1842 = vrot.lane.b32.xlu0 %v1840, 32
  %v1843 = vpop.permute.xlu0 %1842
  %v1845 = vadd.f32 %v1835, %v1843
  %v1846 = vtanh.pop %v1845
  %1848 = vrot.lane.b32.xlu0 %v1846, 32
  %v1849 = vpop.permute.xlu0 %1848
  %v1851 = vmul.f32 %v1833, %v1849
  %1852 = vmatpush.msra.mxu0 0.0
  %1853 = vmatpush.msra.mxu0 0.0
  %1854 = vmatpush.msra.mxu0 0.0
  %1855 = vmatpush.msra.mxu0 0.0
  %1856 = vmatpush.msra.mxu0 0.0
  %1857 = vmatpush.msra.mxu0 0.0
  %1858 = vmatpush.msra.mxu0 0.0
  %1859 = vmatpush.msra.mxu0 0.0
  %1860 = vmatpush.msra.mxu0 0.0
  %1861 = vmatpush.msra.mxu0 0.0
  %1862 = vmatpush.msra.mxu0 0.0
  %1863 = vmatpush.msra.mxu0 0.0
  %1864 = vmatpush.msra.mxu0 %v80
  %1865 = vmatpush.msra.mxu0 %v79
  %1866 = vmatpush.msra.mxu0 %v78
  %1867 = vmatpush.msra.mxu0 %v77
  %1868 = vmatmul.f32.gmra.mxu0 %v1767
  %v1869 = vpop.f32.mrf.mxu0
  %v1870 = vadd.f32 0.0, %v1869
  %1871 = vdwg.mxu0
  %v1872 = vadd.f32 %v239, %v1870
  %v1873 = vxor.u32 %v1872, 2147483648
  %v1874 = vmul.f32 %v1873, 1.442695
  %v1875 = vpow.pop %v1874
  %v1876 = vadd.f32 %v1875, 1.0
  %v1877 = vrcp.pop %v1876
  %v1878 = vmul.f32 %v1876, %v1877
  %v1879 = vsub.f32 1.0, %v1878
  %v1880 = vmul.f32 %v1877, %v1879
  %v1881 = vadd.f32 %v1877, %v1880
  %vm1882 = vweird.f32 %v1876
  %vm1883 = vweird.f32 %v1877
  %vm1884 = vmor %vm1882, %vm1883
  %v1885 = vsel %vm1884, %v1877, %v1881
  %v1886 = vand.u32 2147483647, %v1876
  %vm1887 = vcmp.eq.f32.partialorder %v1886, 8.507059e+37
  %v1888 = vand.u32 %v1876, 2147483648
  %v1889 = vor.u32 1.1754944e-38, %v1888
  %v1890 = vsel %vm1887, %v1889, %v1885
  %v1891 = vmul.f32 1.0, %v1890
  %v1892 = vtanh.pop %v1872
  %v1893 = vmul.f32 %v1891, %v1757
  %1895 = vrot.lane.b32.xlu0 %v1892, 32
  %v1896 = vpop.permute.xlu0 %1895
  %v1898 = vmul.f32 %v1891, %v1896
  %1900 = vrot.lane.b32.xlu0 %v1898, 32
  %v1901 = vpop.permute.xlu0 %1900
  %v1903 = vadd.f32 %v1893, %v1901
  %v1904 = vtanh.pop %v1903
  %1906 = vrot.lane.b32.xlu0 %v1904, 32
  %v1907 = vpop.permute.xlu0 %1906
  %v1909 = vmul.f32 %v1891, %v1907
  %1911 = vrot.lane.b32.xlu0 %v1909, 64
  %v1912 = vpop.permute.xlu0 %1911
  %v1913 = vsel %vm247, %v1912, 0
  %1915 = vmatpush.msra.mxu0 0.0
  %1916 = vmatpush.msra.mxu0 0.0
  %1917 = vmatpush.msra.mxu0 0.0
  %1918 = vmatpush.msra.mxu0 0.0
  %1919 = vmatpush.msra.mxu0 0.0
  %1920 = vmatpush.msra.mxu0 0.0
  %1921 = vmatpush.msra.mxu0 0.0
  %1922 = vmatpush.msra.mxu0 0.0
  %1923 = vmatpush.msra.mxu0 0.0
  %1924 = vmatpush.msra.mxu0 0.0
  %1925 = vmatpush.msra.mxu0 0.0
  %1926 = vmatpush.msra.mxu0 0.0
  %1927 = vmatpush.msra.mxu0 %v84
  %1928 = vmatpush.msra.mxu0 %v83
  %1929 = vmatpush.msra.mxu0 %v82
  %1930 = vmatpush.msra.mxu0 %v81
  %1931 = vmatmul.f32.gmra.mxu0 %v1913
  %v1932 = vpop.f32.mrf.mxu0
  %v1933 = vadd.f32 %v95, %v1932
  %1934 = vdwg.mxu0
  %1936 = vrot.lane.b32.xlu0 %v1851, 64
  %v1937 = vpop.permute.xlu0 %1936
  %v1938 = vsel %vm247, %v1937, 0
  %1940 = vmatpush.msra.mxu0 0.0
  %1941 = vmatpush.msra.mxu0 0.0
  %1942 = vmatpush.msra.mxu0 0.0
  %1943 = vmatpush.msra.mxu0 0.0
  %1944 = vmatpush.msra.mxu0 0.0
  %1945 = vmatpush.msra.mxu0 0.0
  %1946 = vmatpush.msra.mxu0 0.0
  %1947 = vmatpush.msra.mxu0 0.0
  %1948 = vmatpush.msra.mxu0 0.0
  %1949 = vmatpush.msra.mxu0 0.0
  %1950 = vmatpush.msra.mxu0 0.0
  %1951 = vmatpush.msra.mxu0 0.0
  %1952 = vmatpush.msra.mxu0 %v88
  %1953 = vmatpush.msra.mxu0 %v87
  %1954 = vmatpush.msra.mxu0 %v86
  %1955 = vmatpush.msra.mxu0 %v85
  %1956 = vmatmul.f32.gmra.mxu0 %v1938
  %v1957 = vpop.f32.mrf.mxu0
  %v1958 = vadd.f32 0.0, %v1957
  %1959 = vdwg.mxu0
  %v1960 = vadd.f32 %v1933, %v1958
  %v1961 = vxor.u32 %v1960, 2147483648
  %v1962 = vmul.f32 %v1961, 1.442695
  %v1963 = vpow.pop %v1962
  %v1964 = vadd.f32 %v1963, 1.0
  %v1965 = vrcp.pop %v1964
  %v1966 = vmul.f32 %v1964, %v1965
  %v1967 = vsub.f32 1.0, %v1966
  %v1968 = vmul.f32 %v1965, %v1967
  %v1969 = vadd.f32 %v1965, %v1968
  %vm1970 = vweird.f32 %v1964
  %vm1971 = vweird.f32 %v1965
  %vm1972 = vmor %vm1970, %vm1971
  %v1973 = vsel %vm1972, %v1965, %v1969
  %v1974 = vand.u32 2147483647, %v1964
  %vm1975 = vcmp.eq.f32.partialorder %v1974, 8.507059e+37
  %v1976 = vand.u32 %v1964, 2147483648
  %v1977 = vor.u32 1.1754944e-38, %v1976
  %v1978 = vsel %vm1975, %v1977, %v1973
  %v1979 = vmul.f32 1.0, %v1978
  %v1980 = vtanh.pop %v1960
  %v1981 = vmul.f32 %v1979, %v1845
  %1983 = vrot.lane.b32.xlu0 %v1980, 32
  %v1984 = vpop.permute.xlu0 %1983
  %v1986 = vmul.f32 %v1979, %v1984
  %1988 = vrot.lane.b32.xlu0 %v1986, 32
  %v1989 = vpop.permute.xlu0 %1988
  %v1991 = vadd.f32 %v1981, %v1989
  %v1992 = vtanh.pop %v1991
  %1994 = vrot.lane.b32.xlu0 %v1992, 32
  %v1995 = vpop.permute.xlu0 %1994
  %v1997 = vmul.f32 %v1979, %v1995
  %1998 = vmatpush.msra.mxu0 0.0
  %1999 = vmatpush.msra.mxu0 0.0
  %2000 = vmatpush.msra.mxu0 0.0
  %2001 = vmatpush.msra.mxu0 0.0
  %2002 = vmatpush.msra.mxu0 0.0
  %2003 = vmatpush.msra.mxu0 0.0
  %2004 = vmatpush.msra.mxu0 0.0
  %2005 = vmatpush.msra.mxu0 0.0
  %2006 = vmatpush.msra.mxu0 0.0
  %2007 = vmatpush.msra.mxu0 0.0
  %2008 = vmatpush.msra.mxu0 0.0
  %2009 = vmatpush.msra.mxu0 0.0
  %2010 = vmatpush.msra.mxu0 %v80
  %2011 = vmatpush.msra.mxu0 %v79
  %2012 = vmatpush.msra.mxu0 %v78
  %2013 = vmatpush.msra.mxu0 %v77
  %2014 = vmatmul.f32.gmra.mxu0 %v1913
  %v2015 = vpop.f32.mrf.mxu0
  %v2016 = vadd.f32 0.0, %v2015
  %2017 = vdwg.mxu0
  %v2018 = vadd.f32 %v242, %v2016
  %v2019 = vxor.u32 %v2018, 2147483648
  %v2020 = vmul.f32 %v2019, 1.442695
  %v2021 = vpow.pop %v2020
  %v2022 = vadd.f32 %v2021, 1.0
  %v2023 = vrcp.pop %v2022
  %v2024 = vmul.f32 %v2022, %v2023
  %v2025 = vsub.f32 1.0, %v2024
  %v2026 = vmul.f32 %v2023, %v2025
  %v2027 = vadd.f32 %v2023, %v2026
  %vm2028 = vweird.f32 %v2022
  %vm2029 = vweird.f32 %v2023
  %vm2030 = vmor %vm2028, %vm2029
  %v2031 = vsel %vm2030, %v2023, %v2027
  %v2032 = vand.u32 2147483647, %v2022
  %vm2033 = vcmp.eq.f32.partialorder %v2032, 8.507059e+37
  %v2034 = vand.u32 %v2022, 2147483648
  %v2035 = vor.u32 1.1754944e-38, %v2034
  %v2036 = vsel %vm2033, %v2035, %v2031
  %v2037 = vmul.f32 1.0, %v2036
  %v2038 = vtanh.pop %v2018
  %v2039 = vmul.f32 %v2037, %v1903
  %2041 = vrot.lane.b32.xlu0 %v2038, 32
  %v2042 = vpop.permute.xlu0 %2041
  %v2044 = vmul.f32 %v2037, %v2042
  %2046 = vrot.lane.b32.xlu0 %v2044, 32
  %v2047 = vpop.permute.xlu0 %2046
  %v2049 = vadd.f32 %v2039, %v2047
  %v2050 = vtanh.pop %v2049
  %2052 = vrot.lane.b32.xlu0 %v2050, 32
  %v2053 = vpop.permute.xlu0 %2052
  %v2055 = vmul.f32 %v2037, %v2053
  %2057 = vrot.lane.b32.xlu0 %v2055, 64
  %v2058 = vpop.permute.xlu0 %2057
  %v2059 = vsel %vm247, %v2058, 0
  %2061 = vmatpush.msra.mxu0 0.0
  %2062 = vmatpush.msra.mxu0 0.0
  %2063 = vmatpush.msra.mxu0 0.0
  %2064 = vmatpush.msra.mxu0 0.0
  %2065 = vmatpush.msra.mxu0 0.0
  %2066 = vmatpush.msra.mxu0 0.0
  %2067 = vmatpush.msra.mxu0 0.0
  %2068 = vmatpush.msra.mxu0 0.0
  %2069 = vmatpush.msra.mxu0 0.0
  %2070 = vmatpush.msra.mxu0 0.0
  %2071 = vmatpush.msra.mxu0 0.0
  %2072 = vmatpush.msra.mxu0 0.0
  %2073 = vmatpush.msra.mxu0 %v84
  %2074 = vmatpush.msra.mxu0 %v83
  %2075 = vmatpush.msra.mxu0 %v82
  %2076 = vmatpush.msra.mxu0 %v81
  %2077 = vmatmul.f32.gmra.mxu0 %v2059
  %v2078 = vpop.f32.mrf.mxu0
  %v2079 = vadd.f32 %v95, %v2078
  %2080 = vdwg.mxu0
  %2082 = vrot.lane.b32.xlu0 %v1997, 64
  %v2083 = vpop.permute.xlu0 %2082
  %v2084 = vsel %vm247, %v2083, 0
  %2086 = vmatpush.msra.mxu0 0.0
  %2087 = vmatpush.msra.mxu0 0.0
  %2088 = vmatpush.msra.mxu0 0.0
  %2089 = vmatpush.msra.mxu0 0.0
  %2090 = vmatpush.msra.mxu0 0.0
  %2091 = vmatpush.msra.mxu0 0.0
  %2092 = vmatpush.msra.mxu0 0.0
  %2093 = vmatpush.msra.mxu0 0.0
  %2094 = vmatpush.msra.mxu0 0.0
  %2095 = vmatpush.msra.mxu0 0.0
  %2096 = vmatpush.msra.mxu0 0.0
  %2097 = vmatpush.msra.mxu0 0.0
  %2098 = vmatpush.msra.mxu0 %v88
  %2099 = vmatpush.msra.mxu0 %v87
  %2100 = vmatpush.msra.mxu0 %v86
  %2101 = vmatpush.msra.mxu0 %v85
  %2102 = vmatmul.f32.gmra.mxu0 %v2084
  %v2103 = vpop.f32.mrf.mxu0
  %v2104 = vadd.f32 0.0, %v2103
  %2105 = vdwg.mxu0
  %v2106 = vadd.f32 %v2079, %v2104
  %v2107 = vxor.u32 %v2106, 2147483648
  %v2108 = vmul.f32 %v2107, 1.442695
  %v2109 = vpow.pop %v2108
  %v2110 = vadd.f32 %v2109, 1.0
  %v2111 = vrcp.pop %v2110
  %v2112 = vmul.f32 %v2110, %v2111
  %v2113 = vsub.f32 1.0, %v2112
  %v2114 = vmul.f32 %v2111, %v2113
  %v2115 = vadd.f32 %v2111, %v2114
  %vm2116 = vweird.f32 %v2110
  %vm2117 = vweird.f32 %v2111
  %vm2118 = vmor %vm2116, %vm2117
  %v2119 = vsel %vm2118, %v2111, %v2115
  %v2120 = vand.u32 2147483647, %v2110
  %vm2121 = vcmp.eq.f32.partialorder %v2120, 8.507059e+37
  %v2122 = vand.u32 %v2110, 2147483648
  %v2123 = vor.u32 1.1754944e-38, %v2122
  %v2124 = vsel %vm2121, %v2123, %v2119
  %v2125 = vmul.f32 1.0, %v2124
  %v2126 = vtanh.pop %v2106
  %v2127 = vmul.f32 %v2125, %v1991
  %2129 = vrot.lane.b32.xlu0 %v2126, 32
  %v2130 = vpop.permute.xlu0 %2129
  %v2132 = vmul.f32 %v2125, %v2130
  %2134 = vrot.lane.b32.xlu0 %v2132, 32
  %v2135 = vpop.permute.xlu0 %2134
  %v2137 = vadd.f32 %v2127, %v2135
  %v2138 = vtanh.pop %v2137
  %2140 = vrot.lane.b32.xlu0 %v2138, 32
  %v2141 = vpop.permute.xlu0 %2140
  %v2143 = vmul.f32 %v2125, %v2141
  %2144 = vmatpush.msra.mxu0 0.0
  %2145 = vmatpush.msra.mxu0 0.0
  %2146 = vmatpush.msra.mxu0 0.0
  %2147 = vmatpush.msra.mxu0 0.0
  %2148 = vmatpush.msra.mxu0 0.0
  %2149 = vmatpush.msra.mxu0 0.0
  %2150 = vmatpush.msra.mxu0 0.0
  %2151 = vmatpush.msra.mxu0 0.0
  %2152 = vmatpush.msra.mxu0 0.0
  %2153 = vmatpush.msra.mxu0 0.0
  %2154 = vmatpush.msra.mxu0 0.0
  %2155 = vmatpush.msra.mxu0 0.0
  %2156 = vmatpush.msra.mxu0 %v80
  %2157 = vmatpush.msra.mxu0 %v79
  %2158 = vmatpush.msra.mxu0 %v78
  %2159 = vmatpush.msra.mxu0 %v77
  %2160 = vmatmul.f32.gmra.mxu0 %v2059
  %v2161 = vpop.f32.mrf.mxu0
  %v2162 = vadd.f32 0.0, %v2161
  %2163 = vdwg.mxu0
  %v2164 = vadd.f32 %v245, %v2162
  %v2165 = vxor.u32 %v2164, 2147483648
  %v2166 = vmul.f32 %v2165, 1.442695
  %v2167 = vpow.pop %v2166
  %v2168 = vadd.f32 %v2167, 1.0
  %v2169 = vrcp.pop %v2168
  %v2170 = vmul.f32 %v2168, %v2169
  %v2171 = vsub.f32 1.0, %v2170
  %v2172 = vmul.f32 %v2169, %v2171
  %v2173 = vadd.f32 %v2169, %v2172
  %vm2174 = vweird.f32 %v2168
  %vm2175 = vweird.f32 %v2169
  %vm2176 = vmor %vm2174, %vm2175
  %v2177 = vsel %vm2176, %v2169, %v2173
  %v2178 = vand.u32 2147483647, %v2168
  %vm2179 = vcmp.eq.f32.partialorder %v2178, 8.507059e+37
  %v2180 = vand.u32 %v2168, 2147483648
  %v2181 = vor.u32 1.1754944e-38, %v2180
  %v2182 = vsel %vm2179, %v2181, %v2177
  %v2183 = vmul.f32 1.0, %v2182
  %v2184 = vtanh.pop %v2164
  %v2185 = vmul.f32 %v2183, %v2049
  %2187 = vrot.lane.b32.xlu0 %v2184, 32
  %v2188 = vpop.permute.xlu0 %2187
  %v2190 = vmul.f32 %v2183, %v2188
  %2192 = vrot.lane.b32.xlu0 %v2190, 32
  %v2193 = vpop.permute.xlu0 %2192
  %v2195 = vadd.f32 %v2185, %v2193
  %v2196 = vtanh.pop %v2195
  %2198 = vrot.lane.b32.xlu0 %v2196, 32
  %v2199 = vpop.permute.xlu0 %2198
  %v2201 = vmul.f32 %v2183, %v2199
  %2203 = vrot.lane.b32.xlu0 %v2201, 64
  %v2204 = vpop.permute.xlu0 %2203
  %v2205 = vsel %vm247, %v2204, 0
  %2207 = vmatpush.msra.mxu0 0.0
  %2208 = vmatpush.msra.mxu0 0.0
  %2209 = vmatpush.msra.mxu0 0.0
  %2210 = vmatpush.msra.mxu0 0.0
  %2211 = vmatpush.msra.mxu0 0.0
  %2212 = vmatpush.msra.mxu0 0.0
  %2213 = vmatpush.msra.mxu0 0.0
  %2214 = vmatpush.msra.mxu0 0.0
  %2215 = vmatpush.msra.mxu0 0.0
  %2216 = vmatpush.msra.mxu0 0.0
  %2217 = vmatpush.msra.mxu0 0.0
  %2218 = vmatpush.msra.mxu0 0.0
  %2219 = vmatpush.msra.mxu0 %v84
  %2220 = vmatpush.msra.mxu0 %v83
  %2221 = vmatpush.msra.mxu0 %v82
  %2222 = vmatpush.msra.mxu0 %v81
  %2223 = vmatmul.f32.gmra.mxu0 %v2205
  %v2224 = vpop.f32.mrf.mxu0
  %v2225 = vadd.f32 %v95, %v2224
  %2226 = vdwg.mxu0
  %2228 = vrot.lane.b32.xlu0 %v2143, 64
  %v2229 = vpop.permute.xlu0 %2228
  %v2230 = vsel %vm247, %v2229, 0
  %2232 = vmatpush.msra.mxu0 0.0
  %2233 = vmatpush.msra.mxu0 0.0
  %2234 = vmatpush.msra.mxu0 0.0
  %2235 = vmatpush.msra.mxu0 0.0
  %2236 = vmatpush.msra.mxu0 0.0
  %2237 = vmatpush.msra.mxu0 0.0
  %2238 = vmatpush.msra.mxu0 0.0
  %2239 = vmatpush.msra.mxu0 0.0
  %2240 = vmatpush.msra.mxu0 0.0
  %2241 = vmatpush.msra.mxu0 0.0
  %2242 = vmatpush.msra.mxu0 0.0
  %2243 = vmatpush.msra.mxu0 0.0
  %2244 = vmatpush.msra.mxu0 %v88
  %2245 = vmatpush.msra.mxu0 %v87
  %2246 = vmatpush.msra.mxu0 %v86
  %2247 = vmatpush.msra.mxu0 %v85
  %2248 = vmatmul.f32.gmra.mxu0 %v2230
  %v2249 = vpop.f32.mrf.mxu0
  %v2250 = vadd.f32 0.0, %v2249
  %2251 = vdwg.mxu0
  %v2252 = vadd.f32 %v2225, %v2250
  %v2253 = vxor.u32 %v2252, 2147483648
  %v2254 = vmul.f32 %v2253, 1.442695
  %v2255 = vpow.pop %v2254
  %v2256 = vadd.f32 %v2255, 1.0
  %v2257 = vrcp.pop %v2256
  %v2258 = vmul.f32 %v2256, %v2257
  %v2259 = vsub.f32 1.0, %v2258
  %v2260 = vmul.f32 %v2257, %v2259
  %v2261 = vadd.f32 %v2257, %v2260
  %vm2262 = vweird.f32 %v2256
  %vm2263 = vweird.f32 %v2257
  %vm2264 = vmor %vm2262, %vm2263
  %v2265 = vsel %vm2264, %v2257, %v2261
  %v2266 = vand.u32 2147483647, %v2256
  %vm2267 = vcmp.eq.f32.partialorder %v2266, 8.507059e+37
  %v2268 = vand.u32 %v2256, 2147483648
  %v2269 = vor.u32 1.1754944e-38, %v2268
  %v2270 = vsel %vm2267, %v2269, %v2265
  %v2271 = vmul.f32 1.0, %v2270
  %v2272 = vtanh.pop %v2252
  %v2273 = vmul.f32 %v2271, %v2137
  %2275 = vrot.lane.b32.xlu0 %v2272, 32
  %v2276 = vpop.permute.xlu0 %2275
  %v2278 = vmul.f32 %v2271, %v2276
  %2280 = vrot.lane.b32.xlu0 %v2278, 32
  %v2281 = vpop.permute.xlu0 %2280
  %v2283 = vadd.f32 %v2273, %v2281
  %v2284 = vtanh.pop %v2283
  %2286 = vrot.lane.b32.xlu0 %v2284, 32
  %v2287 = vpop.permute.xlu0 %2286
  %v2289 = vmul.f32 %v2271, %v2287
  %v2290 = vld [vmem:[%s14] sm:$0xff]
  %v2291 = vld [vmem:[%s14 + $0x8] sm:$0xff]
  %v2292 = vld [vmem:[%s14 + $0x10] sm:$0xff]
  %v2293 = vld [vmem:[%s14 + $0x18] sm:$0xff]
  %v2294 = vld [vmem:[%s15] sm:$0x1]
  %v2296 = vperm.slane %v2294, 0
  %2299 = vrot.lane.b32.xlu0 %v2289, 64
  %v2300 = vpop.permute.xlu0 %2299
  %v2301 = vsel %vm247, %v2300, 0
  %2303 = vmatpush.msra.mxu0 0.0
  %2304 = vmatpush.msra.mxu0 0.0
  %2305 = vmatpush.msra.mxu0 0.0
  %2306 = vmatpush.msra.mxu0 0.0
  %2307 = vmatpush.msra.mxu0 0.0
  %2308 = vmatpush.msra.mxu0 0.0
  %2309 = vmatpush.msra.mxu0 0.0
  %2310 = vmatpush.msra.mxu0 0.0
  %2311 = vmatpush.msra.mxu0 0.0
  %2312 = vmatpush.msra.mxu0 0.0
  %2313 = vmatpush.msra.mxu0 0.0
  %2314 = vmatpush.msra.mxu0 0.0
  %2315 = vmatpush.msra.mxu0 %v2293
  %2316 = vmatpush.msra.mxu0 %v2292
  %2317 = vmatpush.msra.mxu0 %v2291
  %2318 = vmatpush.msra.mxu0 %v2290
  %2319 = vmatmul.f32.gmra.mxu0 %v1646
  %v2320 = vpop.f32.mrf.mxu0
  %v2321 = vadd.f32 %v2296, %v2320
  %2322 = vmatmul.f32.gmra.mxu0 %v1792
  %v2323 = vpop.f32.mrf.mxu0
  %v2324 = vadd.f32 %v2296, %v2323
  %2325 = vmatmul.f32.gmra.mxu0 %v1938
  %v2326 = vpop.f32.mrf.mxu0
  %v2327 = vadd.f32 %v2296, %v2326
  %2328 = vmatmul.f32.gmra.mxu0 %v2084
  %v2329 = vpop.f32.mrf.mxu0
  %v2330 = vadd.f32 %v2296, %v2329
  %2331 = vmatmul.f32.gmra.mxu0 %v2230
  %v2332 = vpop.f32.mrf.mxu0
  %v2333 = vadd.f32 %v2296, %v2332
  %2334 = vmatmul.f32.gmra.mxu0 %v2301
  %v2335 = vpop.f32.mrf.mxu0
  %v2336 = vadd.f32 %v2296, %v2335
  %2337 = vdwg.mxu0
  %v2338 = vmax.f32 %v2321, 0.0
  %v2339 = vmax.f32 %v2324, 0.0
  %v2340 = vmax.f32 %v2327, 0.0
  %v2341 = vmax.f32 %v2330, 0.0
  %v2342 = vmax.f32 %v2333, 0.0
  %v2343 = vmax.f32 %v2336, 0.0
  %v2344 = vld [vmem:[%s16] sm:$0xff]
  %v2345 = vld [vmem:[%s16 + $0x8] sm:$0xff]
  %v2346 = vld [vmem:[%s17] sm:$0x1]
  %v2348 = vperm.slane %v2346, 0
  %vm2350 = vcmask 130048
  %v2352 = vsel %vm2350, %v2338, 0
  %v2355 = vsel %vm2350, %v2339, 0
  %v2358 = vsel %vm2350, %v2340, 0
  %v2361 = vsel %vm2350, %v2341, 0
  %v2364 = vsel %vm2350, %v2342, 0
  %v2367 = vsel %vm2350, %v2343, 0
  %2369 = vmatpush.msra.mxu0 0.0
  %2370 = vmatpush.msra.mxu0 0.0
  %2371 = vmatpush.msra.mxu0 0.0
  %2372 = vmatpush.msra.mxu0 0.0
  %2373 = vmatpush.msra.mxu0 0.0
  %2374 = vmatpush.msra.mxu0 0.0
  %2375 = vmatpush.msra.mxu0 0.0
  %2376 = vmatpush.msra.mxu0 0.0
  %2377 = vmatpush.msra.mxu0 0.0
  %2378 = vmatpush.msra.mxu0 0.0
  %2379 = vmatpush.msra.mxu0 0.0
  %2380 = vmatpush.msra.mxu0 0.0
  %2381 = vmatpush.msra.mxu0 0.0
  %2382 = vmatpush.msra.mxu0 0.0
  %2383 = vmatpush.msra.mxu0 %v2345
  %2384 = vmatpush.msra.mxu0 %v2344
  %2385 = vmatmul.f32.gmra.mxu0 %v2352
  %v2386 = vpop.f32.mrf.mxu0
  %v2387 = vadd.f32 %v2348, %v2386
  %2388 = vmatmul.f32.gmra.mxu0 %v2355
  %v2389 = vpop.f32.mrf.mxu0
  %v2390 = vadd.f32 %v2348, %v2389
  %2391 = vmatmul.f32.gmra.mxu0 %v2358
  %v2392 = vpop.f32.mrf.mxu0
  %v2393 = vadd.f32 %v2348, %v2392
  %2394 = vmatmul.f32.gmra.mxu0 %v2361
  %v2395 = vpop.f32.mrf.mxu0
  %v2396 = vadd.f32 %v2348, %v2395
  %2397 = vmatmul.f32.gmra.mxu0 %v2364
  %v2398 = vpop.f32.mrf.mxu0
  %v2399 = vadd.f32 %v2348, %v2398
  %2400 = vmatmul.f32.gmra.mxu0 %v2367
  %v2401 = vpop.f32.mrf.mxu0
  %v2402 = vadd.f32 %v2348, %v2401
  %2403 = vdwg.mxu0
  %v2404 = vmax.f32 %v2387, 0.0
  %v2405 = vmax.f32 %v2390, 0.0
  %v2406 = vmax.f32 %v2393, 0.0
  %v2407 = vmax.f32 %v2396, 0.0
  %v2408 = vmax.f32 %v2399, 0.0
  %v2409 = vmax.f32 %v2402, 0.0
  %v2410 = vld [vmem:[%s18] sm:$0xff]
  %v2411 = vld [vmem:[%s19] sm:$0x1]
  %v2413 = vperm.slane %v2411, 0
  %vm2415 = vcmask 64512
  %v2417 = vsel %vm2415, %v2404, 0
  %v2420 = vsel %vm2415, %v2405, 0
  %v2423 = vsel %vm2415, %v2406, 0
  %v2426 = vsel %vm2415, %v2407, 0
  %v2429 = vsel %vm2415, %v2408, 0
  %v2432 = vsel %vm2415, %v2409, 0
  %2434 = vmatpush.msra.mxu0 0.0
  %2435 = vmatpush.msra.mxu0 0.0
  %2436 = vmatpush.msra.mxu0 0.0
  %2437 = vmatpush.msra.mxu0 0.0
  %2438 = vmatpush.msra.mxu0 0.0
  %2439 = vmatpush.msra.mxu0 0.0
  %2440 = vmatpush.msra.mxu0 0.0
  %2441 = vmatpush.msra.mxu0 0.0
  %2442 = vmatpush.msra.mxu0 0.0
  %2443 = vmatpush.msra.mxu0 0.0
  %2444 = vmatpush.msra.mxu0 0.0
  %2445 = vmatpush.msra.mxu0 0.0
  %2446 = vmatpush.msra.mxu0 0.0
  %2447 = vmatpush.msra.mxu0 0.0
  %2448 = vmatpush.msra.mxu0 0.0
  %2449 = vmatpush.msra.mxu0 %v2410
  %2450 = vmatmul.f32.gmra.mxu0 %v2417
  %v2451 = vpop.f32.mrf.mxu0
  %v2452 = vadd.f32 %v2413, %v2451
  %2453 = vmatmul.f32.gmra.mxu0 %v2420
  %v2454 = vpop.f32.mrf.mxu0
  %v2455 = vadd.f32 %v2413, %v2454
  %2456 = vmatmul.f32.gmra.mxu0 %v2423
  %v2457 = vpop.f32.mrf.mxu0
  %v2458 = vadd.f32 %v2413, %v2457
  %2459 = vmatmul.f32.gmra.mxu0 %v2426
  %v2460 = vpop.f32.mrf.mxu0
  %v2461 = vadd.f32 %v2413, %v2460
  %2462 = vmatmul.f32.gmra.mxu0 %v2429
  %v2463 = vpop.f32.mrf.mxu0
  %v2464 = vadd.f32 %v2413, %v2463
  %2465 = vmatmul.f32.gmra.mxu0 %v2432
  %v2466 = vpop.f32.mrf.mxu0
  %v2467 = vadd.f32 %v2413, %v2466
  %2468 = vdwg.mxu0
  %vm2469 = vcmask 15360
  %2470 = vst.msk [vmem:[%s20] sm:$0xff] %vm2469, %v2452
  %2471 = vst.msk [vmem:[%s20 + $0x8] sm:$0xff] %vm2469, %v2455
  %2472 = vst.msk [vmem:[%s20 + $0x10] sm:$0xff] %vm2469, %v2458
  %2473 = vst.msk [vmem:[%s20 + $0x18] sm:$0xff] %vm2469, %v2461
  %2474 = vst.msk [vmem:[%s20 + $0x20] sm:$0xff] %vm2469, %v2464
  %2475 = vst.msk [vmem:[%s20 + $0x28] sm:$0xff] %vm2469, %v2467
  // Predicated region
  $region82: #{encdec_power_forward.1} parent=0 // pred_check
    _
  $region83: #{encdec_power_forward.1} parent=0 // pred_check_branch
    %2477 = sbr.rel (0) target = $region85
  $region84: #{encdec_power_forward.1} parent=0 // pred_region
    _
  $region85: #{encdec_power_forward.1} parent=0 // pred_fallthru
    _
  // Predicated region
  $region86: #{encdec_power_forward.1} parent=0 // pred_check
    _
  $region87: #{encdec_power_forward.1} parent=0 // pred_check_branch
    %2479 = sbr.rel (0) target = $region89
  $region88: #{encdec_power_forward.1} parent=0 // pred_region
    _
  $region89: #{encdec_power_forward.1} parent=0 // pred_fallthru
    _

</llo_original>
